<compile_context>
chip_gen: v7x
topology: tpu7x:2x2x1
jax: 0.10.0
libtpu: 0.0.40
codegen_flags: <defaults>
</compile_context>

<pallas_src>
import jax
import jax.numpy as jnp
from jax.experimental import pallas as pl
from jax.experimental.pallas import tpu as pltpu


def _pad_hw(x, d):
    """Zero-pad the two leading (spatial) dims of (H, W, tn, C) by d on each side."""
    h, w, tn, c = x.shape
    zh = jnp.zeros((d, w, tn, c), x.dtype)
    x = jnp.concatenate([zh, x, zh], axis=0)
    zw = jnp.zeros((h + 2 * d, d, tn, c), x.dtype)
    x = jnp.concatenate([zw, x, zw], axis=1)
    return x


def _make_kernel(num_convs, R, dilation):
    d = dilation

    def kernel(x_ref, *refs):
        # refs layout: [w_conv0, b_conv0, ..., w_conv{K-1}, b_conv{K-1}, w_fc, b_fc, out]
        o_ref = refs[-1]
        act = x_ref[...]                      # (R, R, tn, Cin), bf16
        cdtype = x_ref.dtype
        tn = act.shape[2]

        # --- stacked 3x3 convs + ReLU (conv as 9 shifted matmuls on the MXU) ---
        for k in range(num_convs):
            w_ref = refs[2 * k]               # (3, 3, Cin_k, Cout_k)
            b_ref = refs[2 * k + 1]           # (1, Cout_k) f32
            cin = w_ref.shape[2]
            cout = w_ref.shape[3]

            xp = _pad_hw(act, d)              # (R+2d, R+2d, tn, cin)
            acc = jnp.zeros((R * R * tn, cout), jnp.float32)
            for ky in range(3):
                for kx in range(3):
                    xs = xp[ky * d:ky * d + R, kx * d:kx * d + R]   # (R, R, tn, cin)
                    xs2 = xs.reshape(R * R * tn, cin)
                    acc = acc + jnp.dot(xs2, w_ref[ky, kx],
                                        preferred_element_type=jnp.float32)
            act = jnp.maximum(acc + b_ref[...], 0.0)                # f32 bias+ReLU
            act = act.astype(cdtype).reshape(R, R, tn, cout)        # bf16 for next MXU

        # --- fc6 + ReLU : sum over (h, w) of (tn, Ch) @ (Ch, Hrep) ---
        wfc_ref = refs[2 * num_convs]         # (R, R, Ch, Hrep) bf16
        bfc_ref = refs[2 * num_convs + 1]     # (1, Hrep) f32
        hrep = wfc_ref.shape[3]
        y = jnp.zeros((tn, hrep), jnp.float32)
        for hh in range(R):
            for ww in range(R):
                y = y + jnp.dot(act[hh, ww], wfc_ref[hh, ww],
                                preferred_element_type=jnp.float32)
        o_ref[...] = jnp.maximum(y + bfc_ref[...], 0.0).astype(o_ref.dtype)

    return kernel


def fpn_xconv1fc_forward(x_pooled, conv_weights, conv_biases, fc_w, fc_b,
                         *, dilation=1, roi_tile=16):
    """
    x_pooled:     (N, Cin, R, R) f32   pooled ROI features (NCHW, post-pooler)
    conv_weights: list of (Cout_k, Cin_k, 3, 3) f32  (PyTorch Conv2d layout)
    conv_biases:  list of (Cout_k,) f32
    fc_w:         (Hrep, Ch*R*R) f32   (PyTorch Linear layout, NCHW flatten order)
    fc_b:         (Hrep,) f32
    returns:      (N, Hrep) f32
    """
    N, Cin, R, R2 = x_pooled.shape
    assert R == R2
    num_convs = len(conv_weights)
    Ch = conv_weights[-1].shape[0]
    Hrep = fc_w.shape[0]
    assert fc_w.shape[1] == Ch * R * R
    assert roi_tile % 16 == 0, "ROI tile must be a multiple of 16 (bf16 sublane pack)"

    # Pad ROI count up to a multiple of the ROI tile (sliced off at the end).
    tn = roi_tile
    Np = ((N + tn - 1) // tn) * tn
    if Np != N:
        x_pooled = jnp.pad(x_pooled, ((0, Np - N), (0, 0), (0, 0), (0, 0)))

    # Layout glue (cheap, outside the kernel):
    #   activations as (R, R, N, C) -> spatial shifts touch only untiled leading dims,
    #   (ROI, channel) sit in the (sublane, lane) tile for direct MXU consumption.
    x_t = x_pooled.transpose(2, 3, 0, 1).astype(jnp.bfloat16)        # (R, R, Np, Cin)

    kernel_inputs = [x_t]
    in_specs = [pl.BlockSpec((R, R, tn, Cin), lambda i: (0, 0, i, 0))]

    for w, b in zip(conv_weights, conv_biases):
        co, ci, kh, kw = w.shape
        wt = w.transpose(2, 3, 1, 0).astype(jnp.bfloat16)            # (3, 3, ci, co)
        bt = b.reshape(1, co).astype(jnp.float32)                    # broadcast in-kernel
        kernel_inputs += [wt, bt]
        in_specs += [
            pl.BlockSpec((kh, kw, ci, co), lambda i: (0, 0, 0, 0)),
            pl.BlockSpec((1, co), lambda i: (0, 0)),
        ]

    # fc6 weight reorganized to (R, R, Ch, Hrep) so the contraction runs as R*R
    # lane-dense (tn, Ch) @ (Ch, Hrep) matmuls matching the NCHW flatten order.
    wfc_t = (fc_w.T.reshape(Ch, R, R, Hrep)
             .transpose(1, 2, 0, 3).astype(jnp.bfloat16))            # (R, R, Ch, Hrep)
    bfc_t = fc_b.reshape(1, Hrep).astype(jnp.float32)
    kernel_inputs += [wfc_t, bfc_t]
    in_specs += [
        pl.BlockSpec((R, R, Ch, Hrep), lambda i: (0, 0, 0, 0)),
        pl.BlockSpec((1, Hrep), lambda i: (0, 0)),
    ]

    out = pl.pallas_call(
        _make_kernel(num_convs, R, dilation),
        out_shape=jax.ShapeDtypeStruct((Np, Hrep), jnp.float32),
        grid_spec=pltpu.PrefetchScalarGridSpec(
            num_scalar_prefetch=0,
            grid=(Np // tn,),
            in_specs=in_specs,
            out_specs=pl.BlockSpec((tn, Hrep), lambda i: (i, 0)),
        ),
        compiler_params=pltpu.CompilerParams(
            dimension_semantics=("parallel",),          # independent ROI tiles: megacore
            vmem_limit_bytes=48 * 1024 * 1024,
        ),
    )(*kernel_inputs)
    return out[:N]


def _reference(x_pooled, conv_ws, conv_bs, fc_w, fc_b, dilation):
    """Pure-JAX reference mirroring the kernel's bf16 stream / f32 accumulation."""
    bf = lambda a: a.astype(jnp.bfloat16).astype(jnp.float32)
    act = bf(x_pooled)
    for w, b in zip(conv_ws, conv_bs):
        out = jax.lax.conv_general_dilated(
            act, bf(w), window_strides=(1, 1),
            padding=[(dilation, dilation), (dilation, dilation)],
            rhs_dilation=(dilation, dilation),
            dimension_numbers=("NCHW", "OIHW", "NCHW"))
        act = bf(jnp.maximum(out + b[None, :, None, None], 0.0))
    flat = act.reshape(act.shape[0], -1)
    y = flat @ bf(fc_w).T + fc_b[None, :]
    return jnp.maximum(y, 0.0)


if __name__ == "__main__":
    # Small shapes consistent with the module:
    #   num_rois N=32, in_channels Cin=16, conv_head_dim Ch=32,
    #   pooler resolution R=4, num_stacked_convs=2, dilation=1,
    #   representation_size Hrep=128 (lane-dense).
    N, Cin, Ch, R, Hrep = 32, 16, 32, 4, 128
    num_convs, dilation = 2, 1
    D = Ch * R * R

    key = jax.random.PRNGKey(0)
    keys = jax.random.split(key, 1 + 2 * num_convs + 2)

    x_pooled = jax.random.normal(keys[0], (N, Cin, R, R), dtype=jnp.float32)

    conv_ws, conv_bs = [], []
    ci = Cin
    for k in range(num_convs):
        w = jax.random.normal(keys[1 + 2 * k], (Ch, ci, 3, 3), dtype=jnp.float32)
        w = w / jnp.sqrt(9.0 * ci)
        b = 0.01 * jax.random.normal(keys[2 + 2 * k], (Ch,), dtype=jnp.float32)
        conv_ws.append(w)
        conv_bs.append(b)
        ci = Ch

    fc_w = jax.random.normal(keys[-2], (Hrep, D), dtype=jnp.float32) / jnp.sqrt(1.0 * D)
    fc_b = 0.01 * jax.random.normal(keys[-1], (Hrep,), dtype=jnp.float32)

    out = fpn_xconv1fc_forward(x_pooled, conv_ws, conv_bs, fc_w, fc_b,
                               dilation=dilation, roi_tile=16)
    out = jax.block_until_ready(out)

    ref = _reference(x_pooled, conv_ws, conv_bs, fc_w, fc_b, dilation)
    assert out.shape == (N, Hrep)
    max_err = float(jnp.max(jnp.abs(out - ref)))
    assert jnp.allclose(out, ref, atol=5e-3, rtol=5e-3), f"mismatch vs reference: {max_err}"

    print("KERNEL_OK")
</pallas_src>

<mosaic_0001>
module attributes {stable_mosaic.version = 11 : i64} {
  func.func @kernel(%arg0: i32, %arg1: memref<4x4x16x16xbf16, #tpu.memory_space<vmem>>, %arg2: memref<3x3x16x32xbf16, #tpu.memory_space<vmem>>, %arg3: memref<1x32xf32, #tpu.memory_space<vmem>>, %arg4: memref<3x3x32x32xbf16, #tpu.memory_space<vmem>>, %arg5: memref<1x32xf32, #tpu.memory_space<vmem>>, %arg6: memref<4x4x32x128xbf16, #tpu.memory_space<vmem>>, %arg7: memref<1x128xf32, #tpu.memory_space<vmem>>, %arg8: memref<16x128xf32, #tpu.memory_space<vmem>>) attributes {dimension_semantics = [#tpu.dimension_semantics<parallel>], iteration_bounds = array<i64: 2>, scalar_prefetch = 0 : i64, scratch_operands = 0 : i64, tpu.core_type = #tpu.core_type<tc>, window_params = [{transform_indices = @transform_0, window_bounds = array<i64: 4, 4, 16, 16>}, {pipeline_mode = #tpu.pipeline_mode<synchronous>, transform_indices = @transform_1, window_bounds = array<i64: 3, 3, 16, 32>}, {pipeline_mode = #tpu.pipeline_mode<synchronous>, transform_indices = @transform_2, window_bounds = array<i64: 1, 32>}, {pipeline_mode = #tpu.pipeline_mode<synchronous>, transform_indices = @transform_3, window_bounds = array<i64: 3, 3, 32, 32>}, {pipeline_mode = #tpu.pipeline_mode<synchronous>, transform_indices = @transform_4, window_bounds = array<i64: 1, 32>}, {pipeline_mode = #tpu.pipeline_mode<synchronous>, transform_indices = @transform_5, window_bounds = array<i64: 4, 4, 32, 128>}, {pipeline_mode = #tpu.pipeline_mode<synchronous>, transform_indices = @transform_6, window_bounds = array<i64: 1, 128>}, {transform_indices = @transform_7, window_bounds = array<i64: 16, 128>}]} {
    %c0 = arith.constant 0 : index
    %c0_0 = arith.constant 0 : index
    %c0_1 = arith.constant 0 : index
    %c0_2 = arith.constant 0 : index
    %0 = vector.load %arg1[%c0, %c0_0, %c0_1, %c0_2] : memref<4x4x16x16xbf16, #tpu.memory_space<vmem>>, vector<4x4x16x16xbf16>
    %cst = arith.constant 0.000000e+00 : bf16
    %1 = vector.broadcast %cst : bf16 to vector<1x4x16x16xbf16>
    %2 = tpu.concatenate %1, %0, %1 in 0 : vector<1x4x16x16xbf16>, vector<4x4x16x16xbf16>, vector<1x4x16x16xbf16> -> vector<6x4x16x16xbf16>
    %cst_3 = arith.constant 0.000000e+00 : bf16
    %3 = vector.broadcast %cst_3 : bf16 to vector<6x1x16x16xbf16>
    %4 = tpu.concatenate %3, %2, %3 in 1 : vector<6x1x16x16xbf16>, vector<6x4x16x16xbf16>, vector<6x1x16x16xbf16> -> vector<6x6x16x16xbf16>
    %cst_4 = arith.constant 0.000000e+00 : f32
    %5 = vector.broadcast %cst_4 : f32 to vector<256x32xf32>
    %6 = vector.extract_strided_slice %4 {offsets = [0, 0, 0, 0], sizes = [4, 4, 16, 16], strides = [1, 1, 1, 1]} : vector<6x6x16x16xbf16> to vector<4x4x16x16xbf16>
    %7 = vector.shape_cast %6 : vector<4x4x16x16xbf16> to vector<256x16xbf16>
    %c0_5 = arith.constant 0 : index
    %c0_6 = arith.constant 0 : index
    %c0_7 = arith.constant 0 : index
    %c0_8 = arith.constant 0 : index
    %8 = vector.load %arg2[%c0_5, %c0_6, %c0_7, %c0_8] : memref<3x3x16x32xbf16, #tpu.memory_space<vmem>>, vector<1x1x16x32xbf16>
    %9 = vector.shape_cast %8 : vector<1x1x16x32xbf16> to vector<16x32xbf16>
    %cst_9 = arith.constant dense<0.000000e+00> : vector<256x32xf32>
    %10 = tpu.matmul %7, %9, %cst_9 {dimension_numbers = #tpu.dot_dimension_numbers<[1], [0], [0], [1], [0, 0, 1, 1], [], []>} : vector<256x16xbf16>, vector<16x32xbf16>, vector<256x32xf32> -> vector<256x32xf32>
    %11 = arith.addf %5, %10 : vector<256x32xf32>
    %12 = vector.extract_strided_slice %4 {offsets = [0, 1, 0, 0], sizes = [4, 4, 16, 16], strides = [1, 1, 1, 1]} : vector<6x6x16x16xbf16> to vector<4x4x16x16xbf16>
    %13 = vector.shape_cast %12 : vector<4x4x16x16xbf16> to vector<256x16xbf16>
    %c0_10 = arith.constant 0 : index
    %c1 = arith.constant 1 : index
    %c0_11 = arith.constant 0 : index
    %c0_12 = arith.constant 0 : index
    %14 = vector.load %arg2[%c0_10, %c1, %c0_11, %c0_12] : memref<3x3x16x32xbf16, #tpu.memory_space<vmem>>, vector<1x1x16x32xbf16>
    %15 = vector.shape_cast %14 : vector<1x1x16x32xbf16> to vector<16x32xbf16>
    %cst_13 = arith.constant dense<0.000000e+00> : vector<256x32xf32>
    %16 = tpu.matmul %13, %15, %cst_13 {dimension_numbers = #tpu.dot_dimension_numbers<[1], [0], [0], [1], [0, 0, 1, 1], [], []>} : vector<256x16xbf16>, vector<16x32xbf16>, vector<256x32xf32> -> vector<256x32xf32>
    %17 = arith.addf %11, %16 : vector<256x32xf32>
    %18 = vector.extract_strided_slice %4 {offsets = [0, 2, 0, 0], sizes = [4, 4, 16, 16], strides = [1, 1, 1, 1]} : vector<6x6x16x16xbf16> to vector<4x4x16x16xbf16>
    %19 = vector.shape_cast %18 : vector<4x4x16x16xbf16> to vector<256x16xbf16>
    %c0_14 = arith.constant 0 : index
    %c2 = arith.constant 2 : index
    %c0_15 = arith.constant 0 : index
    %c0_16 = arith.constant 0 : index
    %20 = vector.load %arg2[%c0_14, %c2, %c0_15, %c0_16] : memref<3x3x16x32xbf16, #tpu.memory_space<vmem>>, vector<1x1x16x32xbf16>
    %21 = vector.shape_cast %20 : vector<1x1x16x32xbf16> to vector<16x32xbf16>
    %cst_17 = arith.constant dense<0.000000e+00> : vector<256x32xf32>
    %22 = tpu.matmul %19, %21, %cst_17 {dimension_numbers = #tpu.dot_dimension_numbers<[1], [0], [0], [1], [0, 0, 1, 1], [], []>} : vector<256x16xbf16>, vector<16x32xbf16>, vector<256x32xf32> -> vector<256x32xf32>
    %23 = arith.addf %17, %22 : vector<256x32xf32>
    %24 = vector.extract_strided_slice %4 {offsets = [1, 0, 0, 0], sizes = [4, 4, 16, 16], strides = [1, 1, 1, 1]} : vector<6x6x16x16xbf16> to vector<4x4x16x16xbf16>
    %25 = vector.shape_cast %24 : vector<4x4x16x16xbf16> to vector<256x16xbf16>
    %c1_18 = arith.constant 1 : index
    %c0_19 = arith.constant 0 : index
    %c0_20 = arith.constant 0 : index
    %c0_21 = arith.constant 0 : index
    %26 = vector.load %arg2[%c1_18, %c0_19, %c0_20, %c0_21] : memref<3x3x16x32xbf16, #tpu.memory_space<vmem>>, vector<1x1x16x32xbf16>
    %27 = vector.shape_cast %26 : vector<1x1x16x32xbf16> to vector<16x32xbf16>
    %cst_22 = arith.constant dense<0.000000e+00> : vector<256x32xf32>
    %28 = tpu.matmul %25, %27, %cst_22 {dimension_numbers = #tpu.dot_dimension_numbers<[1], [0], [0], [1], [0, 0, 1, 1], [], []>} : vector<256x16xbf16>, vector<16x32xbf16>, vector<256x32xf32> -> vector<256x32xf32>
    %29 = arith.addf %23, %28 : vector<256x32xf32>
    %30 = vector.extract_strided_slice %4 {offsets = [1, 1, 0, 0], sizes = [4, 4, 16, 16], strides = [1, 1, 1, 1]} : vector<6x6x16x16xbf16> to vector<4x4x16x16xbf16>
    %31 = vector.shape_cast %30 : vector<4x4x16x16xbf16> to vector<256x16xbf16>
    %c1_23 = arith.constant 1 : index
    %c1_24 = arith.constant 1 : index
    %c0_25 = arith.constant 0 : index
    %c0_26 = arith.constant 0 : index
    %32 = vector.load %arg2[%c1_23, %c1_24, %c0_25, %c0_26] : memref<3x3x16x32xbf16, #tpu.memory_space<vmem>>, vector<1x1x16x32xbf16>
    %33 = vector.shape_cast %32 : vector<1x1x16x32xbf16> to vector<16x32xbf16>
    %cst_27 = arith.constant dense<0.000000e+00> : vector<256x32xf32>
    %34 = tpu.matmul %31, %33, %cst_27 {dimension_numbers = #tpu.dot_dimension_numbers<[1], [0], [0], [1], [0, 0, 1, 1], [], []>} : vector<256x16xbf16>, vector<16x32xbf16>, vector<256x32xf32> -> vector<256x32xf32>
    %35 = arith.addf %29, %34 : vector<256x32xf32>
    %36 = vector.extract_strided_slice %4 {offsets = [1, 2, 0, 0], sizes = [4, 4, 16, 16], strides = [1, 1, 1, 1]} : vector<6x6x16x16xbf16> to vector<4x4x16x16xbf16>
    %37 = vector.shape_cast %36 : vector<4x4x16x16xbf16> to vector<256x16xbf16>
    %c1_28 = arith.constant 1 : index
    %c2_29 = arith.constant 2 : index
    %c0_30 = arith.constant 0 : index
    %c0_31 = arith.constant 0 : index
    %38 = vector.load %arg2[%c1_28, %c2_29, %c0_30, %c0_31] : memref<3x3x16x32xbf16, #tpu.memory_space<vmem>>, vector<1x1x16x32xbf16>
    %39 = vector.shape_cast %38 : vector<1x1x16x32xbf16> to vector<16x32xbf16>
    %cst_32 = arith.constant dense<0.000000e+00> : vector<256x32xf32>
    %40 = tpu.matmul %37, %39, %cst_32 {dimension_numbers = #tpu.dot_dimension_numbers<[1], [0], [0], [1], [0, 0, 1, 1], [], []>} : vector<256x16xbf16>, vector<16x32xbf16>, vector<256x32xf32> -> vector<256x32xf32>
    %41 = arith.addf %35, %40 : vector<256x32xf32>
    %42 = vector.extract_strided_slice %4 {offsets = [2, 0, 0, 0], sizes = [4, 4, 16, 16], strides = [1, 1, 1, 1]} : vector<6x6x16x16xbf16> to vector<4x4x16x16xbf16>
    %43 = vector.shape_cast %42 : vector<4x4x16x16xbf16> to vector<256x16xbf16>
    %c2_33 = arith.constant 2 : index
    %c0_34 = arith.constant 0 : index
    %c0_35 = arith.constant 0 : index
    %c0_36 = arith.constant 0 : index
    %44 = vector.load %arg2[%c2_33, %c0_34, %c0_35, %c0_36] : memref<3x3x16x32xbf16, #tpu.memory_space<vmem>>, vector<1x1x16x32xbf16>
    %45 = vector.shape_cast %44 : vector<1x1x16x32xbf16> to vector<16x32xbf16>
    %cst_37 = arith.constant dense<0.000000e+00> : vector<256x32xf32>
    %46 = tpu.matmul %43, %45, %cst_37 {dimension_numbers = #tpu.dot_dimension_numbers<[1], [0], [0], [1], [0, 0, 1, 1], [], []>} : vector<256x16xbf16>, vector<16x32xbf16>, vector<256x32xf32> -> vector<256x32xf32>
    %47 = arith.addf %41, %46 : vector<256x32xf32>
    %48 = vector.extract_strided_slice %4 {offsets = [2, 1, 0, 0], sizes = [4, 4, 16, 16], strides = [1, 1, 1, 1]} : vector<6x6x16x16xbf16> to vector<4x4x16x16xbf16>
    %49 = vector.shape_cast %48 : vector<4x4x16x16xbf16> to vector<256x16xbf16>
    %c2_38 = arith.constant 2 : index
    %c1_39 = arith.constant 1 : index
    %c0_40 = arith.constant 0 : index
    %c0_41 = arith.constant 0 : index
    %50 = vector.load %arg2[%c2_38, %c1_39, %c0_40, %c0_41] : memref<3x3x16x32xbf16, #tpu.memory_space<vmem>>, vector<1x1x16x32xbf16>
    %51 = vector.shape_cast %50 : vector<1x1x16x32xbf16> to vector<16x32xbf16>
    %cst_42 = arith.constant dense<0.000000e+00> : vector<256x32xf32>
    %52 = tpu.matmul %49, %51, %cst_42 {dimension_numbers = #tpu.dot_dimension_numbers<[1], [0], [0], [1], [0, 0, 1, 1], [], []>} : vector<256x16xbf16>, vector<16x32xbf16>, vector<256x32xf32> -> vector<256x32xf32>
    %53 = arith.addf %47, %52 : vector<256x32xf32>
    %54 = vector.extract_strided_slice %4 {offsets = [2, 2, 0, 0], sizes = [4, 4, 16, 16], strides = [1, 1, 1, 1]} : vector<6x6x16x16xbf16> to vector<4x4x16x16xbf16>
    %55 = vector.shape_cast %54 : vector<4x4x16x16xbf16> to vector<256x16xbf16>
    %c2_43 = arith.constant 2 : index
    %c2_44 = arith.constant 2 : index
    %c0_45 = arith.constant 0 : index
    %c0_46 = arith.constant 0 : index
    %56 = vector.load %arg2[%c2_43, %c2_44, %c0_45, %c0_46] : memref<3x3x16x32xbf16, #tpu.memory_space<vmem>>, vector<1x1x16x32xbf16>
    %57 = vector.shape_cast %56 : vector<1x1x16x32xbf16> to vector<16x32xbf16>
    %cst_47 = arith.constant dense<0.000000e+00> : vector<256x32xf32>
    %58 = tpu.matmul %55, %57, %cst_47 {dimension_numbers = #tpu.dot_dimension_numbers<[1], [0], [0], [1], [0, 0, 1, 1], [], []>} : vector<256x16xbf16>, vector<16x32xbf16>, vector<256x32xf32> -> vector<256x32xf32>
    %59 = arith.addf %53, %58 : vector<256x32xf32>
    %c0_48 = arith.constant 0 : index
    %c0_49 = arith.constant 0 : index
    %60 = vector.load %arg3[%c0_48, %c0_49] : memref<1x32xf32, #tpu.memory_space<vmem>>, vector<1x32xf32>
    %61 = vector.broadcast %60 : vector<1x32xf32> to vector<256x32xf32>
    %62 = arith.addf %59, %61 : vector<256x32xf32>
    %cst_50 = arith.constant 0.000000e+00 : f32
    %63 = vector.broadcast %cst_50 : f32 to vector<256x32xf32>
    %64 = arith.maximumf %62, %63 : vector<256x32xf32>
    %65 = arith.truncf %64 : vector<256x32xf32> to vector<256x32xbf16>
    %66 = vector.shape_cast %65 : vector<256x32xbf16> to vector<4x4x16x32xbf16>
    %cst_51 = arith.constant 0.000000e+00 : bf16
    %67 = vector.broadcast %cst_51 : bf16 to vector<1x4x16x32xbf16>
    %68 = tpu.concatenate %67, %66, %67 in 0 : vector<1x4x16x32xbf16>, vector<4x4x16x32xbf16>, vector<1x4x16x32xbf16> -> vector<6x4x16x32xbf16>
    %cst_52 = arith.constant 0.000000e+00 : bf16
    %69 = vector.broadcast %cst_52 : bf16 to vector<6x1x16x32xbf16>
    %70 = tpu.concatenate %69, %68, %69 in 1 : vector<6x1x16x32xbf16>, vector<6x4x16x32xbf16>, vector<6x1x16x32xbf16> -> vector<6x6x16x32xbf16>
    %cst_53 = arith.constant 0.000000e+00 : f32
    %71 = vector.broadcast %cst_53 : f32 to vector<256x32xf32>
    %72 = vector.extract_strided_slice %70 {offsets = [0, 0, 0, 0], sizes = [4, 4, 16, 32], strides = [1, 1, 1, 1]} : vector<6x6x16x32xbf16> to vector<4x4x16x32xbf16>
    %73 = vector.shape_cast %72 : vector<4x4x16x32xbf16> to vector<256x32xbf16>
    %c0_54 = arith.constant 0 : index
    %c0_55 = arith.constant 0 : index
    %c0_56 = arith.constant 0 : index
    %c0_57 = arith.constant 0 : index
    %74 = vector.load %arg4[%c0_54, %c0_55, %c0_56, %c0_57] : memref<3x3x32x32xbf16, #tpu.memory_space<vmem>>, vector<1x1x32x32xbf16>
    %75 = vector.shape_cast %74 : vector<1x1x32x32xbf16> to vector<32x32xbf16>
    %cst_58 = arith.constant dense<0.000000e+00> : vector<256x32xf32>
    %76 = tpu.matmul %73, %75, %cst_58 {dimension_numbers = #tpu.dot_dimension_numbers<[1], [0], [0], [1], [0, 0, 1, 1], [], []>} : vector<256x32xbf16>, vector<32x32xbf16>, vector<256x32xf32> -> vector<256x32xf32>
    %77 = arith.addf %71, %76 : vector<256x32xf32>
    %78 = vector.extract_strided_slice %70 {offsets = [0, 1, 0, 0], sizes = [4, 4, 16, 32], strides = [1, 1, 1, 1]} : vector<6x6x16x32xbf16> to vector<4x4x16x32xbf16>
    %79 = vector.shape_cast %78 : vector<4x4x16x32xbf16> to vector<256x32xbf16>
    %c0_59 = arith.constant 0 : index
    %c1_60 = arith.constant 1 : index
    %c0_61 = arith.constant 0 : index
    %c0_62 = arith.constant 0 : index
    %80 = vector.load %arg4[%c0_59, %c1_60, %c0_61, %c0_62] : memref<3x3x32x32xbf16, #tpu.memory_space<vmem>>, vector<1x1x32x32xbf16>
    %81 = vector.shape_cast %80 : vector<1x1x32x32xbf16> to vector<32x32xbf16>
    %cst_63 = arith.constant dense<0.000000e+00> : vector<256x32xf32>
    %82 = tpu.matmul %79, %81, %cst_63 {dimension_numbers = #tpu.dot_dimension_numbers<[1], [0], [0], [1], [0, 0, 1, 1], [], []>} : vector<256x32xbf16>, vector<32x32xbf16>, vector<256x32xf32> -> vector<256x32xf32>
    %83 = arith.addf %77, %82 : vector<256x32xf32>
    %84 = vector.extract_strided_slice %70 {offsets = [0, 2, 0, 0], sizes = [4, 4, 16, 32], strides = [1, 1, 1, 1]} : vector<6x6x16x32xbf16> to vector<4x4x16x32xbf16>
    %85 = vector.shape_cast %84 : vector<4x4x16x32xbf16> to vector<256x32xbf16>
    %c0_64 = arith.constant 0 : index
    %c2_65 = arith.constant 2 : index
    %c0_66 = arith.constant 0 : index
    %c0_67 = arith.constant 0 : index
    %86 = vector.load %arg4[%c0_64, %c2_65, %c0_66, %c0_67] : memref<3x3x32x32xbf16, #tpu.memory_space<vmem>>, vector<1x1x32x32xbf16>
    %87 = vector.shape_cast %86 : vector<1x1x32x32xbf16> to vector<32x32xbf16>
    %cst_68 = arith.constant dense<0.000000e+00> : vector<256x32xf32>
    %88 = tpu.matmul %85, %87, %cst_68 {dimension_numbers = #tpu.dot_dimension_numbers<[1], [0], [0], [1], [0, 0, 1, 1], [], []>} : vector<256x32xbf16>, vector<32x32xbf16>, vector<256x32xf32> -> vector<256x32xf32>
    %89 = arith.addf %83, %88 : vector<256x32xf32>
    %90 = vector.extract_strided_slice %70 {offsets = [1, 0, 0, 0], sizes = [4, 4, 16, 32], strides = [1, 1, 1, 1]} : vector<6x6x16x32xbf16> to vector<4x4x16x32xbf16>
    %91 = vector.shape_cast %90 : vector<4x4x16x32xbf16> to vector<256x32xbf16>
    %c1_69 = arith.constant 1 : index
    %c0_70 = arith.constant 0 : index
    %c0_71 = arith.constant 0 : index
    %c0_72 = arith.constant 0 : index
    %92 = vector.load %arg4[%c1_69, %c0_70, %c0_71, %c0_72] : memref<3x3x32x32xbf16, #tpu.memory_space<vmem>>, vector<1x1x32x32xbf16>
    %93 = vector.shape_cast %92 : vector<1x1x32x32xbf16> to vector<32x32xbf16>
    %cst_73 = arith.constant dense<0.000000e+00> : vector<256x32xf32>
    %94 = tpu.matmul %91, %93, %cst_73 {dimension_numbers = #tpu.dot_dimension_numbers<[1], [0], [0], [1], [0, 0, 1, 1], [], []>} : vector<256x32xbf16>, vector<32x32xbf16>, vector<256x32xf32> -> vector<256x32xf32>
    %95 = arith.addf %89, %94 : vector<256x32xf32>
    %96 = vector.extract_strided_slice %70 {offsets = [1, 1, 0, 0], sizes = [4, 4, 16, 32], strides = [1, 1, 1, 1]} : vector<6x6x16x32xbf16> to vector<4x4x16x32xbf16>
    %97 = vector.shape_cast %96 : vector<4x4x16x32xbf16> to vector<256x32xbf16>
    %c1_74 = arith.constant 1 : index
    %c1_75 = arith.constant 1 : index
    %c0_76 = arith.constant 0 : index
    %c0_77 = arith.constant 0 : index
    %98 = vector.load %arg4[%c1_74, %c1_75, %c0_76, %c0_77] : memref<3x3x32x32xbf16, #tpu.memory_space<vmem>>, vector<1x1x32x32xbf16>
    %99 = vector.shape_cast %98 : vector<1x1x32x32xbf16> to vector<32x32xbf16>
    %cst_78 = arith.constant dense<0.000000e+00> : vector<256x32xf32>
    %100 = tpu.matmul %97, %99, %cst_78 {dimension_numbers = #tpu.dot_dimension_numbers<[1], [0], [0], [1], [0, 0, 1, 1], [], []>} : vector<256x32xbf16>, vector<32x32xbf16>, vector<256x32xf32> -> vector<256x32xf32>
    %101 = arith.addf %95, %100 : vector<256x32xf32>
    %102 = vector.extract_strided_slice %70 {offsets = [1, 2, 0, 0], sizes = [4, 4, 16, 32], strides = [1, 1, 1, 1]} : vector<6x6x16x32xbf16> to vector<4x4x16x32xbf16>
    %103 = vector.shape_cast %102 : vector<4x4x16x32xbf16> to vector<256x32xbf16>
    %c1_79 = arith.constant 1 : index
    %c2_80 = arith.constant 2 : index
    %c0_81 = arith.constant 0 : index
    %c0_82 = arith.constant 0 : index
    %104 = vector.load %arg4[%c1_79, %c2_80, %c0_81, %c0_82] : memref<3x3x32x32xbf16, #tpu.memory_space<vmem>>, vector<1x1x32x32xbf16>
    %105 = vector.shape_cast %104 : vector<1x1x32x32xbf16> to vector<32x32xbf16>
    %cst_83 = arith.constant dense<0.000000e+00> : vector<256x32xf32>
    %106 = tpu.matmul %103, %105, %cst_83 {dimension_numbers = #tpu.dot_dimension_numbers<[1], [0], [0], [1], [0, 0, 1, 1], [], []>} : vector<256x32xbf16>, vector<32x32xbf16>, vector<256x32xf32> -> vector<256x32xf32>
    %107 = arith.addf %101, %106 : vector<256x32xf32>
    %108 = vector.extract_strided_slice %70 {offsets = [2, 0, 0, 0], sizes = [4, 4, 16, 32], strides = [1, 1, 1, 1]} : vector<6x6x16x32xbf16> to vector<4x4x16x32xbf16>
    %109 = vector.shape_cast %108 : vector<4x4x16x32xbf16> to vector<256x32xbf16>
    %c2_84 = arith.constant 2 : index
    %c0_85 = arith.constant 0 : index
    %c0_86 = arith.constant 0 : index
    %c0_87 = arith.constant 0 : index
    %110 = vector.load %arg4[%c2_84, %c0_85, %c0_86, %c0_87] : memref<3x3x32x32xbf16, #tpu.memory_space<vmem>>, vector<1x1x32x32xbf16>
    %111 = vector.shape_cast %110 : vector<1x1x32x32xbf16> to vector<32x32xbf16>
    %cst_88 = arith.constant dense<0.000000e+00> : vector<256x32xf32>
    %112 = tpu.matmul %109, %111, %cst_88 {dimension_numbers = #tpu.dot_dimension_numbers<[1], [0], [0], [1], [0, 0, 1, 1], [], []>} : vector<256x32xbf16>, vector<32x32xbf16>, vector<256x32xf32> -> vector<256x32xf32>
    %113 = arith.addf %107, %112 : vector<256x32xf32>
    %114 = vector.extract_strided_slice %70 {offsets = [2, 1, 0, 0], sizes = [4, 4, 16, 32], strides = [1, 1, 1, 1]} : vector<6x6x16x32xbf16> to vector<4x4x16x32xbf16>
    %115 = vector.shape_cast %114 : vector<4x4x16x32xbf16> to vector<256x32xbf16>
    %c2_89 = arith.constant 2 : index
    %c1_90 = arith.constant 1 : index
    %c0_91 = arith.constant 0 : index
    %c0_92 = arith.constant 0 : index
    %116 = vector.load %arg4[%c2_89, %c1_90, %c0_91, %c0_92] : memref<3x3x32x32xbf16, #tpu.memory_space<vmem>>, vector<1x1x32x32xbf16>
    %117 = vector.shape_cast %116 : vector<1x1x32x32xbf16> to vector<32x32xbf16>
    %cst_93 = arith.constant dense<0.000000e+00> : vector<256x32xf32>
    %118 = tpu.matmul %115, %117, %cst_93 {dimension_numbers = #tpu.dot_dimension_numbers<[1], [0], [0], [1], [0, 0, 1, 1], [], []>} : vector<256x32xbf16>, vector<32x32xbf16>, vector<256x32xf32> -> vector<256x32xf32>
    %119 = arith.addf %113, %118 : vector<256x32xf32>
    %120 = vector.extract_strided_slice %70 {offsets = [2, 2, 0, 0], sizes = [4, 4, 16, 32], strides = [1, 1, 1, 1]} : vector<6x6x16x32xbf16> to vector<4x4x16x32xbf16>
    %121 = vector.shape_cast %120 : vector<4x4x16x32xbf16> to vector<256x32xbf16>
    %c2_94 = arith.constant 2 : index
    %c2_95 = arith.constant 2 : index
    %c0_96 = arith.constant 0 : index
    %c0_97 = arith.constant 0 : index
    %122 = vector.load %arg4[%c2_94, %c2_95, %c0_96, %c0_97] : memref<3x3x32x32xbf16, #tpu.memory_space<vmem>>, vector<1x1x32x32xbf16>
    %123 = vector.shape_cast %122 : vector<1x1x32x32xbf16> to vector<32x32xbf16>
    %cst_98 = arith.constant dense<0.000000e+00> : vector<256x32xf32>
    %124 = tpu.matmul %121, %123, %cst_98 {dimension_numbers = #tpu.dot_dimension_numbers<[1], [0], [0], [1], [0, 0, 1, 1], [], []>} : vector<256x32xbf16>, vector<32x32xbf16>, vector<256x32xf32> -> vector<256x32xf32>
    %125 = arith.addf %119, %124 : vector<256x32xf32>
    %c0_99 = arith.constant 0 : index
    %c0_100 = arith.constant 0 : index
    %126 = vector.load %arg5[%c0_99, %c0_100] : memref<1x32xf32, #tpu.memory_space<vmem>>, vector<1x32xf32>
    %127 = vector.broadcast %126 : vector<1x32xf32> to vector<256x32xf32>
    %128 = arith.addf %125, %127 : vector<256x32xf32>
    %cst_101 = arith.constant 0.000000e+00 : f32
    %129 = vector.broadcast %cst_101 : f32 to vector<256x32xf32>
    %130 = arith.maximumf %128, %129 : vector<256x32xf32>
    %131 = arith.truncf %130 : vector<256x32xf32> to vector<256x32xbf16>
    %132 = vector.shape_cast %131 : vector<256x32xbf16> to vector<4x4x16x32xbf16>
    %cst_102 = arith.constant 0.000000e+00 : f32
    %133 = vector.broadcast %cst_102 : f32 to vector<16x128xf32>
    %134 = vector.extract_strided_slice %132 {offsets = [0, 0, 0, 0], sizes = [1, 1, 16, 32], strides = [1, 1, 1, 1]} : vector<4x4x16x32xbf16> to vector<1x1x16x32xbf16>
    %135 = vector.shape_cast %134 : vector<1x1x16x32xbf16> to vector<16x32xbf16>
    %c0_103 = arith.constant 0 : index
    %c0_104 = arith.constant 0 : index
    %c0_105 = arith.constant 0 : index
    %c0_106 = arith.constant 0 : index
    %136 = vector.load %arg6[%c0_103, %c0_104, %c0_105, %c0_106] : memref<4x4x32x128xbf16, #tpu.memory_space<vmem>>, vector<1x1x32x128xbf16>
    %137 = vector.shape_cast %136 : vector<1x1x32x128xbf16> to vector<32x128xbf16>
    %cst_107 = arith.constant dense<0.000000e+00> : vector<16x128xf32>
    %138 = tpu.matmul %135, %137, %cst_107 {dimension_numbers = #tpu.dot_dimension_numbers<[1], [0], [0], [1], [0, 0, 1, 1], [], []>} : vector<16x32xbf16>, vector<32x128xbf16>, vector<16x128xf32> -> vector<16x128xf32>
    %139 = arith.addf %133, %138 : vector<16x128xf32>
    %140 = vector.extract_strided_slice %132 {offsets = [0, 1, 0, 0], sizes = [1, 1, 16, 32], strides = [1, 1, 1, 1]} : vector<4x4x16x32xbf16> to vector<1x1x16x32xbf16>
    %141 = vector.shape_cast %140 : vector<1x1x16x32xbf16> to vector<16x32xbf16>
    %c0_108 = arith.constant 0 : index
    %c1_109 = arith.constant 1 : index
    %c0_110 = arith.constant 0 : index
    %c0_111 = arith.constant 0 : index
    %142 = vector.load %arg6[%c0_108, %c1_109, %c0_110, %c0_111] : memref<4x4x32x128xbf16, #tpu.memory_space<vmem>>, vector<1x1x32x128xbf16>
    %143 = vector.shape_cast %142 : vector<1x1x32x128xbf16> to vector<32x128xbf16>
    %cst_112 = arith.constant dense<0.000000e+00> : vector<16x128xf32>
    %144 = tpu.matmul %141, %143, %cst_112 {dimension_numbers = #tpu.dot_dimension_numbers<[1], [0], [0], [1], [0, 0, 1, 1], [], []>} : vector<16x32xbf16>, vector<32x128xbf16>, vector<16x128xf32> -> vector<16x128xf32>
    %145 = arith.addf %139, %144 : vector<16x128xf32>
    %146 = vector.extract_strided_slice %132 {offsets = [0, 2, 0, 0], sizes = [1, 1, 16, 32], strides = [1, 1, 1, 1]} : vector<4x4x16x32xbf16> to vector<1x1x16x32xbf16>
    %147 = vector.shape_cast %146 : vector<1x1x16x32xbf16> to vector<16x32xbf16>
    %c0_113 = arith.constant 0 : index
    %c2_114 = arith.constant 2 : index
    %c0_115 = arith.constant 0 : index
    %c0_116 = arith.constant 0 : index
    %148 = vector.load %arg6[%c0_113, %c2_114, %c0_115, %c0_116] : memref<4x4x32x128xbf16, #tpu.memory_space<vmem>>, vector<1x1x32x128xbf16>
    %149 = vector.shape_cast %148 : vector<1x1x32x128xbf16> to vector<32x128xbf16>
    %cst_117 = arith.constant dense<0.000000e+00> : vector<16x128xf32>
    %150 = tpu.matmul %147, %149, %cst_117 {dimension_numbers = #tpu.dot_dimension_numbers<[1], [0], [0], [1], [0, 0, 1, 1], [], []>} : vector<16x32xbf16>, vector<32x128xbf16>, vector<16x128xf32> -> vector<16x128xf32>
    %151 = arith.addf %145, %150 : vector<16x128xf32>
    %152 = vector.extract_strided_slice %132 {offsets = [0, 3, 0, 0], sizes = [1, 1, 16, 32], strides = [1, 1, 1, 1]} : vector<4x4x16x32xbf16> to vector<1x1x16x32xbf16>
    %153 = vector.shape_cast %152 : vector<1x1x16x32xbf16> to vector<16x32xbf16>
    %c0_118 = arith.constant 0 : index
    %c3 = arith.constant 3 : index
    %c0_119 = arith.constant 0 : index
    %c0_120 = arith.constant 0 : index
    %154 = vector.load %arg6[%c0_118, %c3, %c0_119, %c0_120] : memref<4x4x32x128xbf16, #tpu.memory_space<vmem>>, vector<1x1x32x128xbf16>
    %155 = vector.shape_cast %154 : vector<1x1x32x128xbf16> to vector<32x128xbf16>
    %cst_121 = arith.constant dense<0.000000e+00> : vector<16x128xf32>
    %156 = tpu.matmul %153, %155, %cst_121 {dimension_numbers = #tpu.dot_dimension_numbers<[1], [0], [0], [1], [0, 0, 1, 1], [], []>} : vector<16x32xbf16>, vector<32x128xbf16>, vector<16x128xf32> -> vector<16x128xf32>
    %157 = arith.addf %151, %156 : vector<16x128xf32>
    %158 = vector.extract_strided_slice %132 {offsets = [1, 0, 0, 0], sizes = [1, 1, 16, 32], strides = [1, 1, 1, 1]} : vector<4x4x16x32xbf16> to vector<1x1x16x32xbf16>
    %159 = vector.shape_cast %158 : vector<1x1x16x32xbf16> to vector<16x32xbf16>
    %c1_122 = arith.constant 1 : index
    %c0_123 = arith.constant 0 : index
    %c0_124 = arith.constant 0 : index
    %c0_125 = arith.constant 0 : index
    %160 = vector.load %arg6[%c1_122, %c0_123, %c0_124, %c0_125] : memref<4x4x32x128xbf16, #tpu.memory_space<vmem>>, vector<1x1x32x128xbf16>
    %161 = vector.shape_cast %160 : vector<1x1x32x128xbf16> to vector<32x128xbf16>
    %cst_126 = arith.constant dense<0.000000e+00> : vector<16x128xf32>
    %162 = tpu.matmul %159, %161, %cst_126 {dimension_numbers = #tpu.dot_dimension_numbers<[1], [0], [0], [1], [0, 0, 1, 1], [], []>} : vector<16x32xbf16>, vector<32x128xbf16>, vector<16x128xf32> -> vector<16x128xf32>
    %163 = arith.addf %157, %162 : vector<16x128xf32>
    %164 = vector.extract_strided_slice %132 {offsets = [1, 1, 0, 0], sizes = [1, 1, 16, 32], strides = [1, 1, 1, 1]} : vector<4x4x16x32xbf16> to vector<1x1x16x32xbf16>
    %165 = vector.shape_cast %164 : vector<1x1x16x32xbf16> to vector<16x32xbf16>
    %c1_127 = arith.constant 1 : index
    %c1_128 = arith.constant 1 : index
    %c0_129 = arith.constant 0 : index
    %c0_130 = arith.constant 0 : index
    %166 = vector.load %arg6[%c1_127, %c1_128, %c0_129, %c0_130] : memref<4x4x32x128xbf16, #tpu.memory_space<vmem>>, vector<1x1x32x128xbf16>
    %167 = vector.shape_cast %166 : vector<1x1x32x128xbf16> to vector<32x128xbf16>
    %cst_131 = arith.constant dense<0.000000e+00> : vector<16x128xf32>
    %168 = tpu.matmul %165, %167, %cst_131 {dimension_numbers = #tpu.dot_dimension_numbers<[1], [0], [0], [1], [0, 0, 1, 1], [], []>} : vector<16x32xbf16>, vector<32x128xbf16>, vector<16x128xf32> -> vector<16x128xf32>
    %169 = arith.addf %163, %168 : vector<16x128xf32>
    %170 = vector.extract_strided_slice %132 {offsets = [1, 2, 0, 0], sizes = [1, 1, 16, 32], strides = [1, 1, 1, 1]} : vector<4x4x16x32xbf16> to vector<1x1x16x32xbf16>
    %171 = vector.shape_cast %170 : vector<1x1x16x32xbf16> to vector<16x32xbf16>
    %c1_132 = arith.constant 1 : index
    %c2_133 = arith.constant 2 : index
    %c0_134 = arith.constant 0 : index
    %c0_135 = arith.constant 0 : index
    %172 = vector.load %arg6[%c1_132, %c2_133, %c0_134, %c0_135] : memref<4x4x32x128xbf16, #tpu.memory_space<vmem>>, vector<1x1x32x128xbf16>
    %173 = vector.shape_cast %172 : vector<1x1x32x128xbf16> to vector<32x128xbf16>
    %cst_136 = arith.constant dense<0.000000e+00> : vector<16x128xf32>
    %174 = tpu.matmul %171, %173, %cst_136 {dimension_numbers = #tpu.dot_dimension_numbers<[1], [0], [0], [1], [0, 0, 1, 1], [], []>} : vector<16x32xbf16>, vector<32x128xbf16>, vector<16x128xf32> -> vector<16x128xf32>
    %175 = arith.addf %169, %174 : vector<16x128xf32>
    %176 = vector.extract_strided_slice %132 {offsets = [1, 3, 0, 0], sizes = [1, 1, 16, 32], strides = [1, 1, 1, 1]} : vector<4x4x16x32xbf16> to vector<1x1x16x32xbf16>
    %177 = vector.shape_cast %176 : vector<1x1x16x32xbf16> to vector<16x32xbf16>
    %c1_137 = arith.constant 1 : index
    %c3_138 = arith.constant 3 : index
    %c0_139 = arith.constant 0 : index
    %c0_140 = arith.constant 0 : index
    %178 = vector.load %arg6[%c1_137, %c3_138, %c0_139, %c0_140] : memref<4x4x32x128xbf16, #tpu.memory_space<vmem>>, vector<1x1x32x128xbf16>
    %179 = vector.shape_cast %178 : vector<1x1x32x128xbf16> to vector<32x128xbf16>
    %cst_141 = arith.constant dense<0.000000e+00> : vector<16x128xf32>
    %180 = tpu.matmul %177, %179, %cst_141 {dimension_numbers = #tpu.dot_dimension_numbers<[1], [0], [0], [1], [0, 0, 1, 1], [], []>} : vector<16x32xbf16>, vector<32x128xbf16>, vector<16x128xf32> -> vector<16x128xf32>
    %181 = arith.addf %175, %180 : vector<16x128xf32>
    %182 = vector.extract_strided_slice %132 {offsets = [2, 0, 0, 0], sizes = [1, 1, 16, 32], strides = [1, 1, 1, 1]} : vector<4x4x16x32xbf16> to vector<1x1x16x32xbf16>
    %183 = vector.shape_cast %182 : vector<1x1x16x32xbf16> to vector<16x32xbf16>
    %c2_142 = arith.constant 2 : index
    %c0_143 = arith.constant 0 : index
    %c0_144 = arith.constant 0 : index
    %c0_145 = arith.constant 0 : index
    %184 = vector.load %arg6[%c2_142, %c0_143, %c0_144, %c0_145] : memref<4x4x32x128xbf16, #tpu.memory_space<vmem>>, vector<1x1x32x128xbf16>
    %185 = vector.shape_cast %184 : vector<1x1x32x128xbf16> to vector<32x128xbf16>
    %cst_146 = arith.constant dense<0.000000e+00> : vector<16x128xf32>
    %186 = tpu.matmul %183, %185, %cst_146 {dimension_numbers = #tpu.dot_dimension_numbers<[1], [0], [0], [1], [0, 0, 1, 1], [], []>} : vector<16x32xbf16>, vector<32x128xbf16>, vector<16x128xf32> -> vector<16x128xf32>
    %187 = arith.addf %181, %186 : vector<16x128xf32>
    %188 = vector.extract_strided_slice %132 {offsets = [2, 1, 0, 0], sizes = [1, 1, 16, 32], strides = [1, 1, 1, 1]} : vector<4x4x16x32xbf16> to vector<1x1x16x32xbf16>
    %189 = vector.shape_cast %188 : vector<1x1x16x32xbf16> to vector<16x32xbf16>
    %c2_147 = arith.constant 2 : index
    %c1_148 = arith.constant 1 : index
    %c0_149 = arith.constant 0 : index
    %c0_150 = arith.constant 0 : index
    %190 = vector.load %arg6[%c2_147, %c1_148, %c0_149, %c0_150] : memref<4x4x32x128xbf16, #tpu.memory_space<vmem>>, vector<1x1x32x128xbf16>
    %191 = vector.shape_cast %190 : vector<1x1x32x128xbf16> to vector<32x128xbf16>
    %cst_151 = arith.constant dense<0.000000e+00> : vector<16x128xf32>
    %192 = tpu.matmul %189, %191, %cst_151 {dimension_numbers = #tpu.dot_dimension_numbers<[1], [0], [0], [1], [0, 0, 1, 1], [], []>} : vector<16x32xbf16>, vector<32x128xbf16>, vector<16x128xf32> -> vector<16x128xf32>
    %193 = arith.addf %187, %192 : vector<16x128xf32>
    %194 = vector.extract_strided_slice %132 {offsets = [2, 2, 0, 0], sizes = [1, 1, 16, 32], strides = [1, 1, 1, 1]} : vector<4x4x16x32xbf16> to vector<1x1x16x32xbf16>
    %195 = vector.shape_cast %194 : vector<1x1x16x32xbf16> to vector<16x32xbf16>
    %c2_152 = arith.constant 2 : index
    %c2_153 = arith.constant 2 : index
    %c0_154 = arith.constant 0 : index
    %c0_155 = arith.constant 0 : index
    %196 = vector.load %arg6[%c2_152, %c2_153, %c0_154, %c0_155] : memref<4x4x32x128xbf16, #tpu.memory_space<vmem>>, vector<1x1x32x128xbf16>
    %197 = vector.shape_cast %196 : vector<1x1x32x128xbf16> to vector<32x128xbf16>
    %cst_156 = arith.constant dense<0.000000e+00> : vector<16x128xf32>
    %198 = tpu.matmul %195, %197, %cst_156 {dimension_numbers = #tpu.dot_dimension_numbers<[1], [0], [0], [1], [0, 0, 1, 1], [], []>} : vector<16x32xbf16>, vector<32x128xbf16>, vector<16x128xf32> -> vector<16x128xf32>
    %199 = arith.addf %193, %198 : vector<16x128xf32>
    %200 = vector.extract_strided_slice %132 {offsets = [2, 3, 0, 0], sizes = [1, 1, 16, 32], strides = [1, 1, 1, 1]} : vector<4x4x16x32xbf16> to vector<1x1x16x32xbf16>
    %201 = vector.shape_cast %200 : vector<1x1x16x32xbf16> to vector<16x32xbf16>
    %c2_157 = arith.constant 2 : index
    %c3_158 = arith.constant 3 : index
    %c0_159 = arith.constant 0 : index
    %c0_160 = arith.constant 0 : index
    %202 = vector.load %arg6[%c2_157, %c3_158, %c0_159, %c0_160] : memref<4x4x32x128xbf16, #tpu.memory_space<vmem>>, vector<1x1x32x128xbf16>
    %203 = vector.shape_cast %202 : vector<1x1x32x128xbf16> to vector<32x128xbf16>
    %cst_161 = arith.constant dense<0.000000e+00> : vector<16x128xf32>
    %204 = tpu.matmul %201, %203, %cst_161 {dimension_numbers = #tpu.dot_dimension_numbers<[1], [0], [0], [1], [0, 0, 1, 1], [], []>} : vector<16x32xbf16>, vector<32x128xbf16>, vector<16x128xf32> -> vector<16x128xf32>
    %205 = arith.addf %199, %204 : vector<16x128xf32>
    %206 = vector.extract_strided_slice %132 {offsets = [3, 0, 0, 0], sizes = [1, 1, 16, 32], strides = [1, 1, 1, 1]} : vector<4x4x16x32xbf16> to vector<1x1x16x32xbf16>
    %207 = vector.shape_cast %206 : vector<1x1x16x32xbf16> to vector<16x32xbf16>
    %c3_162 = arith.constant 3 : index
    %c0_163 = arith.constant 0 : index
    %c0_164 = arith.constant 0 : index
    %c0_165 = arith.constant 0 : index
    %208 = vector.load %arg6[%c3_162, %c0_163, %c0_164, %c0_165] : memref<4x4x32x128xbf16, #tpu.memory_space<vmem>>, vector<1x1x32x128xbf16>
    %209 = vector.shape_cast %208 : vector<1x1x32x128xbf16> to vector<32x128xbf16>
    %cst_166 = arith.constant dense<0.000000e+00> : vector<16x128xf32>
    %210 = tpu.matmul %207, %209, %cst_166 {dimension_numbers = #tpu.dot_dimension_numbers<[1], [0], [0], [1], [0, 0, 1, 1], [], []>} : vector<16x32xbf16>, vector<32x128xbf16>, vector<16x128xf32> -> vector<16x128xf32>
    %211 = arith.addf %205, %210 : vector<16x128xf32>
    %212 = vector.extract_strided_slice %132 {offsets = [3, 1, 0, 0], sizes = [1, 1, 16, 32], strides = [1, 1, 1, 1]} : vector<4x4x16x32xbf16> to vector<1x1x16x32xbf16>
    %213 = vector.shape_cast %212 : vector<1x1x16x32xbf16> to vector<16x32xbf16>
    %c3_167 = arith.constant 3 : index
    %c1_168 = arith.constant 1 : index
    %c0_169 = arith.constant 0 : index
    %c0_170 = arith.constant 0 : index
    %214 = vector.load %arg6[%c3_167, %c1_168, %c0_169, %c0_170] : memref<4x4x32x128xbf16, #tpu.memory_space<vmem>>, vector<1x1x32x128xbf16>
    %215 = vector.shape_cast %214 : vector<1x1x32x128xbf16> to vector<32x128xbf16>
    %cst_171 = arith.constant dense<0.000000e+00> : vector<16x128xf32>
    %216 = tpu.matmul %213, %215, %cst_171 {dimension_numbers = #tpu.dot_dimension_numbers<[1], [0], [0], [1], [0, 0, 1, 1], [], []>} : vector<16x32xbf16>, vector<32x128xbf16>, vector<16x128xf32> -> vector<16x128xf32>
    %217 = arith.addf %211, %216 : vector<16x128xf32>
    %218 = vector.extract_strided_slice %132 {offsets = [3, 2, 0, 0], sizes = [1, 1, 16, 32], strides = [1, 1, 1, 1]} : vector<4x4x16x32xbf16> to vector<1x1x16x32xbf16>
    %219 = vector.shape_cast %218 : vector<1x1x16x32xbf16> to vector<16x32xbf16>
    %c3_172 = arith.constant 3 : index
    %c2_173 = arith.constant 2 : index
    %c0_174 = arith.constant 0 : index
    %c0_175 = arith.constant 0 : index
    %220 = vector.load %arg6[%c3_172, %c2_173, %c0_174, %c0_175] : memref<4x4x32x128xbf16, #tpu.memory_space<vmem>>, vector<1x1x32x128xbf16>
    %221 = vector.shape_cast %220 : vector<1x1x32x128xbf16> to vector<32x128xbf16>
    %cst_176 = arith.constant dense<0.000000e+00> : vector<16x128xf32>
    %222 = tpu.matmul %219, %221, %cst_176 {dimension_numbers = #tpu.dot_dimension_numbers<[1], [0], [0], [1], [0, 0, 1, 1], [], []>} : vector<16x32xbf16>, vector<32x128xbf16>, vector<16x128xf32> -> vector<16x128xf32>
    %223 = arith.addf %217, %222 : vector<16x128xf32>
    %224 = vector.extract_strided_slice %132 {offsets = [3, 3, 0, 0], sizes = [1, 1, 16, 32], strides = [1, 1, 1, 1]} : vector<4x4x16x32xbf16> to vector<1x1x16x32xbf16>
    %225 = vector.shape_cast %224 : vector<1x1x16x32xbf16> to vector<16x32xbf16>
    %c3_177 = arith.constant 3 : index
    %c3_178 = arith.constant 3 : index
    %c0_179 = arith.constant 0 : index
    %c0_180 = arith.constant 0 : index
    %226 = vector.load %arg6[%c3_177, %c3_178, %c0_179, %c0_180] : memref<4x4x32x128xbf16, #tpu.memory_space<vmem>>, vector<1x1x32x128xbf16>
    %227 = vector.shape_cast %226 : vector<1x1x32x128xbf16> to vector<32x128xbf16>
    %cst_181 = arith.constant dense<0.000000e+00> : vector<16x128xf32>
    %228 = tpu.matmul %225, %227, %cst_181 {dimension_numbers = #tpu.dot_dimension_numbers<[1], [0], [0], [1], [0, 0, 1, 1], [], []>} : vector<16x32xbf16>, vector<32x128xbf16>, vector<16x128xf32> -> vector<16x128xf32>
    %229 = arith.addf %223, %228 : vector<16x128xf32>
    %c0_182 = arith.constant 0 : index
    %c0_183 = arith.constant 0 : index
    %230 = vector.load %arg7[%c0_182, %c0_183] : memref<1x128xf32, #tpu.memory_space<vmem>>, vector<1x128xf32>
    %231 = vector.broadcast %230 : vector<1x128xf32> to vector<16x128xf32>
    %232 = arith.addf %229, %231 : vector<16x128xf32>
    %cst_184 = arith.constant 0.000000e+00 : f32
    %233 = vector.broadcast %cst_184 : f32 to vector<16x128xf32>
    %234 = arith.maximumf %232, %233 : vector<16x128xf32>
    %c0_185 = arith.constant 0 : index
    %c0_186 = arith.constant 0 : index
    %235 = vector.load %arg8[%c0_185, %c0_186] : memref<16x128xf32, #tpu.memory_space<vmem>>, vector<16x128xf32>
    tpu.vector_store %arg8[%c0_185, %c0_186], %234 {strides = array<i32>} : memref<16x128xf32, #tpu.memory_space<vmem>>, vector<16x128xf32>,
    return
  }
  func.func @transform_0(%arg0: i32) -> (i32, i32, i32, i32) {
    %c0_i32 = arith.constant 0 : i32
    %c0_i32_0 = arith.constant 0 : i32
    %c0_i32_1 = arith.constant 0 : i32
    %c0_i32_2 = arith.constant 0 : i32
    return %c0_i32, %c0_i32_0, %arg0, %c0_i32_1 : i32, i32, i32, i32
  }
  func.func @transform_1(%arg0: i32) -> (i32, i32, i32, i32) {
    %c0_i32 = arith.constant 0 : i32
    %c0_i32_0 = arith.constant 0 : i32
    %c0_i32_1 = arith.constant 0 : i32
    %c0_i32_2 = arith.constant 0 : i32
    %c0_i32_3 = arith.constant 0 : i32
    return %c0_i32, %c0_i32_0, %c0_i32_1, %c0_i32_2 : i32, i32, i32, i32
  }
  func.func @transform_2(%arg0: i32) -> (i32, i32) {
    %c0_i32 = arith.constant 0 : i32
    %c0_i32_0 = arith.constant 0 : i32
    %c0_i32_1 = arith.constant 0 : i32
    return %c0_i32, %c0_i32_0 : i32, i32
  }
  func.func @transform_3(%arg0: i32) -> (i32, i32, i32, i32) {
    %c0_i32 = arith.constant 0 : i32
    %c0_i32_0 = arith.constant 0 : i32
    %c0_i32_1 = arith.constant 0 : i32
    %c0_i32_2 = arith.constant 0 : i32
    %c0_i32_3 = arith.constant 0 : i32
    return %c0_i32, %c0_i32_0, %c0_i32_1, %c0_i32_2 : i32, i32, i32, i32
  }
  func.func @transform_4(%arg0: i32) -> (i32, i32) {
    %c0_i32 = arith.constant 0 : i32
    %c0_i32_0 = arith.constant 0 : i32
    %c0_i32_1 = arith.constant 0 : i32
    return %c0_i32, %c0_i32_0 : i32, i32
  }
  func.func @transform_5(%arg0: i32) -> (i32, i32, i32, i32) {
    %c0_i32 = arith.constant 0 : i32
    %c0_i32_0 = arith.constant 0 : i32
    %c0_i32_1 = arith.constant 0 : i32
    %c0_i32_2 = arith.constant 0 : i32
    %c0_i32_3 = arith.constant 0 : i32
    return %c0_i32, %c0_i32_0, %c0_i32_1, %c0_i32_2 : i32, i32, i32, i32
  }
  func.func @transform_6(%arg0: i32) -> (i32, i32) {
    %c0_i32 = arith.constant 0 : i32
    %c0_i32_0 = arith.constant 0 : i32
    %c0_i32_1 = arith.constant 0 : i32
    return %c0_i32, %c0_i32_0 : i32, i32
  }
  func.func @transform_7(%arg0: i32) -> (i32, i32) {
    %c0_i32 = arith.constant 0 : i32
    %c0_i32_0 = arith.constant 0 : i32
    return %arg0, %c0_i32 : i32, i32
  }
}

</mosaic_0001>

<llo_original>
// kernel: tpu_custom_call.1
$region0: #{tpu_custom_call.1}
  #allocation0 [shape = 'u32[]', space=smem, size = 0x4, offset = 0x4, fixed_abs, tag = 'smem constant byte address 0x4 - core index']
  #allocation1 [shape = 'u32[144,128]{1,0:T(1,128)}', space=vmem, size = 0x12000, scoped, tag = 'internal scratch']
  %s0 = inlined_call_operand.vmem [shape: bf16[4,4,32,16], index: 0, kind: input, shape index: {}]
  %s1 = inlined_call_operand.hbm [shape: bf16[3,3,16,32], index: 1, kind: input, shape index: {}]
  %s2 = inlined_call_operand.vmem [shape: f32[1,32], index: 2, kind: input, shape index: {}]
  %s3 = inlined_call_operand.vmem [shape: bf16[3,3,32,32], index: 3, kind: input, shape index: {}]
  %s4 = inlined_call_operand.vmem [shape: f32[1,32], index: 4, kind: input, shape index: {}]
  %s5 = inlined_call_operand.vmem [shape: bf16[4,4,32,128], index: 5, kind: input, shape index: {}]
  %s6 = inlined_call_operand.vmem [shape: f32[1,128], index: 6, kind: input, shape index: {}]
  %s7 = inlined_call_operand.hbm [shape: f32[32,128], index: 7, kind: output, shape index: {}]
  %s8 = sld [smem:[#allocation0]]
  $region106: #{tpu_custom_call.1} parent=0
    _
  %s10 = ssub.s32 1, %s8
  %s11 = scalar_select 0, %s10, %s8
  $region1: #{tpu_custom_call.1} parent=0
    #allocation2 [shape = 'u8[131072]{0}', space=vmem, size = 0x20000, scoped, tag = 'input window, operand 0']
    #allocation3 [shape = 'u8[36864]{0}', space=vmem, size = 0x9000, scoped, tag = 'input window, operand 1, single buffered']
    #allocation4 [shape = 's32[2]{0}', space=sflag, size = 0x8, scoped, tag = 'scoped memory for tpu_custom_call.1']
    #allocation5 [shape = 's32[2]{0}', space=sflag, size = 0x8, scoped, tag = 'scoped memory for tpu_custom_call.1']
    #allocation6 [shape = 'u8[16384]{0}', space=vmem, size = 0x4000, scoped, tag = 'output window, operand 0']
    %12 = vsyncpa [#allocation4], 0
    %13 = vsyncpa [#allocation5], 0
    %s14 = scalar_lea.sflag [#allocation5], 1
    %15 = vsyncpa %s14, 0
    loop: start=0, step=1, limit=4
    $region2: #{tpu_custom_call.1} parent=1 // loop_pre_header
      _
    $region3: #{tpu_custom_call.1} parent=1 // loop_header
      %s17 = sphi 0, %s21
      %p18 = scmp.ge.s32.totalorder %s17, 4
      %s27 = sphi 0, %s29
      %s30 = sphi 0, %s27
      %s31 = sphi 0, %s30
      %s47 = sphi 0, %s31
      %s51 = sphi 0, %s51
      %s53 = sphi 0, %s51
      %s54 = sphi 0, %s53
      %s68 = sphi 0, %s54
      %s72 = sphi 0, %s72
      %s74 = sphi 0, %s72
      %s75 = sphi 0, %s74
      %s89 = sphi 0, %s75
      %s93 = sphi 0, %s93
      %s95 = sphi 0, %s93
      %s96 = sphi 0, %s95
      %s110 = sphi 0, %s96
      %s114 = sphi 0, %s114
      %s116 = sphi 0, %s114
      %s117 = sphi 0, %s116
      %s131 = sphi 0, %s117
      %s135 = sphi 0, %s135
      %s137 = sphi 0, %s135
      %s138 = sphi 0, %s137
      %s152 = sphi 0, %s138
      %s156 = sphi 0, %s156
      %s158 = sphi 0, %s156
      %s159 = sphi 0, %s158
      %s173 = sphi 0, %s159
      %s179 = sphi 0, %s181
      %s182 = sphi 0, %s179
      %s183 = sphi 0, %s182
      %s199 = sphi 0, %s183
    $region4: #{tpu_custom_call.1} parent=1 // loop_header_branch
      %20 = sbr.rel (%p18) target = $region8
    $region5: #{tpu_custom_call.1} parent=1 // loop_body
      %s22 = ssub.s32 %s17, 1
      %s23 = ssub.s32 %s17, 2
      %s24 = sadd.s32 %s17, 1
      %s25 = ssub.s32 %s17, %s24
      %p26 = scmp.eq.s32.totalorder %s25, 0
      %s28 = sadd.s32 %s27, 1
      %s29 = scalar_select %p26, %s27, %s28
      %p32 = pneg %p26
      %p33 = scmp.eq.s32.totalorder %s17, 1
      %p34 = por %p32, %p33
      %p35 = scmp.ne.s32.totalorder %s27, %s30
      %p36 = scmp.eq.s32.totalorder %s17, 0
      %p37 = por %p35, %p36
      %p38 = scmp.ne.s32.totalorder %s27, %s30
      %p39 = scmp.eq.s32.totalorder %s22, 1
      %p40 = por %p38, %p39
      %p41 = scmp.ne.s32.totalorder %s30, %s31
      %p42 = scmp.eq.s32.totalorder %s22, 0
      %p43 = por %p41, %p42
      %p44 = scmp.ne.s32.totalorder %s30, %s31
      %p45 = scmp.eq.s32.totalorder %s23, 1
      %p46 = por %p44, %p45
      %p48 = scmp.ne.s32.totalorder %s31, %s47
      %p49 = scmp.eq.s32.totalorder %s23, 0
      %p50 = por %p48, %p49
      %s52 = sadd.s32 %s51, 1
      %p55 = scmp.eq.s32.totalorder %s17, 1
      %p56 = scmp.ne.s32.totalorder %s51, %s53
      %p57 = scmp.eq.s32.totalorder %s17, 0
      %p58 = por %p56, %p57
      %p59 = scmp.ne.s32.totalorder %s51, %s53
      %p60 = scmp.eq.s32.totalorder %s22, 1
      %p61 = por %p59, %p60
      %p62 = scmp.ne.s32.totalorder %s53, %s54
      %p63 = scmp.eq.s32.totalorder %s22, 0
      %p64 = por %p62, %p63
      %p65 = scmp.ne.s32.totalorder %s53, %s54
      %p66 = scmp.eq.s32.totalorder %s23, 1
      %p67 = por %p65, %p66
      %p69 = scmp.ne.s32.totalorder %s54, %s68
      %p70 = scmp.eq.s32.totalorder %s23, 0
      %p71 = por %p69, %p70
      %s73 = sadd.s32 %s72, 1
      %p76 = scmp.eq.s32.totalorder %s17, 1
      %p77 = scmp.ne.s32.totalorder %s72, %s74
      %p78 = scmp.eq.s32.totalorder %s17, 0
      %p79 = por %p77, %p78
      %p80 = scmp.ne.s32.totalorder %s72, %s74
      %p81 = scmp.eq.s32.totalorder %s22, 1
      %p82 = por %p80, %p81
      %p83 = scmp.ne.s32.totalorder %s74, %s75
      %p84 = scmp.eq.s32.totalorder %s22, 0
      %p85 = por %p83, %p84
      %p86 = scmp.ne.s32.totalorder %s74, %s75
      %p87 = scmp.eq.s32.totalorder %s23, 1
      %p88 = por %p86, %p87
      %p90 = scmp.ne.s32.totalorder %s75, %s89
      %p91 = scmp.eq.s32.totalorder %s23, 0
      %p92 = por %p90, %p91
      %s94 = sadd.s32 %s93, 1
      %p97 = scmp.eq.s32.totalorder %s17, 1
      %p98 = scmp.ne.s32.totalorder %s93, %s95
      %p99 = scmp.eq.s32.totalorder %s17, 0
      %p100 = por %p98, %p99
      %p101 = scmp.ne.s32.totalorder %s93, %s95
      %p102 = scmp.eq.s32.totalorder %s22, 1
      %p103 = por %p101, %p102
      %p104 = scmp.ne.s32.totalorder %s95, %s96
      %p105 = scmp.eq.s32.totalorder %s22, 0
      %p106 = por %p104, %p105
      %p107 = scmp.ne.s32.totalorder %s95, %s96
      %p108 = scmp.eq.s32.totalorder %s23, 1
      %p109 = por %p107, %p108
      %p111 = scmp.ne.s32.totalorder %s96, %s110
      %p112 = scmp.eq.s32.totalorder %s23, 0
      %p113 = por %p111, %p112
      %s115 = sadd.s32 %s114, 1
      %p118 = scmp.eq.s32.totalorder %s17, 1
      %p119 = scmp.ne.s32.totalorder %s114, %s116
      %p120 = scmp.eq.s32.totalorder %s17, 0
      %p121 = por %p119, %p120
      %p122 = scmp.ne.s32.totalorder %s114, %s116
      %p123 = scmp.eq.s32.totalorder %s22, 1
      %p124 = por %p122, %p123
      %p125 = scmp.ne.s32.totalorder %s116, %s117
      %p126 = scmp.eq.s32.totalorder %s22, 0
      %p127 = por %p125, %p126
      %p128 = scmp.ne.s32.totalorder %s116, %s117
      %p129 = scmp.eq.s32.totalorder %s23, 1
      %p130 = por %p128, %p129
      %p132 = scmp.ne.s32.totalorder %s117, %s131
      %p133 = scmp.eq.s32.totalorder %s23, 0
      %p134 = por %p132, %p133
      %s136 = sadd.s32 %s135, 1
      %p139 = scmp.eq.s32.totalorder %s17, 1
      %p140 = scmp.ne.s32.totalorder %s135, %s137
      %p141 = scmp.eq.s32.totalorder %s17, 0
      %p142 = por %p140, %p141
      %p143 = scmp.ne.s32.totalorder %s135, %s137
      %p144 = scmp.eq.s32.totalorder %s22, 1
      %p145 = por %p143, %p144
      %p146 = scmp.ne.s32.totalorder %s137, %s138
      %p147 = scmp.eq.s32.totalorder %s22, 0
      %p148 = por %p146, %p147
      %p149 = scmp.ne.s32.totalorder %s137, %s138
      %p150 = scmp.eq.s32.totalorder %s23, 1
      %p151 = por %p149, %p150
      %p153 = scmp.ne.s32.totalorder %s138, %s152
      %p154 = scmp.eq.s32.totalorder %s23, 0
      %p155 = por %p153, %p154
      %s157 = sadd.s32 %s156, 1
      %p160 = scmp.eq.s32.totalorder %s17, 1
      %p161 = scmp.ne.s32.totalorder %s156, %s158
      %p162 = scmp.eq.s32.totalorder %s17, 0
      %p163 = por %p161, %p162
      %p164 = scmp.ne.s32.totalorder %s156, %s158
      %p165 = scmp.eq.s32.totalorder %s22, 1
      %p166 = por %p164, %p165
      %p167 = scmp.ne.s32.totalorder %s158, %s159
      %p168 = scmp.eq.s32.totalorder %s22, 0
      %p169 = por %p167, %p168
      %p170 = scmp.ne.s32.totalorder %s158, %s159
      %p171 = scmp.eq.s32.totalorder %s23, 1
      %p172 = por %p170, %p171
      %p174 = scmp.ne.s32.totalorder %s159, %s173
      %p175 = scmp.eq.s32.totalorder %s23, 0
      %p176 = por %p174, %p175
      %s177 = ssub.s32 %s17, %s24
      %p178 = scmp.eq.s32.totalorder %s177, 0
      %s180 = sadd.s32 %s179, 1
      %s181 = scalar_select %p178, %s179, %s180
      %p184 = pneg %p178
      %p185 = scmp.eq.s32.totalorder %s17, 1
      %p186 = por %p184, %p185
      %p187 = scmp.ne.s32.totalorder %s179, %s182
      %p188 = scmp.eq.s32.totalorder %s17, 0
      %p189 = por %p187, %p188
      %p190 = scmp.ne.s32.totalorder %s179, %s182
      %p191 = scmp.eq.s32.totalorder %s22, 1
      %p192 = por %p190, %p191
      %p193 = scmp.ne.s32.totalorder %s182, %s183
      %p194 = scmp.eq.s32.totalorder %s22, 0
      %p195 = por %p193, %p194
      %p196 = scmp.ne.s32.totalorder %s182, %s183
      %p197 = scmp.eq.s32.totalorder %s23, 1
      %p198 = por %p196, %p197
      %p200 = scmp.ne.s32.totalorder %s183, %s199
      %p201 = scmp.eq.s32.totalorder %s23, 0
      %p202 = por %p200, %p201
      %p203 = scmp.le.s32.totalorder 1, %s17
      %p204 = scmp.lt.s32.totalorder %s17, 3
      %p205 = pnand %p203, %p204
      %p206 = pneg %p205
      // Predicated region
      $region9: #{tpu_custom_call.1} parent=5 // pred_check
        _
      $region10: #{tpu_custom_call.1} parent=5 // pred_check_branch
        %208 = sbr.rel (%p205) target = $region12
      $region11: #{tpu_custom_call.1} parent=5 // pred_region
        %s209 = ssub.s32 %s17, 1
        // Predicated region
        $region13: #{tpu_custom_call.1} parent=11 // pred_check
          %p210 = pneg %p64
        $region14: #{tpu_custom_call.1} parent=11 // pred_check_branch
          %212 = sbr.rel (%p210) target = $region16
        $region15: #{tpu_custom_call.1} parent=11 // pred_region
          %s214 = ssub.s32 1152, 1152
          %215 = vsyncadd [#allocation4], %s214
          %s216 = sshll.u32 [#allocation3], 4
          %s217 = int_to_ptr.vmem [resolvable:$true] %s216
          %222 = dma.hbm_to_vmem [thread:$0]  %s1, 1152, %s217, [#allocation4], 64, 64, 4
        $region16: #{tpu_custom_call.1} parent=11 // pred_fallthru
          _
        // Predicated region
        $region17: #{tpu_custom_call.1} parent=11 // pred_check
          %p223 = pneg %p85
        $region18: #{tpu_custom_call.1} parent=11 // pred_check_branch
          %225 = sbr.rel (%p223) target = $region20
        $region19: #{tpu_custom_call.1} parent=11 // pred_region
          _
        $region20: #{tpu_custom_call.1} parent=11 // pred_fallthru
          _
        // Predicated region
        $region21: #{tpu_custom_call.1} parent=11 // pred_check
          %p226 = pneg %p106
        $region22: #{tpu_custom_call.1} parent=11 // pred_check_branch
          %228 = sbr.rel (%p226) target = $region24
        $region23: #{tpu_custom_call.1} parent=11 // pred_region
          _
        $region24: #{tpu_custom_call.1} parent=11 // pred_fallthru
          _
        // Predicated region
        $region25: #{tpu_custom_call.1} parent=11 // pred_check
          %p229 = pneg %p127
        $region26: #{tpu_custom_call.1} parent=11 // pred_check_branch
          %231 = sbr.rel (%p229) target = $region28
        $region27: #{tpu_custom_call.1} parent=11 // pred_region
          _
        $region28: #{tpu_custom_call.1} parent=11 // pred_fallthru
          _
        // Predicated region
        $region29: #{tpu_custom_call.1} parent=11 // pred_check
          %p232 = pneg %p148
        $region30: #{tpu_custom_call.1} parent=11 // pred_check_branch
          %234 = sbr.rel (%p232) target = $region32
        $region31: #{tpu_custom_call.1} parent=11 // pred_region
          _
        $region32: #{tpu_custom_call.1} parent=11 // pred_fallthru
          _
        // Predicated region
        $region33: #{tpu_custom_call.1} parent=11 // pred_check
          %p235 = pneg %p169
        $region34: #{tpu_custom_call.1} parent=11 // pred_check_branch
          %237 = sbr.rel (%p235) target = $region36
        $region35: #{tpu_custom_call.1} parent=11 // pred_region
          _
        $region36: #{tpu_custom_call.1} parent=11 // pred_fallthru
          _
      $region12: #{tpu_custom_call.1} parent=5 // pred_fallthru
        _
      %p238 = scmp.lt.s32.totalorder %s17, 2
      // Predicated region
      $region37: #{tpu_custom_call.1} parent=5 // pred_check
        %p239 = pneg %p238
      $region38: #{tpu_custom_call.1} parent=5 // pred_check_branch
        %241 = sbr.rel (%p239) target = $region40
      $region39: #{tpu_custom_call.1} parent=5 // pred_region
        // Predicated region
        $region41: #{tpu_custom_call.1} parent=39 // pred_check
          %p242 = pneg %p37
        $region42: #{tpu_custom_call.1} parent=39 // pred_check_branch
          %244 = sbr.rel (%p242) target = $region44
        $region43: #{tpu_custom_call.1} parent=39 // pred_region
          %s245 = sand.u32 %s27, 1
          %s246 = sand.u32 %s27, 1
          %s247 = smul.addr %s246, 128
          %s248 = scalar_lea.vmem [#allocation2], %s247
          %s249 = smul.u32 2, %s17
          %s250 = smul.addr %s249, 4
          %s251 = scalar_lea.vmem %s0, %s250
          // Predicated region
          $region45: #{tpu_custom_call.1} parent=43 // pred_check
            _
          $region46: #{tpu_custom_call.1} parent=43 // pred_check_branch
            %253 = sbr.rel (0) target = $region48
          $region47: #{tpu_custom_call.1} parent=43 // pred_region
            // Predicated region
            $region49: #{tpu_custom_call.1} parent=47 // pred_check
              _
            $region50: #{tpu_custom_call.1} parent=47 // pred_check_branch
              %255 = sbr.rel target = $region52
            $region51: #{tpu_custom_call.1} parent=47 // pred_region
              // Predicated region
              $region64: #{tpu_custom_call.1} parent=51 // pred_check
                _
              $region65: #{tpu_custom_call.1} parent=51 // pred_check_branch
                %332 = sbr.rel (0) target = $region67
              $region66: #{tpu_custom_call.1} parent=51 // pred_region
                loop: start=0, step=1, limit=1
                $region68: #{tpu_custom_call.1} parent=66 // loop_pre_header
                  _
                $region69: #{tpu_custom_call.1} parent=66 // loop_header
                  %s334 = sphi 0, %s338
                  %p335 = scmp.ge.s32.totalorder %s334, 1
                  %s339 = sphi %s251, %s251
                  %s340 = sphi %s248, %s248
                $region70: #{tpu_custom_call.1} parent=66 // loop_header_branch
                  %337 = sbr.rel (%p335) target = $region74
                $region71: #{tpu_custom_call.1} parent=66 // loop_body
                  _
                $region72: #{tpu_custom_call.1} parent=66 // loop_footer
                  %s338 = sadd.s32 1, %s334
                $region73: #{tpu_custom_call.1} parent=66 // loop_footer_branch
                  %333 = sbr.rel target = $region69
                $region74: #{tpu_custom_call.1} parent=66 // loop_exit
                  _
                loop: start=0, step=1, limit=1
                $region75: #{tpu_custom_call.1} parent=66 // loop_pre_header
                  _
                $region76: #{tpu_custom_call.1} parent=66 // loop_header
                  %s343 = sphi 0, %s347
                  %p344 = scmp.ge.s32.totalorder %s343, 1
                  %s348 = sphi %s251, %s251
                  %s349 = sphi %s248, %s248
                $region77: #{tpu_custom_call.1} parent=66 // loop_header_branch
                  %346 = sbr.rel (%p344) target = $region81
                $region78: #{tpu_custom_call.1} parent=66 // loop_body
                  %v350 = vld [vmem:[%s348] sm:$0xf]
                  %351 = vst [vmem:[%s349] sm:$0xf] %v350
                  %v352 = vld [vmem:[%s348 + $0x4] sm:$0xf]
                  %353 = vst [vmem:[%s349 + $0x4] sm:$0xf] %v352
                  %v354 = vld [vmem:[%s348 + $0x10] sm:$0xf]
                  %355 = vst [vmem:[%s349 + $0x8] sm:$0xf] %v354
                  %v356 = vld [vmem:[%s348 + $0x14] sm:$0xf]
                  %357 = vst [vmem:[%s349 + $0xc] sm:$0xf] %v356
                  %v358 = vld [vmem:[%s348 + $0x20] sm:$0xf]
                  %359 = vst [vmem:[%s349 + $0x10] sm:$0xf] %v358
                  %v360 = vld [vmem:[%s348 + $0x24] sm:$0xf]
                  %361 = vst [vmem:[%s349 + $0x14] sm:$0xf] %v360
                  %v362 = vld [vmem:[%s348 + $0x30] sm:$0xf]
                  %363 = vst [vmem:[%s349 + $0x18] sm:$0xf] %v362
                  %v364 = vld [vmem:[%s348 + $0x34] sm:$0xf]
                  %365 = vst [vmem:[%s349 + $0x1c] sm:$0xf] %v364
                  %v366 = vld [vmem:[%s348 + $0x40] sm:$0xf]
                  %367 = vst [vmem:[%s349 + $0x20] sm:$0xf] %v366
                  %v368 = vld [vmem:[%s348 + $0x44] sm:$0xf]
                  %369 = vst [vmem:[%s349 + $0x24] sm:$0xf] %v368
                  %v370 = vld [vmem:[%s348 + $0x50] sm:$0xf]
                  %371 = vst [vmem:[%s349 + $0x28] sm:$0xf] %v370
                  %v372 = vld [vmem:[%s348 + $0x54] sm:$0xf]
                  %373 = vst [vmem:[%s349 + $0x2c] sm:$0xf] %v372
                  %v374 = vld [vmem:[%s348 + $0x60] sm:$0xf]
                  %375 = vst [vmem:[%s349 + $0x30] sm:$0xf] %v374
                  %v376 = vld [vmem:[%s348 + $0x64] sm:$0xf]
                  %377 = vst [vmem:[%s349 + $0x34] sm:$0xf] %v376
                  %v378 = vld [vmem:[%s348 + $0x70] sm:$0xf]
                  %379 = vst [vmem:[%s349 + $0x38] sm:$0xf] %v378
                  %v380 = vld [vmem:[%s348 + $0x74] sm:$0xf]
                  %381 = vst [vmem:[%s349 + $0x3c] sm:$0xf] %v380
                  %v382 = vld [vmem:[%s348 + $0x80] sm:$0xf]
                  %383 = vst [vmem:[%s349 + $0x40] sm:$0xf] %v382
                  %v384 = vld [vmem:[%s348 + $0x84] sm:$0xf]
                  %385 = vst [vmem:[%s349 + $0x44] sm:$0xf] %v384
                  %v386 = vld [vmem:[%s348 + $0x90] sm:$0xf]
                  %387 = vst [vmem:[%s349 + $0x48] sm:$0xf] %v386
                  %v388 = vld [vmem:[%s348 + $0x94] sm:$0xf]
                  %389 = vst [vmem:[%s349 + $0x4c] sm:$0xf] %v388
                  %v390 = vld [vmem:[%s348 + $0xa0] sm:$0xf]
                  %391 = vst [vmem:[%s349 + $0x50] sm:$0xf] %v390
                  %v392 = vld [vmem:[%s348 + $0xa4] sm:$0xf]
                  %393 = vst [vmem:[%s349 + $0x54] sm:$0xf] %v392
                  %v394 = vld [vmem:[%s348 + $0xb0] sm:$0xf]
                  %395 = vst [vmem:[%s349 + $0x58] sm:$0xf] %v394
                  %v396 = vld [vmem:[%s348 + $0xb4] sm:$0xf]
                  %397 = vst [vmem:[%s349 + $0x5c] sm:$0xf] %v396
                  %v398 = vld [vmem:[%s348 + $0xc0] sm:$0xf]
                  %399 = vst [vmem:[%s349 + $0x60] sm:$0xf] %v398
                  %v400 = vld [vmem:[%s348 + $0xc4] sm:$0xf]
                  %401 = vst [vmem:[%s349 + $0x64] sm:$0xf] %v400
                  %v402 = vld [vmem:[%s348 + $0xd0] sm:$0xf]
                  %403 = vst [vmem:[%s349 + $0x68] sm:$0xf] %v402
                  %v404 = vld [vmem:[%s348 + $0xd4] sm:$0xf]
                  %405 = vst [vmem:[%s349 + $0x6c] sm:$0xf] %v404
                  %v406 = vld [vmem:[%s348 + $0xe0] sm:$0xf]
                  %407 = vst [vmem:[%s349 + $0x70] sm:$0xf] %v406
                  %v408 = vld [vmem:[%s348 + $0xe4] sm:$0xf]
                  %409 = vst [vmem:[%s349 + $0x74] sm:$0xf] %v408
                  %v410 = vld [vmem:[%s348 + $0xf0] sm:$0xf]
                  %411 = vst [vmem:[%s349 + $0x78] sm:$0xf] %v410
                  %v412 = vld [vmem:[%s348 + $0xf4] sm:$0xf]
                  %413 = vst [vmem:[%s349 + $0x7c] sm:$0xf] %v412
                $region79: #{tpu_custom_call.1} parent=66 // loop_footer
                  %s347 = sadd.s32 1, %s343
                $region80: #{tpu_custom_call.1} parent=66 // loop_footer_branch
                  %342 = sbr.rel target = $region76
                $region81: #{tpu_custom_call.1} parent=66 // loop_exit
                  _
              $region67: #{tpu_custom_call.1} parent=51 // pred_fallthru
                _
            $region52: #{tpu_custom_call.1} parent=47 // pred_fallthru
              _
            // Predicated region
            $region53: #{tpu_custom_call.1} parent=47 // pred_check
              _
            $region54: #{tpu_custom_call.1} parent=47 // pred_check_branch
              %257 = sbr.rel (0) target = $region56
            $region55: #{tpu_custom_call.1} parent=47 // pred_region
              loop: start=0, step=1, limit=1
              $region57: #{tpu_custom_call.1} parent=55 // loop_pre_header
                _
              $region58: #{tpu_custom_call.1} parent=55 // loop_header
                %s260 = sphi 0, %s264
                %p261 = scmp.ge.s32.totalorder %s260, 1
                %s265 = sphi %s251, %s251
                %s266 = sphi %s248, %s248
              $region59: #{tpu_custom_call.1} parent=55 // loop_header_branch
                %263 = sbr.rel (%p261) target = $region63
              $region60: #{tpu_custom_call.1} parent=55 // loop_body
                %v267 = vld [vmem:[%s265] sm:$0xf]
                %268 = vst [vmem:[%s266] sm:$0xf] %v267
                %v269 = vld [vmem:[%s265 + $0x4] sm:$0xf]
                %270 = vst [vmem:[%s266 + $0x4] sm:$0xf] %v269
                %v271 = vld [vmem:[%s265 + $0x10] sm:$0xf]
                %272 = vst [vmem:[%s266 + $0x8] sm:$0xf] %v271
                %v273 = vld [vmem:[%s265 + $0x14] sm:$0xf]
                %274 = vst [vmem:[%s266 + $0xc] sm:$0xf] %v273
                %v275 = vld [vmem:[%s265 + $0x20] sm:$0xf]
                %276 = vst [vmem:[%s266 + $0x10] sm:$0xf] %v275
                %v277 = vld [vmem:[%s265 + $0x24] sm:$0xf]
                %278 = vst [vmem:[%s266 + $0x14] sm:$0xf] %v277
                %v279 = vld [vmem:[%s265 + $0x30] sm:$0xf]
                %280 = vst [vmem:[%s266 + $0x18] sm:$0xf] %v279
                %v281 = vld [vmem:[%s265 + $0x34] sm:$0xf]
                %282 = vst [vmem:[%s266 + $0x1c] sm:$0xf] %v281
                %v283 = vld [vmem:[%s265 + $0x40] sm:$0xf]
                %284 = vst [vmem:[%s266 + $0x20] sm:$0xf] %v283
                %v285 = vld [vmem:[%s265 + $0x44] sm:$0xf]
                %286 = vst [vmem:[%s266 + $0x24] sm:$0xf] %v285
                %v287 = vld [vmem:[%s265 + $0x50] sm:$0xf]
                %288 = vst [vmem:[%s266 + $0x28] sm:$0xf] %v287
                %v289 = vld [vmem:[%s265 + $0x54] sm:$0xf]
                %290 = vst [vmem:[%s266 + $0x2c] sm:$0xf] %v289
                %v291 = vld [vmem:[%s265 + $0x60] sm:$0xf]
                %292 = vst [vmem:[%s266 + $0x30] sm:$0xf] %v291
                %v293 = vld [vmem:[%s265 + $0x64] sm:$0xf]
                %294 = vst [vmem:[%s266 + $0x34] sm:$0xf] %v293
                %v295 = vld [vmem:[%s265 + $0x70] sm:$0xf]
                %296 = vst [vmem:[%s266 + $0x38] sm:$0xf] %v295
                %v297 = vld [vmem:[%s265 + $0x74] sm:$0xf]
                %298 = vst [vmem:[%s266 + $0x3c] sm:$0xf] %v297
                %v299 = vld [vmem:[%s265 + $0x80] sm:$0xf]
                %300 = vst [vmem:[%s266 + $0x40] sm:$0xf] %v299
                %v301 = vld [vmem:[%s265 + $0x84] sm:$0xf]
                %302 = vst [vmem:[%s266 + $0x44] sm:$0xf] %v301
                %v303 = vld [vmem:[%s265 + $0x90] sm:$0xf]
                %304 = vst [vmem:[%s266 + $0x48] sm:$0xf] %v303
                %v305 = vld [vmem:[%s265 + $0x94] sm:$0xf]
                %306 = vst [vmem:[%s266 + $0x4c] sm:$0xf] %v305
                %v307 = vld [vmem:[%s265 + $0xa0] sm:$0xf]
                %308 = vst [vmem:[%s266 + $0x50] sm:$0xf] %v307
                %v309 = vld [vmem:[%s265 + $0xa4] sm:$0xf]
                %310 = vst [vmem:[%s266 + $0x54] sm:$0xf] %v309
                %v311 = vld [vmem:[%s265 + $0xb0] sm:$0xf]
                %312 = vst [vmem:[%s266 + $0x58] sm:$0xf] %v311
                %v313 = vld [vmem:[%s265 + $0xb4] sm:$0xf]
                %314 = vst [vmem:[%s266 + $0x5c] sm:$0xf] %v313
                %v315 = vld [vmem:[%s265 + $0xc0] sm:$0xf]
                %316 = vst [vmem:[%s266 + $0x60] sm:$0xf] %v315
                %v317 = vld [vmem:[%s265 + $0xc4] sm:$0xf]
                %318 = vst [vmem:[%s266 + $0x64] sm:$0xf] %v317
                %v319 = vld [vmem:[%s265 + $0xd0] sm:$0xf]
                %320 = vst [vmem:[%s266 + $0x68] sm:$0xf] %v319
                %v321 = vld [vmem:[%s265 + $0xd4] sm:$0xf]
                %322 = vst [vmem:[%s266 + $0x6c] sm:$0xf] %v321
                %v323 = vld [vmem:[%s265 + $0xe0] sm:$0xf]
                %324 = vst [vmem:[%s266 + $0x70] sm:$0xf] %v323
                %v325 = vld [vmem:[%s265 + $0xe4] sm:$0xf]
                %326 = vst [vmem:[%s266 + $0x74] sm:$0xf] %v325
                %v327 = vld [vmem:[%s265 + $0xf0] sm:$0xf]
                %328 = vst [vmem:[%s266 + $0x78] sm:$0xf] %v327
                %v329 = vld [vmem:[%s265 + $0xf4] sm:$0xf]
                %330 = vst [vmem:[%s266 + $0x7c] sm:$0xf] %v329
              $region61: #{tpu_custom_call.1} parent=55 // loop_footer
                %s264 = sadd.s32 1, %s260
              $region62: #{tpu_custom_call.1} parent=55 // loop_footer_branch
                %259 = sbr.rel target = $region58
              $region63: #{tpu_custom_call.1} parent=55 // loop_exit
                _
            $region56: #{tpu_custom_call.1} parent=47 // pred_fallthru
              _
          $region48: #{tpu_custom_call.1} parent=43 // pred_fallthru
            _
          %414 = vnop
        $region44: #{tpu_custom_call.1} parent=39 // pred_fallthru
          _
      $region40: #{tpu_custom_call.1} parent=5 // pred_fallthru
        _
      %p415 = scmp.le.s32.totalorder 1, %s17
      %p416 = scmp.lt.s32.totalorder %s17, 3
      %p417 = pnand %p415, %p416
      %p418 = pneg %p417
      // Predicated region
      $region82: #{tpu_custom_call.1} parent=5 // pred_check
        _
      $region83: #{tpu_custom_call.1} parent=5 // pred_check_branch
        %420 = sbr.rel (%p417) target = $region85
      $region84: #{tpu_custom_call.1} parent=5 // pred_region
        %s421 = ssub.s32 %s17, 1
        %s422 = sand.u32 %s30, 1
        %s423 = sand.u32 %s30, 1
        %s424 = smul.addr %s423, 128
        %s425 = scalar_lea.vmem [#allocation2], %s424
        // Predicated region
        $region86: #{tpu_custom_call.1} parent=84 // pred_check
          %p426 = pneg %p43
        $region87: #{tpu_custom_call.1} parent=84 // pred_check_branch
          %428 = sbr.rel (%p426) target = $region89
        $region88: #{tpu_custom_call.1} parent=84 // pred_region
          _
        $region89: #{tpu_custom_call.1} parent=84 // pred_fallthru
          _
        // Predicated region
        $region90: #{tpu_custom_call.1} parent=84 // pred_check
          %p429 = pneg %p64
        $region91: #{tpu_custom_call.1} parent=84 // pred_check_branch
          %431 = sbr.rel (%p429) target = $region93
        $region92: #{tpu_custom_call.1} parent=84 // pred_region
          %432 = dma.done [#allocation4], 1152
        $region93: #{tpu_custom_call.1} parent=84 // pred_fallthru
          _
        %s433 = sand.u32 %s30, 1
        %s434 = sand.u32 %s30, 1
        %s435 = smul.addr %s434, 128
        %s436 = scalar_lea.vmem [#allocation2], %s435
        %p437 = pneg %p43
        %p438 = pneg %p40
        %p439 = pneg %p64
        %p440 = pneg %p61
        %p441 = pneg %p85
        %p442 = pneg %p82
        %p443 = pneg %p106
        %p444 = pneg %p103
        %p445 = pneg %p127
        %p446 = pneg %p124
        %p447 = pneg %p148
        %p448 = pneg %p145
        %p449 = pneg %p169
        %p450 = pneg %p166
        %p451 = pneg %p195
        %p452 = pneg %p192
        %s453 = sand.u32 %s182, 1
        %s454 = scalar_lea.sflag [#allocation5], %s453
        %s455 = sand.u32 %s182, 1
        %s456 = smul.addr %s455, 16
        %s457 = scalar_lea.vmem [#allocation6], %s456
        %s458 = smul.u32 2, %s22
        %s459 = smul.u32 2, %s22
        %v461 = vld [vmem:[%s425] sm:$0xf]
        %v462 = vld [vmem:[%s425 + $0x4] sm:$0xf]
        %v463 = vld [vmem:[%s425 + $0x8] sm:$0xf]
        %v464 = vld [vmem:[%s425 + $0xc] sm:$0xf]
        %v465 = vld [vmem:[%s425 + $0x10] sm:$0xf]
        %v466 = vld [vmem:[%s425 + $0x14] sm:$0xf]
        %v467 = vld [vmem:[%s425 + $0x18] sm:$0xf]
        %v468 = vld [vmem:[%s425 + $0x1c] sm:$0xf]
        %v469 = vld [vmem:[%s425 + $0x20] sm:$0xf]
        %v470 = vld [vmem:[%s425 + $0x24] sm:$0xf]
        %v471 = vld [vmem:[%s425 + $0x28] sm:$0xf]
        %v472 = vld [vmem:[%s425 + $0x2c] sm:$0xf]
        %v473 = vld [vmem:[%s425 + $0x30] sm:$0xf]
        %v474 = vld [vmem:[%s425 + $0x34] sm:$0xf]
        %v475 = vld [vmem:[%s425 + $0x38] sm:$0xf]
        %v476 = vld [vmem:[%s425 + $0x3c] sm:$0xf]
        %v477 = vld [vmem:[%s425 + $0x40] sm:$0xf]
        %v478 = vld [vmem:[%s425 + $0x44] sm:$0xf]
        %v479 = vld [vmem:[%s425 + $0x48] sm:$0xf]
        %v480 = vld [vmem:[%s425 + $0x4c] sm:$0xf]
        %v481 = vld [vmem:[%s425 + $0x50] sm:$0xf]
        %v482 = vld [vmem:[%s425 + $0x54] sm:$0xf]
        %v483 = vld [vmem:[%s425 + $0x58] sm:$0xf]
        %v484 = vld [vmem:[%s425 + $0x5c] sm:$0xf]
        %v485 = vld [vmem:[%s425 + $0x60] sm:$0xf]
        %v486 = vld [vmem:[%s425 + $0x64] sm:$0xf]
        %v487 = vld [vmem:[%s425 + $0x68] sm:$0xf]
        %v488 = vld [vmem:[%s425 + $0x6c] sm:$0xf]
        %v489 = vld [vmem:[%s425 + $0x70] sm:$0xf]
        %v490 = vld [vmem:[%s425 + $0x74] sm:$0xf]
        %v491 = vld [vmem:[%s425 + $0x78] sm:$0xf]
        %v492 = vld [vmem:[%s425 + $0x7c] sm:$0xf]
        %v525 = vunpack.c.l.b16 %v461
        %v526 = vunpack.c.l.b16 %v462
        %v527 = vunpack.c.l.b16 %v463
        %v528 = vunpack.c.l.b16 %v464
        %v529 = vunpack.c.l.b16 %v465
        %v530 = vunpack.c.l.b16 %v466
        %v531 = vunpack.c.l.b16 %v467
        %v532 = vunpack.c.l.b16 %v468
        %v533 = vunpack.c.l.b16 %v469
        %v534 = vunpack.c.l.b16 %v470
        %v535 = vunpack.c.l.b16 %v471
        %v536 = vunpack.c.l.b16 %v472
        %v537 = vunpack.c.l.b16 %v473
        %v538 = vunpack.c.l.b16 %v474
        %v539 = vunpack.c.l.b16 %v475
        %v540 = vunpack.c.l.b16 %v476
        %v541 = vunpack.c.l.b16 %v477
        %v542 = vunpack.c.l.b16 %v478
        %v543 = vunpack.c.l.b16 %v479
        %v544 = vunpack.c.l.b16 %v480
        %v545 = vunpack.c.l.b16 %v481
        %v546 = vunpack.c.l.b16 %v482
        %v547 = vunpack.c.l.b16 %v483
        %v548 = vunpack.c.l.b16 %v484
        %v549 = vunpack.c.l.b16 %v485
        %v550 = vunpack.c.l.b16 %v486
        %v551 = vunpack.c.l.b16 %v487
        %v552 = vunpack.c.l.b16 %v488
        %v553 = vunpack.c.l.b16 %v489
        %v554 = vunpack.c.l.b16 %v490
        %v555 = vunpack.c.l.b16 %v491
        %v556 = vunpack.c.l.b16 %v492
        %v557 = vpack.c.b16 %v526, %v525
        %v558 = vpack.c.b16 %v528, %v527
        %v559 = vpack.c.b16 %v530, %v529
        %v560 = vpack.c.b16 %v532, %v531
        %v561 = vpack.c.b16 %v534, %v533
        %v562 = vpack.c.b16 %v536, %v535
        %v563 = vpack.c.b16 %v538, %v537
        %v564 = vpack.c.b16 %v540, %v539
        %v565 = vpack.c.b16 %v542, %v541
        %v566 = vpack.c.b16 %v544, %v543
        %v567 = vpack.c.b16 %v546, %v545
        %v568 = vpack.c.b16 %v548, %v547
        %v569 = vpack.c.b16 %v550, %v549
        %v570 = vpack.c.b16 %v552, %v551
        %v571 = vpack.c.b16 %v554, %v553
        %v572 = vpack.c.b16 %v556, %v555
        %v573 = vld [vmem:[#allocation3] sm:$0xf]
        %v574 = vld [vmem:[#allocation3 + $0x4] sm:$0xf]
        %s575 = scalar_lea.vmem [#allocation3], 8
        %v576 = vld [vmem:[%s575] sm:$0xf]
        %v577 = vld [vmem:[%s575 + $0x4] sm:$0xf]
        %v580 = vunpack.c.l.b16 %v576
        %v581 = vunpack.c.l.b16 %v577
        %v582 = vpack.c.b16 %v581, %v580
        %vm584 = vcmask 130048
        %v586 = vsel %vm584, 0, 0
        %v589 = vsel %vm584, %v557, 0
        %v592 = vsel %vm584, %v558, 0
        %v595 = vsel %vm584, %v559, 0
        %v598 = vsel %vm584, %v560, 0
        %v601 = vsel %vm584, %v561, 0
        %v604 = vsel %vm584, %v562, 0
        %v607 = vsel %vm584, %v563, 0
        %v610 = vsel %vm584, %v564, 0
        %v613 = vsel %vm584, %v565, 0
        %v616 = vsel %vm584, %v566, 0
        %v619 = vsel %vm584, %v567, 0
        %v622 = vsel %vm584, %v568, 0
        %624 = vmatprep.subr.bf16.mxu0 0
        %625 = vmatpush1.bf16.msra.mxu0 %v582
        %626 = vmatprep.subr.bf16.mxu0 0
        %627 = vmatpush1.bf16.msra.mxu0 0
        %628 = vmatprep.subr.bf16.mxu0 0
        %629 = vmatpush1.bf16.msra.mxu0 0
        %630 = vmatprep.subr.bf16.mxu0 0
        %631 = vmatpush1.bf16.msra.mxu0 0
        %632 = vmatprep.subr.bf16.mxu0 0
        %633 = vmatpush1.bf16.msra.mxu0 0
        %634 = vmatprep.subr.bf16.mxu0 0
        %635 = vmatpush1.bf16.msra.mxu0 0
        %636 = vmatprep.subr.bf16.mxu0 0
        %637 = vmatpush1.bf16.msra.mxu0 0
        %638 = vmatprep.subr.bf16.mxu0 0
        %639 = vmatpush1.bf16.msra.mxu0 0
        %640 = vmatprep.subr.bf16.mxu0 0
        %641 = vmatpush1.bf16.msra.mxu0 0
        %642 = vmatprep.subr.bf16.mxu0 0
        %643 = vmatpush1.bf16.msra.mxu0 0
        %644 = vmatprep.subr.bf16.mxu0 0
        %645 = vmatpush1.bf16.msra.mxu0 0
        %646 = vmatprep.subr.bf16.mxu0 0
        %647 = vmatpush1.bf16.msra.mxu0 0
        %648 = vmatprep.subr.bf16.mxu0 0
        %649 = vmatpush1.bf16.msra.mxu0 0
        %650 = vmatprep.subr.bf16.mxu0 0
        %651 = vmatpush1.bf16.msra.mxu0 0
        %652 = vmatprep.subr.bf16.mxu0 0
        %653 = vmatpush1.bf16.msra.mxu0 0
        %654 = vmatprep.subr.bf16.mxu0 0
        %655 = vmatpush1.bf16.msra.mxu0 0
        %656 = vmatprep.mubr.bf16.mxu0 0
        %657 = vmatmul.mubr.bf16.gmra.mrb[0].mxu0 %v586
        %v658 = vpop.f32.mrb[0].mxu0
        %v659 = vadd.f32 0.0, %v658
        %v660 = vpop.f32.mrb[0].mxu0
        %v661 = vpop.f32.mrb[0].mxu0
        %v662 = vadd.f32 0.0, %v661
        %v663 = vpop.f32.mrb[0].mxu0
        %664 = vmatprep.mubr.bf16.mxu0 0
        %665 = vmatmul.mubr.bf16.gmra.mrb[0].mxu0 %v586
        %v666 = vpop.f32.mrb[0].mxu0
        %v667 = vadd.f32 0.0, %v666
        %v668 = vpop.f32.mrb[0].mxu0
        %v669 = vpop.f32.mrb[0].mxu0
        %v670 = vadd.f32 0.0, %v669
        %v671 = vpop.f32.mrb[0].mxu0
        %672 = vmatprep.mubr.bf16.mxu0 0
        %673 = vmatmul.mubr.bf16.gmra.mrb[0].mxu0 %v586
        %v674 = vpop.f32.mrb[0].mxu0
        %v675 = vadd.f32 0.0, %v674
        %v676 = vpop.f32.mrb[0].mxu0
        %v677 = vpop.f32.mrb[0].mxu0
        %v678 = vadd.f32 0.0, %v677
        %v679 = vpop.f32.mrb[0].mxu0
        %680 = vmatprep.mubr.bf16.mxu0 0
        %681 = vmatmul.mubr.bf16.gmra.mrb[0].mxu0 %v586
        %v682 = vpop.f32.mrb[0].mxu0
        %v683 = vadd.f32 0.0, %v682
        %v684 = vpop.f32.mrb[0].mxu0
        %v685 = vpop.f32.mrb[0].mxu0
        %v686 = vadd.f32 0.0, %v685
        %v687 = vpop.f32.mrb[0].mxu0
        %688 = vmatprep.mubr.bf16.mxu0 0
        %689 = vmatmul.mubr.bf16.gmra.mrb[0].mxu0 %v589
        %v690 = vpop.f32.mrb[0].mxu0
        %v691 = vadd.f32 0.0, %v690
        %v692 = vpop.f32.mrb[0].mxu0
        %v693 = vpop.f32.mrb[0].mxu0
        %v694 = vadd.f32 0.0, %v693
        %v695 = vpop.f32.mrb[0].mxu0
        %696 = vmatprep.mubr.bf16.mxu0 0
        %697 = vmatmul.mubr.bf16.gmra.mrb[0].mxu0 %v592
        %v698 = vpop.f32.mrb[0].mxu0
        %v699 = vadd.f32 0.0, %v698
        %v700 = vpop.f32.mrb[0].mxu0
        %v701 = vpop.f32.mrb[0].mxu0
        %v702 = vadd.f32 0.0, %v701
        %v703 = vpop.f32.mrb[0].mxu0
        %704 = vmatprep.mubr.bf16.mxu0 0
        %705 = vmatmul.mubr.bf16.gmra.mrb[0].mxu0 %v595
        %v706 = vpop.f32.mrb[0].mxu0
        %v707 = vadd.f32 0.0, %v706
        %v708 = vpop.f32.mrb[0].mxu0
        %v709 = vpop.f32.mrb[0].mxu0
        %v710 = vadd.f32 0.0, %v709
        %v711 = vpop.f32.mrb[0].mxu0
        %712 = vmatprep.mubr.bf16.mxu0 0
        %713 = vmatmul.mubr.bf16.gmra.mrb[0].mxu0 %v598
        %v714 = vpop.f32.mrb[0].mxu0
        %v715 = vadd.f32 0.0, %v714
        %v716 = vpop.f32.mrb[0].mxu0
        %v717 = vpop.f32.mrb[0].mxu0
        %v718 = vadd.f32 0.0, %v717
        %v719 = vpop.f32.mrb[0].mxu0
        %720 = vmatprep.mubr.bf16.mxu0 0
        %721 = vmatmul.mubr.bf16.gmra.mrb[0].mxu0 %v601
        %v722 = vpop.f32.mrb[0].mxu0
        %v723 = vadd.f32 0.0, %v722
        %v724 = vpop.f32.mrb[0].mxu0
        %v725 = vpop.f32.mrb[0].mxu0
        %v726 = vadd.f32 0.0, %v725
        %v727 = vpop.f32.mrb[0].mxu0
        %728 = vmatprep.mubr.bf16.mxu0 0
        %729 = vmatmul.mubr.bf16.gmra.mrb[0].mxu0 %v604
        %v730 = vpop.f32.mrb[0].mxu0
        %v731 = vadd.f32 0.0, %v730
        %v732 = vpop.f32.mrb[0].mxu0
        %v733 = vpop.f32.mrb[0].mxu0
        %v734 = vadd.f32 0.0, %v733
        %v735 = vpop.f32.mrb[0].mxu0
        %736 = vmatprep.mubr.bf16.mxu0 0
        %737 = vmatmul.mubr.bf16.gmra.mrb[0].mxu0 %v607
        %v738 = vpop.f32.mrb[0].mxu0
        %v739 = vadd.f32 0.0, %v738
        %v740 = vpop.f32.mrb[0].mxu0
        %v741 = vpop.f32.mrb[0].mxu0
        %v742 = vadd.f32 0.0, %v741
        %v743 = vpop.f32.mrb[0].mxu0
        %744 = vmatprep.mubr.bf16.mxu0 0
        %745 = vmatmul.mubr.bf16.gmra.mrb[0].mxu0 %v610
        %v746 = vpop.f32.mrb[0].mxu0
        %v747 = vadd.f32 0.0, %v746
        %v748 = vpop.f32.mrb[0].mxu0
        %v749 = vpop.f32.mrb[0].mxu0
        %v750 = vadd.f32 0.0, %v749
        %v751 = vpop.f32.mrb[0].mxu0
        %752 = vmatprep.mubr.bf16.mxu0 0
        %753 = vmatmul.mubr.bf16.gmra.mrb[0].mxu0 %v613
        %v754 = vpop.f32.mrb[0].mxu0
        %v755 = vadd.f32 0.0, %v754
        %v756 = vpop.f32.mrb[0].mxu0
        %v757 = vpop.f32.mrb[0].mxu0
        %v758 = vadd.f32 0.0, %v757
        %v759 = vpop.f32.mrb[0].mxu0
        %760 = vmatprep.mubr.bf16.mxu0 0
        %761 = vmatmul.mubr.bf16.gmra.mrb[0].mxu0 %v616
        %v762 = vpop.f32.mrb[0].mxu0
        %v763 = vadd.f32 0.0, %v762
        %v764 = vpop.f32.mrb[0].mxu0
        %v765 = vpop.f32.mrb[0].mxu0
        %v766 = vadd.f32 0.0, %v765
        %v767 = vpop.f32.mrb[0].mxu0
        %768 = vmatprep.mubr.bf16.mxu0 0
        %769 = vmatmul.mubr.bf16.gmra.mrb[0].mxu0 %v619
        %v770 = vpop.f32.mrb[0].mxu0
        %v771 = vadd.f32 0.0, %v770
        %v772 = vpop.f32.mrb[0].mxu0
        %v773 = vpop.f32.mrb[0].mxu0
        %v774 = vadd.f32 0.0, %v773
        %v775 = vpop.f32.mrb[0].mxu0
        %776 = vmatprep.mubr.bf16.mxu0 0
        %777 = vmatmul.mubr.bf16.gmra.mrb[0].mxu0 %v622
        %v778 = vpop.f32.mrb[0].mxu0
        %v779 = vadd.f32 0.0, %v778
        %v780 = vpop.f32.mrb[0].mxu0
        %v781 = vpop.f32.mrb[0].mxu0
        %v782 = vadd.f32 0.0, %v781
        %v783 = vpop.f32.mrb[0].mxu0
        %784 = vdwg.mxu0
        %v787 = vunpack.c.l.b16 %v573
        %v788 = vunpack.c.l.b16 %v574
        %v789 = vpack.c.b16 %v788, %v787
        %791 = vmatprep.subr.bf16.mxu0 0
        %792 = vmatpush1.bf16.msra.mxu0 %v789
        %793 = vmatprep.subr.bf16.mxu0 0
        %794 = vmatpush1.bf16.msra.mxu0 0
        %795 = vmatprep.subr.bf16.mxu0 0
        %796 = vmatpush1.bf16.msra.mxu0 0
        %797 = vmatprep.subr.bf16.mxu0 0
        %798 = vmatpush1.bf16.msra.mxu0 0
        %799 = vmatprep.subr.bf16.mxu0 0
        %800 = vmatpush1.bf16.msra.mxu0 0
        %801 = vmatprep.subr.bf16.mxu0 0
        %802 = vmatpush1.bf16.msra.mxu0 0
        %803 = vmatprep.subr.bf16.mxu0 0
        %804 = vmatpush1.bf16.msra.mxu0 0
        %805 = vmatprep.subr.bf16.mxu0 0
        %806 = vmatpush1.bf16.msra.mxu0 0
        %807 = vmatprep.subr.bf16.mxu0 0
        %808 = vmatpush1.bf16.msra.mxu0 0
        %809 = vmatprep.subr.bf16.mxu0 0
        %810 = vmatpush1.bf16.msra.mxu0 0
        %811 = vmatprep.subr.bf16.mxu0 0
        %812 = vmatpush1.bf16.msra.mxu0 0
        %813 = vmatprep.subr.bf16.mxu0 0
        %814 = vmatpush1.bf16.msra.mxu0 0
        %815 = vmatprep.subr.bf16.mxu0 0
        %816 = vmatpush1.bf16.msra.mxu0 0
        %817 = vmatprep.subr.bf16.mxu0 0
        %818 = vmatpush1.bf16.msra.mxu0 0
        %819 = vmatprep.subr.bf16.mxu0 0
        %820 = vmatpush1.bf16.msra.mxu0 0
        %821 = vmatprep.subr.bf16.mxu0 0
        %822 = vmatpush1.bf16.msra.mxu0 0
        %823 = vmatprep.mubr.bf16.mxu0 0
        %824 = vmatmul.mubr.bf16.gmra.mrb[0].mxu0 %v586
        %v825 = vpop.f32.mrb[0].mxu0
        %v826 = vadd.f32 %v659, %v825
        %v827 = vpop.f32.mrb[0].mxu0
        %v828 = vpop.f32.mrb[0].mxu0
        %v829 = vadd.f32 %v662, %v828
        %v830 = vpop.f32.mrb[0].mxu0
        %831 = vmatprep.mubr.bf16.mxu0 0
        %832 = vmatmul.mubr.bf16.gmra.mrb[0].mxu0 %v586
        %v833 = vpop.f32.mrb[0].mxu0
        %v834 = vadd.f32 %v667, %v833
        %v835 = vpop.f32.mrb[0].mxu0
        %v836 = vpop.f32.mrb[0].mxu0
        %v837 = vadd.f32 %v670, %v836
        %v838 = vpop.f32.mrb[0].mxu0
        %839 = vmatprep.mubr.bf16.mxu0 0
        %840 = vmatmul.mubr.bf16.gmra.mrb[0].mxu0 %v586
        %v841 = vpop.f32.mrb[0].mxu0
        %v842 = vadd.f32 %v675, %v841
        %v843 = vpop.f32.mrb[0].mxu0
        %v844 = vpop.f32.mrb[0].mxu0
        %v845 = vadd.f32 %v678, %v844
        %v846 = vpop.f32.mrb[0].mxu0
        %847 = vmatprep.mubr.bf16.mxu0 0
        %848 = vmatmul.mubr.bf16.gmra.mrb[0].mxu0 %v586
        %v849 = vpop.f32.mrb[0].mxu0
        %v850 = vadd.f32 %v683, %v849
        %v851 = vpop.f32.mrb[0].mxu0
        %v852 = vpop.f32.mrb[0].mxu0
        %v853 = vadd.f32 %v686, %v852
        %v854 = vpop.f32.mrb[0].mxu0
        %855 = vmatprep.mubr.bf16.mxu0 0
        %856 = vmatmul.mubr.bf16.gmra.mrb[0].mxu0 %v586
        %v857 = vpop.f32.mrb[0].mxu0
        %v858 = vadd.f32 %v691, %v857
        %v859 = vpop.f32.mrb[0].mxu0
        %v860 = vpop.f32.mrb[0].mxu0
        %v861 = vadd.f32 %v694, %v860
        %v862 = vpop.f32.mrb[0].mxu0
        %863 = vmatprep.mubr.bf16.mxu0 0
        %864 = vmatmul.mubr.bf16.gmra.mrb[0].mxu0 %v589
        %v865 = vpop.f32.mrb[0].mxu0
        %v866 = vadd.f32 %v699, %v865
        %v867 = vpop.f32.mrb[0].mxu0
        %v868 = vpop.f32.mrb[0].mxu0
        %v869 = vadd.f32 %v702, %v868
        %v870 = vpop.f32.mrb[0].mxu0
        %871 = vmatprep.mubr.bf16.mxu0 0
        %872 = vmatmul.mubr.bf16.gmra.mrb[0].mxu0 %v592
        %v873 = vpop.f32.mrb[0].mxu0
        %v874 = vadd.f32 %v707, %v873
        %v875 = vpop.f32.mrb[0].mxu0
        %v876 = vpop.f32.mrb[0].mxu0
        %v877 = vadd.f32 %v710, %v876
        %v878 = vpop.f32.mrb[0].mxu0
        %879 = vmatprep.mubr.bf16.mxu0 0
        %880 = vmatmul.mubr.bf16.gmra.mrb[0].mxu0 %v595
        %v881 = vpop.f32.mrb[0].mxu0
        %v882 = vadd.f32 %v715, %v881
        %v883 = vpop.f32.mrb[0].mxu0
        %v884 = vpop.f32.mrb[0].mxu0
        %v885 = vadd.f32 %v718, %v884
        %v886 = vpop.f32.mrb[0].mxu0
        %887 = vmatprep.mubr.bf16.mxu0 0
        %888 = vmatmul.mubr.bf16.gmra.mrb[0].mxu0 %v586
        %v889 = vpop.f32.mrb[0].mxu0
        %v890 = vadd.f32 %v723, %v889
        %v891 = vpop.f32.mrb[0].mxu0
        %v892 = vpop.f32.mrb[0].mxu0
        %v893 = vadd.f32 %v726, %v892
        %v894 = vpop.f32.mrb[0].mxu0
        %895 = vmatprep.mubr.bf16.mxu0 0
        %896 = vmatmul.mubr.bf16.gmra.mrb[0].mxu0 %v601
        %v897 = vpop.f32.mrb[0].mxu0
        %v898 = vadd.f32 %v731, %v897
        %v899 = vpop.f32.mrb[0].mxu0
        %v900 = vpop.f32.mrb[0].mxu0
        %v901 = vadd.f32 %v734, %v900
        %v902 = vpop.f32.mrb[0].mxu0
        %903 = vmatprep.mubr.bf16.mxu0 0
        %904 = vmatmul.mubr.bf16.gmra.mrb[0].mxu0 %v604
        %v905 = vpop.f32.mrb[0].mxu0
        %v906 = vadd.f32 %v739, %v905
        %v907 = vpop.f32.mrb[0].mxu0
        %v908 = vpop.f32.mrb[0].mxu0
        %v909 = vadd.f32 %v742, %v908
        %v910 = vpop.f32.mrb[0].mxu0
        %911 = vmatprep.mubr.bf16.mxu0 0
        %912 = vmatmul.mubr.bf16.gmra.mrb[0].mxu0 %v607
        %v913 = vpop.f32.mrb[0].mxu0
        %v914 = vadd.f32 %v747, %v913
        %v915 = vpop.f32.mrb[0].mxu0
        %v916 = vpop.f32.mrb[0].mxu0
        %v917 = vadd.f32 %v750, %v916
        %v918 = vpop.f32.mrb[0].mxu0
        %919 = vmatprep.mubr.bf16.mxu0 0
        %920 = vmatmul.mubr.bf16.gmra.mrb[0].mxu0 %v586
        %v921 = vpop.f32.mrb[0].mxu0
        %v922 = vadd.f32 %v755, %v921
        %v923 = vpop.f32.mrb[0].mxu0
        %v924 = vpop.f32.mrb[0].mxu0
        %v925 = vadd.f32 %v758, %v924
        %v926 = vpop.f32.mrb[0].mxu0
        %927 = vmatprep.mubr.bf16.mxu0 0
        %928 = vmatmul.mubr.bf16.gmra.mrb[0].mxu0 %v613
        %v929 = vpop.f32.mrb[0].mxu0
        %v930 = vadd.f32 %v763, %v929
        %v931 = vpop.f32.mrb[0].mxu0
        %v932 = vpop.f32.mrb[0].mxu0
        %v933 = vadd.f32 %v766, %v932
        %v934 = vpop.f32.mrb[0].mxu0
        %935 = vmatprep.mubr.bf16.mxu0 0
        %936 = vmatmul.mubr.bf16.gmra.mrb[0].mxu0 %v616
        %v937 = vpop.f32.mrb[0].mxu0
        %v938 = vadd.f32 %v771, %v937
        %v939 = vpop.f32.mrb[0].mxu0
        %v940 = vpop.f32.mrb[0].mxu0
        %v941 = vadd.f32 %v774, %v940
        %v942 = vpop.f32.mrb[0].mxu0
        %943 = vmatprep.mubr.bf16.mxu0 0
        %944 = vmatmul.mubr.bf16.gmra.mrb[0].mxu0 %v619
        %v945 = vpop.f32.mrb[0].mxu0
        %v946 = vadd.f32 %v779, %v945
        %v947 = vpop.f32.mrb[0].mxu0
        %v948 = vpop.f32.mrb[0].mxu0
        %v949 = vadd.f32 %v782, %v948
        %v950 = vpop.f32.mrb[0].mxu0
        %951 = vdwg.mxu0
        %s952 = scalar_lea.vmem [#allocation3], 16
        %v953 = vld [vmem:[%s952] sm:$0xf]
        %v954 = vld [vmem:[%s952 + $0x4] sm:$0xf]
        %v957 = vunpack.c.l.b16 %v953
        %v958 = vunpack.c.l.b16 %v954
        %v959 = vpack.c.b16 %v958, %v957
        %961 = vmatprep.subr.bf16.mxu0 0
        %962 = vmatpush1.bf16.msra.mxu0 %v959
        %963 = vmatprep.subr.bf16.mxu0 0
        %964 = vmatpush1.bf16.msra.mxu0 0
        %965 = vmatprep.subr.bf16.mxu0 0
        %966 = vmatpush1.bf16.msra.mxu0 0
        %967 = vmatprep.subr.bf16.mxu0 0
        %968 = vmatpush1.bf16.msra.mxu0 0
        %969 = vmatprep.subr.bf16.mxu0 0
        %970 = vmatpush1.bf16.msra.mxu0 0
        %971 = vmatprep.subr.bf16.mxu0 0
        %972 = vmatpush1.bf16.msra.mxu0 0
        %973 = vmatprep.subr.bf16.mxu0 0
        %974 = vmatpush1.bf16.msra.mxu0 0
        %975 = vmatprep.subr.bf16.mxu0 0
        %976 = vmatpush1.bf16.msra.mxu0 0
        %977 = vmatprep.subr.bf16.mxu0 0
        %978 = vmatpush1.bf16.msra.mxu0 0
        %979 = vmatprep.subr.bf16.mxu0 0
        %980 = vmatpush1.bf16.msra.mxu0 0
        %981 = vmatprep.subr.bf16.mxu0 0
        %982 = vmatpush1.bf16.msra.mxu0 0
        %983 = vmatprep.subr.bf16.mxu0 0
        %984 = vmatpush1.bf16.msra.mxu0 0
        %985 = vmatprep.subr.bf16.mxu0 0
        %986 = vmatpush1.bf16.msra.mxu0 0
        %987 = vmatprep.subr.bf16.mxu0 0
        %988 = vmatpush1.bf16.msra.mxu0 0
        %989 = vmatprep.subr.bf16.mxu0 0
        %990 = vmatpush1.bf16.msra.mxu0 0
        %991 = vmatprep.subr.bf16.mxu0 0
        %992 = vmatpush1.bf16.msra.mxu0 0
        %993 = vmatprep.mubr.bf16.mxu0 0
        %994 = vmatmul.mubr.bf16.gmra.mrb[0].mxu0 %v586
        %v995 = vpop.f32.mrb[0].mxu0
        %v996 = vadd.f32 0.0, %v995
        %v997 = vpop.f32.mrb[0].mxu0
        %v998 = vpop.f32.mrb[0].mxu0
        %v999 = vadd.f32 0.0, %v998
        %v1000 = vpop.f32.mrb[0].mxu0
        %1001 = vmatprep.mubr.bf16.mxu0 0
        %1002 = vmatmul.mubr.bf16.gmra.mrb[0].mxu0 %v586
        %v1003 = vpop.f32.mrb[0].mxu0
        %v1004 = vadd.f32 0.0, %v1003
        %v1005 = vpop.f32.mrb[0].mxu0
        %v1006 = vpop.f32.mrb[0].mxu0
        %v1007 = vadd.f32 0.0, %v1006
        %v1008 = vpop.f32.mrb[0].mxu0
        %1009 = vmatprep.mubr.bf16.mxu0 0
        %1010 = vmatmul.mubr.bf16.gmra.mrb[0].mxu0 %v586
        %v1011 = vpop.f32.mrb[0].mxu0
        %v1012 = vadd.f32 0.0, %v1011
        %v1013 = vpop.f32.mrb[0].mxu0
        %v1014 = vpop.f32.mrb[0].mxu0
        %v1015 = vadd.f32 0.0, %v1014
        %v1016 = vpop.f32.mrb[0].mxu0
        %1017 = vmatprep.mubr.bf16.mxu0 0
        %1018 = vmatmul.mubr.bf16.gmra.mrb[0].mxu0 %v586
        %v1019 = vpop.f32.mrb[0].mxu0
        %v1020 = vadd.f32 0.0, %v1019
        %v1021 = vpop.f32.mrb[0].mxu0
        %v1022 = vpop.f32.mrb[0].mxu0
        %v1023 = vadd.f32 0.0, %v1022
        %v1024 = vpop.f32.mrb[0].mxu0
        %1025 = vmatprep.mubr.bf16.mxu0 0
        %1026 = vmatmul.mubr.bf16.gmra.mrb[0].mxu0 %v592
        %v1027 = vpop.f32.mrb[0].mxu0
        %v1028 = vadd.f32 0.0, %v1027
        %v1029 = vpop.f32.mrb[0].mxu0
        %v1030 = vpop.f32.mrb[0].mxu0
        %v1031 = vadd.f32 0.0, %v1030
        %v1032 = vpop.f32.mrb[0].mxu0
        %1033 = vmatprep.mubr.bf16.mxu0 0
        %1034 = vmatmul.mubr.bf16.gmra.mrb[0].mxu0 %v595
        %v1035 = vpop.f32.mrb[0].mxu0
        %v1036 = vadd.f32 0.0, %v1035
        %v1037 = vpop.f32.mrb[0].mxu0
        %v1038 = vpop.f32.mrb[0].mxu0
        %v1039 = vadd.f32 0.0, %v1038
        %v1040 = vpop.f32.mrb[0].mxu0
        %1041 = vmatprep.mubr.bf16.mxu0 0
        %1042 = vmatmul.mubr.bf16.gmra.mrb[0].mxu0 %v598
        %v1043 = vpop.f32.mrb[0].mxu0
        %v1044 = vadd.f32 0.0, %v1043
        %v1045 = vpop.f32.mrb[0].mxu0
        %v1046 = vpop.f32.mrb[0].mxu0
        %v1047 = vadd.f32 0.0, %v1046
        %v1048 = vpop.f32.mrb[0].mxu0
        %1049 = vmatprep.mubr.bf16.mxu0 0
        %1050 = vmatmul.mubr.bf16.gmra.mrb[0].mxu0 %v586
        %v1051 = vpop.f32.mrb[0].mxu0
        %v1052 = vadd.f32 0.0, %v1051
        %v1053 = vpop.f32.mrb[0].mxu0
        %v1054 = vpop.f32.mrb[0].mxu0
        %v1055 = vadd.f32 0.0, %v1054
        %v1056 = vpop.f32.mrb[0].mxu0
        %1057 = vmatprep.mubr.bf16.mxu0 0
        %1058 = vmatmul.mubr.bf16.gmra.mrb[0].mxu0 %v604
        %v1059 = vpop.f32.mrb[0].mxu0
        %v1060 = vadd.f32 0.0, %v1059
        %v1061 = vpop.f32.mrb[0].mxu0
        %v1062 = vpop.f32.mrb[0].mxu0
        %v1063 = vadd.f32 0.0, %v1062
        %v1064 = vpop.f32.mrb[0].mxu0
        %1065 = vmatprep.mubr.bf16.mxu0 0
        %1066 = vmatmul.mubr.bf16.gmra.mrb[0].mxu0 %v607
        %v1067 = vpop.f32.mrb[0].mxu0
        %v1068 = vadd.f32 0.0, %v1067
        %v1069 = vpop.f32.mrb[0].mxu0
        %v1070 = vpop.f32.mrb[0].mxu0
        %v1071 = vadd.f32 0.0, %v1070
        %v1072 = vpop.f32.mrb[0].mxu0
        %1073 = vmatprep.mubr.bf16.mxu0 0
        %1074 = vmatmul.mubr.bf16.gmra.mrb[0].mxu0 %v610
        %v1075 = vpop.f32.mrb[0].mxu0
        %v1076 = vadd.f32 0.0, %v1075
        %v1077 = vpop.f32.mrb[0].mxu0
        %v1078 = vpop.f32.mrb[0].mxu0
        %v1079 = vadd.f32 0.0, %v1078
        %v1080 = vpop.f32.mrb[0].mxu0
        %1081 = vmatprep.mubr.bf16.mxu0 0
        %1082 = vmatmul.mubr.bf16.gmra.mrb[0].mxu0 %v586
        %v1083 = vpop.f32.mrb[0].mxu0
        %v1084 = vadd.f32 0.0, %v1083
        %v1085 = vpop.f32.mrb[0].mxu0
        %v1086 = vpop.f32.mrb[0].mxu0
        %v1087 = vadd.f32 0.0, %v1086
        %v1088 = vpop.f32.mrb[0].mxu0
        %1089 = vmatprep.mubr.bf16.mxu0 0
        %1090 = vmatmul.mubr.bf16.gmra.mrb[0].mxu0 %v616
        %v1091 = vpop.f32.mrb[0].mxu0
        %v1092 = vadd.f32 0.0, %v1091
        %v1093 = vpop.f32.mrb[0].mxu0
        %v1094 = vpop.f32.mrb[0].mxu0
        %v1095 = vadd.f32 0.0, %v1094
        %v1096 = vpop.f32.mrb[0].mxu0
        %1097 = vmatprep.mubr.bf16.mxu0 0
        %1098 = vmatmul.mubr.bf16.gmra.mrb[0].mxu0 %v619
        %v1099 = vpop.f32.mrb[0].mxu0
        %v1100 = vadd.f32 0.0, %v1099
        %v1101 = vpop.f32.mrb[0].mxu0
        %v1102 = vpop.f32.mrb[0].mxu0
        %v1103 = vadd.f32 0.0, %v1102
        %v1104 = vpop.f32.mrb[0].mxu0
        %1105 = vmatprep.mubr.bf16.mxu0 0
        %1106 = vmatmul.mubr.bf16.gmra.mrb[0].mxu0 %v622
        %v1107 = vpop.f32.mrb[0].mxu0
        %v1108 = vadd.f32 0.0, %v1107
        %v1109 = vpop.f32.mrb[0].mxu0
        %v1110 = vpop.f32.mrb[0].mxu0
        %v1111 = vadd.f32 0.0, %v1110
        %v1112 = vpop.f32.mrb[0].mxu0
        %1113 = vmatprep.mubr.bf16.mxu0 0
        %1114 = vmatmul.mubr.bf16.gmra.mrb[0].mxu0 %v586
        %v1115 = vpop.f32.mrb[0].mxu0
        %v1116 = vadd.f32 0.0, %v1115
        %v1117 = vpop.f32.mrb[0].mxu0
        %v1118 = vpop.f32.mrb[0].mxu0
        %v1119 = vadd.f32 0.0, %v1118
        %v1120 = vpop.f32.mrb[0].mxu0
        %1121 = vdwg.mxu0
        %v1122 = vadd.f32 %v826, %v996
        %v1123 = vadd.f32 %v829, %v999
        %v1124 = vadd.f32 %v834, %v1004
        %v1125 = vadd.f32 %v837, %v1007
        %v1126 = vadd.f32 %v842, %v1012
        %v1127 = vadd.f32 %v845, %v1015
        %v1128 = vadd.f32 %v850, %v1020
        %v1129 = vadd.f32 %v853, %v1023
        %v1130 = vadd.f32 %v858, %v1028
        %v1131 = vadd.f32 %v861, %v1031
        %v1132 = vadd.f32 %v866, %v1036
        %v1133 = vadd.f32 %v869, %v1039
        %v1134 = vadd.f32 %v874, %v1044
        %v1135 = vadd.f32 %v877, %v1047
        %v1136 = vadd.f32 %v882, %v1052
        %v1137 = vadd.f32 %v885, %v1055
        %v1138 = vadd.f32 %v890, %v1060
        %v1139 = vadd.f32 %v893, %v1063
        %v1140 = vadd.f32 %v898, %v1068
        %v1141 = vadd.f32 %v901, %v1071
        %v1142 = vadd.f32 %v906, %v1076
        %v1143 = vadd.f32 %v909, %v1079
        %v1144 = vadd.f32 %v914, %v1084
        %v1145 = vadd.f32 %v917, %v1087
        %v1146 = vadd.f32 %v922, %v1092
        %v1147 = vadd.f32 %v925, %v1095
        %v1148 = vadd.f32 %v930, %v1100
        %v1149 = vadd.f32 %v933, %v1103
        %v1150 = vadd.f32 %v938, %v1108
        %v1151 = vadd.f32 %v941, %v1111
        %v1152 = vadd.f32 %v946, %v1116
        %v1153 = vadd.f32 %v949, %v1119
        %s1154 = scalar_lea.vmem [#allocation3], 24
        %v1155 = vld [vmem:[%s1154] sm:$0xf]
        %v1156 = vld [vmem:[%s1154 + $0x4] sm:$0xf]
        %v1159 = vunpack.c.l.b16 %v1155
        %v1160 = vunpack.c.l.b16 %v1156
        %v1161 = vpack.c.b16 %v1160, %v1159
        %v1164 = vsel %vm584, %v569, 0
        %v1167 = vsel %vm584, %v570, 0
        %v1170 = vsel %vm584, %v571, 0
        %1172 = vmatprep.subr.bf16.mxu0 0
        %1173 = vmatpush1.bf16.msra.mxu0 %v1161
        %1174 = vmatprep.subr.bf16.mxu0 0
        %1175 = vmatpush1.bf16.msra.mxu0 0
        %1176 = vmatprep.subr.bf16.mxu0 0
        %1177 = vmatpush1.bf16.msra.mxu0 0
        %1178 = vmatprep.subr.bf16.mxu0 0
        %1179 = vmatpush1.bf16.msra.mxu0 0
        %1180 = vmatprep.subr.bf16.mxu0 0
        %1181 = vmatpush1.bf16.msra.mxu0 0
        %1182 = vmatprep.subr.bf16.mxu0 0
        %1183 = vmatpush1.bf16.msra.mxu0 0
        %1184 = vmatprep.subr.bf16.mxu0 0
        %1185 = vmatpush1.bf16.msra.mxu0 0
        %1186 = vmatprep.subr.bf16.mxu0 0
        %1187 = vmatpush1.bf16.msra.mxu0 0
        %1188 = vmatprep.subr.bf16.mxu0 0
        %1189 = vmatpush1.bf16.msra.mxu0 0
        %1190 = vmatprep.subr.bf16.mxu0 0
        %1191 = vmatpush1.bf16.msra.mxu0 0
        %1192 = vmatprep.subr.bf16.mxu0 0
        %1193 = vmatpush1.bf16.msra.mxu0 0
        %1194 = vmatprep.subr.bf16.mxu0 0
        %1195 = vmatpush1.bf16.msra.mxu0 0
        %1196 = vmatprep.subr.bf16.mxu0 0
        %1197 = vmatpush1.bf16.msra.mxu0 0
        %1198 = vmatprep.subr.bf16.mxu0 0
        %1199 = vmatpush1.bf16.msra.mxu0 0
        %1200 = vmatprep.subr.bf16.mxu0 0
        %1201 = vmatpush1.bf16.msra.mxu0 0
        %1202 = vmatprep.subr.bf16.mxu0 0
        %1203 = vmatpush1.bf16.msra.mxu0 0
        %1204 = vmatprep.mubr.bf16.mxu0 0
        %1205 = vmatmul.mubr.bf16.gmra.mrb[0].mxu0 %v586
        %v1206 = vpop.f32.mrb[0].mxu0
        %v1207 = vadd.f32 0.0, %v1206
        %v1208 = vpop.f32.mrb[0].mxu0
        %v1209 = vpop.f32.mrb[0].mxu0
        %v1210 = vadd.f32 0.0, %v1209
        %v1211 = vpop.f32.mrb[0].mxu0
        %1212 = vmatprep.mubr.bf16.mxu0 0
        %1213 = vmatmul.mubr.bf16.gmra.mrb[0].mxu0 %v589
        %v1214 = vpop.f32.mrb[0].mxu0
        %v1215 = vadd.f32 0.0, %v1214
        %v1216 = vpop.f32.mrb[0].mxu0
        %v1217 = vpop.f32.mrb[0].mxu0
        %v1218 = vadd.f32 0.0, %v1217
        %v1219 = vpop.f32.mrb[0].mxu0
        %1220 = vmatprep.mubr.bf16.mxu0 0
        %1221 = vmatmul.mubr.bf16.gmra.mrb[0].mxu0 %v592
        %v1222 = vpop.f32.mrb[0].mxu0
        %v1223 = vadd.f32 0.0, %v1222
        %v1224 = vpop.f32.mrb[0].mxu0
        %v1225 = vpop.f32.mrb[0].mxu0
        %v1226 = vadd.f32 0.0, %v1225
        %v1227 = vpop.f32.mrb[0].mxu0
        %1228 = vmatprep.mubr.bf16.mxu0 0
        %1229 = vmatmul.mubr.bf16.gmra.mrb[0].mxu0 %v595
        %v1230 = vpop.f32.mrb[0].mxu0
        %v1231 = vadd.f32 0.0, %v1230
        %v1232 = vpop.f32.mrb[0].mxu0
        %v1233 = vpop.f32.mrb[0].mxu0
        %v1234 = vadd.f32 0.0, %v1233
        %v1235 = vpop.f32.mrb[0].mxu0
        %1236 = vmatprep.mubr.bf16.mxu0 0
        %1237 = vmatmul.mubr.bf16.gmra.mrb[0].mxu0 %v586
        %v1238 = vpop.f32.mrb[0].mxu0
        %v1239 = vadd.f32 0.0, %v1238
        %v1240 = vpop.f32.mrb[0].mxu0
        %v1241 = vpop.f32.mrb[0].mxu0
        %v1242 = vadd.f32 0.0, %v1241
        %v1243 = vpop.f32.mrb[0].mxu0
        %1244 = vmatprep.mubr.bf16.mxu0 0
        %1245 = vmatmul.mubr.bf16.gmra.mrb[0].mxu0 %v601
        %v1246 = vpop.f32.mrb[0].mxu0
        %v1247 = vadd.f32 0.0, %v1246
        %v1248 = vpop.f32.mrb[0].mxu0
        %v1249 = vpop.f32.mrb[0].mxu0
        %v1250 = vadd.f32 0.0, %v1249
        %v1251 = vpop.f32.mrb[0].mxu0
        %1252 = vmatprep.mubr.bf16.mxu0 0
        %1253 = vmatmul.mubr.bf16.gmra.mrb[0].mxu0 %v604
        %v1254 = vpop.f32.mrb[0].mxu0
        %v1255 = vadd.f32 0.0, %v1254
        %v1256 = vpop.f32.mrb[0].mxu0
        %v1257 = vpop.f32.mrb[0].mxu0
        %v1258 = vadd.f32 0.0, %v1257
        %v1259 = vpop.f32.mrb[0].mxu0
        %1260 = vmatprep.mubr.bf16.mxu0 0
        %1261 = vmatmul.mubr.bf16.gmra.mrb[0].mxu0 %v607
        %v1262 = vpop.f32.mrb[0].mxu0
        %v1263 = vadd.f32 0.0, %v1262
        %v1264 = vpop.f32.mrb[0].mxu0
        %v1265 = vpop.f32.mrb[0].mxu0
        %v1266 = vadd.f32 0.0, %v1265
        %v1267 = vpop.f32.mrb[0].mxu0
        %1268 = vmatprep.mubr.bf16.mxu0 0
        %1269 = vmatmul.mubr.bf16.gmra.mrb[0].mxu0 %v586
        %v1270 = vpop.f32.mrb[0].mxu0
        %v1271 = vadd.f32 0.0, %v1270
        %v1272 = vpop.f32.mrb[0].mxu0
        %v1273 = vpop.f32.mrb[0].mxu0
        %v1274 = vadd.f32 0.0, %v1273
        %v1275 = vpop.f32.mrb[0].mxu0
        %1276 = vmatprep.mubr.bf16.mxu0 0
        %1277 = vmatmul.mubr.bf16.gmra.mrb[0].mxu0 %v613
        %v1278 = vpop.f32.mrb[0].mxu0
        %v1279 = vadd.f32 0.0, %v1278
        %v1280 = vpop.f32.mrb[0].mxu0
        %v1281 = vpop.f32.mrb[0].mxu0
        %v1282 = vadd.f32 0.0, %v1281
        %v1283 = vpop.f32.mrb[0].mxu0
        %1284 = vmatprep.mubr.bf16.mxu0 0
        %1285 = vmatmul.mubr.bf16.gmra.mrb[0].mxu0 %v616
        %v1286 = vpop.f32.mrb[0].mxu0
        %v1287 = vadd.f32 0.0, %v1286
        %v1288 = vpop.f32.mrb[0].mxu0
        %v1289 = vpop.f32.mrb[0].mxu0
        %v1290 = vadd.f32 0.0, %v1289
        %v1291 = vpop.f32.mrb[0].mxu0
        %1292 = vmatprep.mubr.bf16.mxu0 0
        %1293 = vmatmul.mubr.bf16.gmra.mrb[0].mxu0 %v619
        %v1294 = vpop.f32.mrb[0].mxu0
        %v1295 = vadd.f32 0.0, %v1294
        %v1296 = vpop.f32.mrb[0].mxu0
        %v1297 = vpop.f32.mrb[0].mxu0
        %v1298 = vadd.f32 0.0, %v1297
        %v1299 = vpop.f32.mrb[0].mxu0
        %1300 = vmatprep.mubr.bf16.mxu0 0
        %1301 = vmatmul.mubr.bf16.gmra.mrb[0].mxu0 %v586
        %v1302 = vpop.f32.mrb[0].mxu0
        %v1303 = vadd.f32 0.0, %v1302
        %v1304 = vpop.f32.mrb[0].mxu0
        %v1305 = vpop.f32.mrb[0].mxu0
        %v1306 = vadd.f32 0.0, %v1305
        %v1307 = vpop.f32.mrb[0].mxu0
        %1308 = vmatprep.mubr.bf16.mxu0 0
        %1309 = vmatmul.mubr.bf16.gmra.mrb[0].mxu0 %v1164
        %v1310 = vpop.f32.mrb[0].mxu0
        %v1311 = vadd.f32 0.0, %v1310
        %v1312 = vpop.f32.mrb[0].mxu0
        %v1313 = vpop.f32.mrb[0].mxu0
        %v1314 = vadd.f32 0.0, %v1313
        %v1315 = vpop.f32.mrb[0].mxu0
        %1316 = vmatprep.mubr.bf16.mxu0 0
        %1317 = vmatmul.mubr.bf16.gmra.mrb[0].mxu0 %v1167
        %v1318 = vpop.f32.mrb[0].mxu0
        %v1319 = vadd.f32 0.0, %v1318
        %v1320 = vpop.f32.mrb[0].mxu0
        %v1321 = vpop.f32.mrb[0].mxu0
        %v1322 = vadd.f32 0.0, %v1321
        %v1323 = vpop.f32.mrb[0].mxu0
        %1324 = vmatprep.mubr.bf16.mxu0 0
        %1325 = vmatmul.mubr.bf16.gmra.mrb[0].mxu0 %v1170
        %v1326 = vpop.f32.mrb[0].mxu0
        %v1327 = vadd.f32 0.0, %v1326
        %v1328 = vpop.f32.mrb[0].mxu0
        %v1329 = vpop.f32.mrb[0].mxu0
        %v1330 = vadd.f32 0.0, %v1329
        %v1331 = vpop.f32.mrb[0].mxu0
        %1332 = vdwg.mxu0
        %v1333 = vadd.f32 %v1122, %v1207
        %v1334 = vadd.f32 %v1123, %v1210
        %v1335 = vadd.f32 %v1124, %v1215
        %v1336 = vadd.f32 %v1125, %v1218
        %v1337 = vadd.f32 %v1126, %v1223
        %v1338 = vadd.f32 %v1127, %v1226
        %v1339 = vadd.f32 %v1128, %v1231
        %v1340 = vadd.f32 %v1129, %v1234
        %v1341 = vadd.f32 %v1130, %v1239
        %v1342 = vadd.f32 %v1131, %v1242
        %v1343 = vadd.f32 %v1132, %v1247
        %v1344 = vadd.f32 %v1133, %v1250
        %v1345 = vadd.f32 %v1134, %v1255
        %v1346 = vadd.f32 %v1135, %v1258
        %v1347 = vadd.f32 %v1136, %v1263
        %v1348 = vadd.f32 %v1137, %v1266
        %v1349 = vadd.f32 %v1138, %v1271
        %v1350 = vadd.f32 %v1139, %v1274
        %v1351 = vadd.f32 %v1140, %v1279
        %v1352 = vadd.f32 %v1141, %v1282
        %v1353 = vadd.f32 %v1142, %v1287
        %v1354 = vadd.f32 %v1143, %v1290
        %v1355 = vadd.f32 %v1144, %v1295
        %v1356 = vadd.f32 %v1145, %v1298
        %v1357 = vadd.f32 %v1146, %v1303
        %v1358 = vadd.f32 %v1147, %v1306
        %v1359 = vadd.f32 %v1148, %v1311
        %v1360 = vadd.f32 %v1149, %v1314
        %v1361 = vadd.f32 %v1150, %v1319
        %v1362 = vadd.f32 %v1151, %v1322
        %v1363 = vadd.f32 %v1152, %v1327
        %v1364 = vadd.f32 %v1153, %v1330
        %s1365 = scalar_lea.vmem [#allocation3], 32
        %v1366 = vld [vmem:[%s1365] sm:$0xf]
        %v1367 = vld [vmem:[%s1365 + $0x4] sm:$0xf]
        %v1370 = vunpack.c.l.b16 %v1366
        %v1371 = vunpack.c.l.b16 %v1367
        %v1372 = vpack.c.b16 %v1371, %v1370
        %v1375 = vsel %vm584, %v572, 0
        %1377 = vmatprep.subr.bf16.mxu0 0
        %1378 = vmatpush1.bf16.msra.mxu0 %v1372
        %1379 = vmatprep.subr.bf16.mxu0 0
        %1380 = vmatpush1.bf16.msra.mxu0 0
        %1381 = vmatprep.subr.bf16.mxu0 0
        %1382 = vmatpush1.bf16.msra.mxu0 0
        %1383 = vmatprep.subr.bf16.mxu0 0
        %1384 = vmatpush1.bf16.msra.mxu0 0
        %1385 = vmatprep.subr.bf16.mxu0 0
        %1386 = vmatpush1.bf16.msra.mxu0 0
        %1387 = vmatprep.subr.bf16.mxu0 0
        %1388 = vmatpush1.bf16.msra.mxu0 0
        %1389 = vmatprep.subr.bf16.mxu0 0
        %1390 = vmatpush1.bf16.msra.mxu0 0
        %1391 = vmatprep.subr.bf16.mxu0 0
        %1392 = vmatpush1.bf16.msra.mxu0 0
        %1393 = vmatprep.subr.bf16.mxu0 0
        %1394 = vmatpush1.bf16.msra.mxu0 0
        %1395 = vmatprep.subr.bf16.mxu0 0
        %1396 = vmatpush1.bf16.msra.mxu0 0
        %1397 = vmatprep.subr.bf16.mxu0 0
        %1398 = vmatpush1.bf16.msra.mxu0 0
        %1399 = vmatprep.subr.bf16.mxu0 0
        %1400 = vmatpush1.bf16.msra.mxu0 0
        %1401 = vmatprep.subr.bf16.mxu0 0
        %1402 = vmatpush1.bf16.msra.mxu0 0
        %1403 = vmatprep.subr.bf16.mxu0 0
        %1404 = vmatpush1.bf16.msra.mxu0 0
        %1405 = vmatprep.subr.bf16.mxu0 0
        %1406 = vmatpush1.bf16.msra.mxu0 0
        %1407 = vmatprep.subr.bf16.mxu0 0
        %1408 = vmatpush1.bf16.msra.mxu0 0
        %1409 = vmatprep.mubr.bf16.mxu0 0
        %1410 = vmatmul.mubr.bf16.gmra.mrb[0].mxu0 %v589
        %v1411 = vpop.f32.mrb[0].mxu0
        %v1412 = vadd.f32 0.0, %v1411
        %v1413 = vpop.f32.mrb[0].mxu0
        %v1414 = vpop.f32.mrb[0].mxu0
        %v1415 = vadd.f32 0.0, %v1414
        %v1416 = vpop.f32.mrb[0].mxu0
        %1417 = vmatprep.mubr.bf16.mxu0 0
        %1418 = vmatmul.mubr.bf16.gmra.mrb[0].mxu0 %v592
        %v1419 = vpop.f32.mrb[0].mxu0
        %v1420 = vadd.f32 0.0, %v1419
        %v1421 = vpop.f32.mrb[0].mxu0
        %v1422 = vpop.f32.mrb[0].mxu0
        %v1423 = vadd.f32 0.0, %v1422
        %v1424 = vpop.f32.mrb[0].mxu0
        %1425 = vmatprep.mubr.bf16.mxu0 0
        %1426 = vmatmul.mubr.bf16.gmra.mrb[0].mxu0 %v595
        %v1427 = vpop.f32.mrb[0].mxu0
        %v1428 = vadd.f32 0.0, %v1427
        %v1429 = vpop.f32.mrb[0].mxu0
        %v1430 = vpop.f32.mrb[0].mxu0
        %v1431 = vadd.f32 0.0, %v1430
        %v1432 = vpop.f32.mrb[0].mxu0
        %1433 = vmatprep.mubr.bf16.mxu0 0
        %1434 = vmatmul.mubr.bf16.gmra.mrb[0].mxu0 %v598
        %v1435 = vpop.f32.mrb[0].mxu0
        %v1436 = vadd.f32 0.0, %v1435
        %v1437 = vpop.f32.mrb[0].mxu0
        %v1438 = vpop.f32.mrb[0].mxu0
        %v1439 = vadd.f32 0.0, %v1438
        %v1440 = vpop.f32.mrb[0].mxu0
        %1441 = vmatprep.mubr.bf16.mxu0 0
        %1442 = vmatmul.mubr.bf16.gmra.mrb[0].mxu0 %v601
        %v1443 = vpop.f32.mrb[0].mxu0
        %v1444 = vadd.f32 0.0, %v1443
        %v1445 = vpop.f32.mrb[0].mxu0
        %v1446 = vpop.f32.mrb[0].mxu0
        %v1447 = vadd.f32 0.0, %v1446
        %v1448 = vpop.f32.mrb[0].mxu0
        %1449 = vmatprep.mubr.bf16.mxu0 0
        %1450 = vmatmul.mubr.bf16.gmra.mrb[0].mxu0 %v604
        %v1451 = vpop.f32.mrb[0].mxu0
        %v1452 = vadd.f32 0.0, %v1451
        %v1453 = vpop.f32.mrb[0].mxu0
        %v1454 = vpop.f32.mrb[0].mxu0
        %v1455 = vadd.f32 0.0, %v1454
        %v1456 = vpop.f32.mrb[0].mxu0
        %1457 = vmatprep.mubr.bf16.mxu0 0
        %1458 = vmatmul.mubr.bf16.gmra.mrb[0].mxu0 %v607
        %v1459 = vpop.f32.mrb[0].mxu0
        %v1460 = vadd.f32 0.0, %v1459
        %v1461 = vpop.f32.mrb[0].mxu0
        %v1462 = vpop.f32.mrb[0].mxu0
        %v1463 = vadd.f32 0.0, %v1462
        %v1464 = vpop.f32.mrb[0].mxu0
        %1465 = vmatprep.mubr.bf16.mxu0 0
        %1466 = vmatmul.mubr.bf16.gmra.mrb[0].mxu0 %v610
        %v1467 = vpop.f32.mrb[0].mxu0
        %v1468 = vadd.f32 0.0, %v1467
        %v1469 = vpop.f32.mrb[0].mxu0
        %v1470 = vpop.f32.mrb[0].mxu0
        %v1471 = vadd.f32 0.0, %v1470
        %v1472 = vpop.f32.mrb[0].mxu0
        %1473 = vmatprep.mubr.bf16.mxu0 0
        %1474 = vmatmul.mubr.bf16.gmra.mrb[0].mxu0 %v613
        %v1475 = vpop.f32.mrb[0].mxu0
        %v1476 = vadd.f32 0.0, %v1475
        %v1477 = vpop.f32.mrb[0].mxu0
        %v1478 = vpop.f32.mrb[0].mxu0
        %v1479 = vadd.f32 0.0, %v1478
        %v1480 = vpop.f32.mrb[0].mxu0
        %1481 = vmatprep.mubr.bf16.mxu0 0
        %1482 = vmatmul.mubr.bf16.gmra.mrb[0].mxu0 %v616
        %v1483 = vpop.f32.mrb[0].mxu0
        %v1484 = vadd.f32 0.0, %v1483
        %v1485 = vpop.f32.mrb[0].mxu0
        %v1486 = vpop.f32.mrb[0].mxu0
        %v1487 = vadd.f32 0.0, %v1486
        %v1488 = vpop.f32.mrb[0].mxu0
        %1489 = vmatprep.mubr.bf16.mxu0 0
        %1490 = vmatmul.mubr.bf16.gmra.mrb[0].mxu0 %v619
        %v1491 = vpop.f32.mrb[0].mxu0
        %v1492 = vadd.f32 0.0, %v1491
        %v1493 = vpop.f32.mrb[0].mxu0
        %v1494 = vpop.f32.mrb[0].mxu0
        %v1495 = vadd.f32 0.0, %v1494
        %v1496 = vpop.f32.mrb[0].mxu0
        %1497 = vmatprep.mubr.bf16.mxu0 0
        %1498 = vmatmul.mubr.bf16.gmra.mrb[0].mxu0 %v622
        %v1499 = vpop.f32.mrb[0].mxu0
        %v1500 = vadd.f32 0.0, %v1499
        %v1501 = vpop.f32.mrb[0].mxu0
        %v1502 = vpop.f32.mrb[0].mxu0
        %v1503 = vadd.f32 0.0, %v1502
        %v1504 = vpop.f32.mrb[0].mxu0
        %1505 = vmatprep.mubr.bf16.mxu0 0
        %1506 = vmatmul.mubr.bf16.gmra.mrb[0].mxu0 %v1164
        %v1507 = vpop.f32.mrb[0].mxu0
        %v1508 = vadd.f32 0.0, %v1507
        %v1509 = vpop.f32.mrb[0].mxu0
        %v1510 = vpop.f32.mrb[0].mxu0
        %v1511 = vadd.f32 0.0, %v1510
        %v1512 = vpop.f32.mrb[0].mxu0
        %1513 = vmatprep.mubr.bf16.mxu0 0
        %1514 = vmatmul.mubr.bf16.gmra.mrb[0].mxu0 %v1167
        %v1515 = vpop.f32.mrb[0].mxu0
        %v1516 = vadd.f32 0.0, %v1515
        %v1517 = vpop.f32.mrb[0].mxu0
        %v1518 = vpop.f32.mrb[0].mxu0
        %v1519 = vadd.f32 0.0, %v1518
        %v1520 = vpop.f32.mrb[0].mxu0
        %1521 = vmatprep.mubr.bf16.mxu0 0
        %1522 = vmatmul.mubr.bf16.gmra.mrb[0].mxu0 %v1170
        %v1523 = vpop.f32.mrb[0].mxu0
        %v1524 = vadd.f32 0.0, %v1523
        %v1525 = vpop.f32.mrb[0].mxu0
        %v1526 = vpop.f32.mrb[0].mxu0
        %v1527 = vadd.f32 0.0, %v1526
        %v1528 = vpop.f32.mrb[0].mxu0
        %1529 = vmatprep.mubr.bf16.mxu0 0
        %1530 = vmatmul.mubr.bf16.gmra.mrb[0].mxu0 %v1375
        %v1531 = vpop.f32.mrb[0].mxu0
        %v1532 = vadd.f32 0.0, %v1531
        %v1533 = vpop.f32.mrb[0].mxu0
        %v1534 = vpop.f32.mrb[0].mxu0
        %v1535 = vadd.f32 0.0, %v1534
        %v1536 = vpop.f32.mrb[0].mxu0
        %1537 = vdwg.mxu0
        %v1538 = vadd.f32 %v1333, %v1412
        %v1539 = vadd.f32 %v1334, %v1415
        %v1540 = vadd.f32 %v1335, %v1420
        %v1541 = vadd.f32 %v1336, %v1423
        %v1542 = vadd.f32 %v1337, %v1428
        %v1543 = vadd.f32 %v1338, %v1431
        %v1544 = vadd.f32 %v1339, %v1436
        %v1545 = vadd.f32 %v1340, %v1439
        %v1546 = vadd.f32 %v1341, %v1444
        %v1547 = vadd.f32 %v1342, %v1447
        %v1548 = vadd.f32 %v1343, %v1452
        %v1549 = vadd.f32 %v1344, %v1455
        %v1550 = vadd.f32 %v1345, %v1460
        %v1551 = vadd.f32 %v1346, %v1463
        %v1552 = vadd.f32 %v1347, %v1468
        %v1553 = vadd.f32 %v1348, %v1471
        %v1554 = vadd.f32 %v1349, %v1476
        %v1555 = vadd.f32 %v1350, %v1479
        %v1556 = vadd.f32 %v1351, %v1484
        %v1557 = vadd.f32 %v1352, %v1487
        %v1558 = vadd.f32 %v1353, %v1492
        %v1559 = vadd.f32 %v1354, %v1495
        %v1560 = vadd.f32 %v1355, %v1500
        %v1561 = vadd.f32 %v1356, %v1503
        %v1562 = vadd.f32 %v1357, %v1508
        %v1563 = vadd.f32 %v1358, %v1511
        %v1564 = vadd.f32 %v1359, %v1516
        %v1565 = vadd.f32 %v1360, %v1519
        %v1566 = vadd.f32 %v1361, %v1524
        %v1567 = vadd.f32 %v1362, %v1527
        %v1568 = vadd.f32 %v1363, %v1532
        %v1569 = vadd.f32 %v1364, %v1535
        %s1570 = scalar_lea.vmem [#allocation3], 40
        %v1571 = vld [vmem:[%s1570] sm:$0xf]
        %v1572 = vld [vmem:[%s1570 + $0x4] sm:$0xf]
        %v1575 = vunpack.c.l.b16 %v1571
        %v1576 = vunpack.c.l.b16 %v1572
        %v1577 = vpack.c.b16 %v1576, %v1575
        %1579 = vmatprep.subr.bf16.mxu0 0
        %1580 = vmatpush1.bf16.msra.mxu0 %v1577
        %1581 = vmatprep.subr.bf16.mxu0 0
        %1582 = vmatpush1.bf16.msra.mxu0 0
        %1583 = vmatprep.subr.bf16.mxu0 0
        %1584 = vmatpush1.bf16.msra.mxu0 0
        %1585 = vmatprep.subr.bf16.mxu0 0
        %1586 = vmatpush1.bf16.msra.mxu0 0
        %1587 = vmatprep.subr.bf16.mxu0 0
        %1588 = vmatpush1.bf16.msra.mxu0 0
        %1589 = vmatprep.subr.bf16.mxu0 0
        %1590 = vmatpush1.bf16.msra.mxu0 0
        %1591 = vmatprep.subr.bf16.mxu0 0
        %1592 = vmatpush1.bf16.msra.mxu0 0
        %1593 = vmatprep.subr.bf16.mxu0 0
        %1594 = vmatpush1.bf16.msra.mxu0 0
        %1595 = vmatprep.subr.bf16.mxu0 0
        %1596 = vmatpush1.bf16.msra.mxu0 0
        %1597 = vmatprep.subr.bf16.mxu0 0
        %1598 = vmatpush1.bf16.msra.mxu0 0
        %1599 = vmatprep.subr.bf16.mxu0 0
        %1600 = vmatpush1.bf16.msra.mxu0 0
        %1601 = vmatprep.subr.bf16.mxu0 0
        %1602 = vmatpush1.bf16.msra.mxu0 0
        %1603 = vmatprep.subr.bf16.mxu0 0
        %1604 = vmatpush1.bf16.msra.mxu0 0
        %1605 = vmatprep.subr.bf16.mxu0 0
        %1606 = vmatpush1.bf16.msra.mxu0 0
        %1607 = vmatprep.subr.bf16.mxu0 0
        %1608 = vmatpush1.bf16.msra.mxu0 0
        %1609 = vmatprep.subr.bf16.mxu0 0
        %1610 = vmatpush1.bf16.msra.mxu0 0
        %1611 = vmatprep.mubr.bf16.mxu0 0
        %1612 = vmatmul.mubr.bf16.gmra.mrb[0].mxu0 %v592
        %v1613 = vpop.f32.mrb[0].mxu0
        %v1614 = vadd.f32 0.0, %v1613
        %v1615 = vpop.f32.mrb[0].mxu0
        %v1616 = vpop.f32.mrb[0].mxu0
        %v1617 = vadd.f32 0.0, %v1616
        %v1618 = vpop.f32.mrb[0].mxu0
        %1619 = vmatprep.mubr.bf16.mxu0 0
        %1620 = vmatmul.mubr.bf16.gmra.mrb[0].mxu0 %v595
        %v1621 = vpop.f32.mrb[0].mxu0
        %v1622 = vadd.f32 0.0, %v1621
        %v1623 = vpop.f32.mrb[0].mxu0
        %v1624 = vpop.f32.mrb[0].mxu0
        %v1625 = vadd.f32 0.0, %v1624
        %v1626 = vpop.f32.mrb[0].mxu0
        %1627 = vmatprep.mubr.bf16.mxu0 0
        %1628 = vmatmul.mubr.bf16.gmra.mrb[0].mxu0 %v598
        %v1629 = vpop.f32.mrb[0].mxu0
        %v1630 = vadd.f32 0.0, %v1629
        %v1631 = vpop.f32.mrb[0].mxu0
        %v1632 = vpop.f32.mrb[0].mxu0
        %v1633 = vadd.f32 0.0, %v1632
        %v1634 = vpop.f32.mrb[0].mxu0
        %1635 = vmatprep.mubr.bf16.mxu0 0
        %1636 = vmatmul.mubr.bf16.gmra.mrb[0].mxu0 %v586
        %v1637 = vpop.f32.mrb[0].mxu0
        %v1638 = vadd.f32 0.0, %v1637
        %v1639 = vpop.f32.mrb[0].mxu0
        %v1640 = vpop.f32.mrb[0].mxu0
        %v1641 = vadd.f32 0.0, %v1640
        %v1642 = vpop.f32.mrb[0].mxu0
        %1643 = vmatprep.mubr.bf16.mxu0 0
        %1644 = vmatmul.mubr.bf16.gmra.mrb[0].mxu0 %v604
        %v1645 = vpop.f32.mrb[0].mxu0
        %v1646 = vadd.f32 0.0, %v1645
        %v1647 = vpop.f32.mrb[0].mxu0
        %v1648 = vpop.f32.mrb[0].mxu0
        %v1649 = vadd.f32 0.0, %v1648
        %v1650 = vpop.f32.mrb[0].mxu0
        %1651 = vmatprep.mubr.bf16.mxu0 0
        %1652 = vmatmul.mubr.bf16.gmra.mrb[0].mxu0 %v607
        %v1653 = vpop.f32.mrb[0].mxu0
        %v1654 = vadd.f32 0.0, %v1653
        %v1655 = vpop.f32.mrb[0].mxu0
        %v1656 = vpop.f32.mrb[0].mxu0
        %v1657 = vadd.f32 0.0, %v1656
        %v1658 = vpop.f32.mrb[0].mxu0
        %1659 = vmatprep.mubr.bf16.mxu0 0
        %1660 = vmatmul.mubr.bf16.gmra.mrb[0].mxu0 %v610
        %v1661 = vpop.f32.mrb[0].mxu0
        %v1662 = vadd.f32 0.0, %v1661
        %v1663 = vpop.f32.mrb[0].mxu0
        %v1664 = vpop.f32.mrb[0].mxu0
        %v1665 = vadd.f32 0.0, %v1664
        %v1666 = vpop.f32.mrb[0].mxu0
        %1667 = vmatprep.mubr.bf16.mxu0 0
        %1668 = vmatmul.mubr.bf16.gmra.mrb[0].mxu0 %v586
        %v1669 = vpop.f32.mrb[0].mxu0
        %v1670 = vadd.f32 0.0, %v1669
        %v1671 = vpop.f32.mrb[0].mxu0
        %v1672 = vpop.f32.mrb[0].mxu0
        %v1673 = vadd.f32 0.0, %v1672
        %v1674 = vpop.f32.mrb[0].mxu0
        %1675 = vmatprep.mubr.bf16.mxu0 0
        %1676 = vmatmul.mubr.bf16.gmra.mrb[0].mxu0 %v616
        %v1677 = vpop.f32.mrb[0].mxu0
        %v1678 = vadd.f32 0.0, %v1677
        %v1679 = vpop.f32.mrb[0].mxu0
        %v1680 = vpop.f32.mrb[0].mxu0
        %v1681 = vadd.f32 0.0, %v1680
        %v1682 = vpop.f32.mrb[0].mxu0
        %1683 = vmatprep.mubr.bf16.mxu0 0
        %1684 = vmatmul.mubr.bf16.gmra.mrb[0].mxu0 %v619
        %v1685 = vpop.f32.mrb[0].mxu0
        %v1686 = vadd.f32 0.0, %v1685
        %v1687 = vpop.f32.mrb[0].mxu0
        %v1688 = vpop.f32.mrb[0].mxu0
        %v1689 = vadd.f32 0.0, %v1688
        %v1690 = vpop.f32.mrb[0].mxu0
        %1691 = vmatprep.mubr.bf16.mxu0 0
        %1692 = vmatmul.mubr.bf16.gmra.mrb[0].mxu0 %v622
        %v1693 = vpop.f32.mrb[0].mxu0
        %v1694 = vadd.f32 0.0, %v1693
        %v1695 = vpop.f32.mrb[0].mxu0
        %v1696 = vpop.f32.mrb[0].mxu0
        %v1697 = vadd.f32 0.0, %v1696
        %v1698 = vpop.f32.mrb[0].mxu0
        %1699 = vmatprep.mubr.bf16.mxu0 0
        %1700 = vmatmul.mubr.bf16.gmra.mrb[0].mxu0 %v586
        %v1701 = vpop.f32.mrb[0].mxu0
        %v1702 = vadd.f32 0.0, %v1701
        %v1703 = vpop.f32.mrb[0].mxu0
        %v1704 = vpop.f32.mrb[0].mxu0
        %v1705 = vadd.f32 0.0, %v1704
        %v1706 = vpop.f32.mrb[0].mxu0
        %1707 = vmatprep.mubr.bf16.mxu0 0
        %1708 = vmatmul.mubr.bf16.gmra.mrb[0].mxu0 %v1167
        %v1709 = vpop.f32.mrb[0].mxu0
        %v1710 = vadd.f32 0.0, %v1709
        %v1711 = vpop.f32.mrb[0].mxu0
        %v1712 = vpop.f32.mrb[0].mxu0
        %v1713 = vadd.f32 0.0, %v1712
        %v1714 = vpop.f32.mrb[0].mxu0
        %1715 = vmatprep.mubr.bf16.mxu0 0
        %1716 = vmatmul.mubr.bf16.gmra.mrb[0].mxu0 %v1170
        %v1717 = vpop.f32.mrb[0].mxu0
        %v1718 = vadd.f32 0.0, %v1717
        %v1719 = vpop.f32.mrb[0].mxu0
        %v1720 = vpop.f32.mrb[0].mxu0
        %v1721 = vadd.f32 0.0, %v1720
        %v1722 = vpop.f32.mrb[0].mxu0
        %1723 = vmatprep.mubr.bf16.mxu0 0
        %1724 = vmatmul.mubr.bf16.gmra.mrb[0].mxu0 %v1375
        %v1725 = vpop.f32.mrb[0].mxu0
        %v1726 = vadd.f32 0.0, %v1725
        %v1727 = vpop.f32.mrb[0].mxu0
        %v1728 = vpop.f32.mrb[0].mxu0
        %v1729 = vadd.f32 0.0, %v1728
        %v1730 = vpop.f32.mrb[0].mxu0
        %1731 = vmatprep.mubr.bf16.mxu0 0
        %1732 = vmatmul.mubr.bf16.gmra.mrb[0].mxu0 %v586
        %v1733 = vpop.f32.mrb[0].mxu0
        %v1734 = vadd.f32 0.0, %v1733
        %v1735 = vpop.f32.mrb[0].mxu0
        %v1736 = vpop.f32.mrb[0].mxu0
        %v1737 = vadd.f32 0.0, %v1736
        %v1738 = vpop.f32.mrb[0].mxu0
        %1739 = vdwg.mxu0
        %v1740 = vadd.f32 %v1538, %v1614
        %v1741 = vadd.f32 %v1539, %v1617
        %v1742 = vadd.f32 %v1540, %v1622
        %v1743 = vadd.f32 %v1541, %v1625
        %v1744 = vadd.f32 %v1542, %v1630
        %v1745 = vadd.f32 %v1543, %v1633
        %v1746 = vadd.f32 %v1544, %v1638
        %v1747 = vadd.f32 %v1545, %v1641
        %v1748 = vadd.f32 %v1546, %v1646
        %v1749 = vadd.f32 %v1547, %v1649
        %v1750 = vadd.f32 %v1548, %v1654
        %v1751 = vadd.f32 %v1549, %v1657
        %v1752 = vadd.f32 %v1550, %v1662
        %v1753 = vadd.f32 %v1551, %v1665
        %v1754 = vadd.f32 %v1552, %v1670
        %v1755 = vadd.f32 %v1553, %v1673
        %v1756 = vadd.f32 %v1554, %v1678
        %v1757 = vadd.f32 %v1555, %v1681
        %v1758 = vadd.f32 %v1556, %v1686
        %v1759 = vadd.f32 %v1557, %v1689
        %v1760 = vadd.f32 %v1558, %v1694
        %v1761 = vadd.f32 %v1559, %v1697
        %v1762 = vadd.f32 %v1560, %v1702
        %v1763 = vadd.f32 %v1561, %v1705
        %v1764 = vadd.f32 %v1562, %v1710
        %v1765 = vadd.f32 %v1563, %v1713
        %v1766 = vadd.f32 %v1564, %v1718
        %v1767 = vadd.f32 %v1565, %v1721
        %v1768 = vadd.f32 %v1566, %v1726
        %v1769 = vadd.f32 %v1567, %v1729
        %v1770 = vadd.f32 %v1568, %v1734
        %v1771 = vadd.f32 %v1569, %v1737
        %s1772 = scalar_lea.vmem [#allocation3], 48
        %v1773 = vld [vmem:[%s1772] sm:$0xf]
        %v1774 = vld [vmem:[%s1772 + $0x4] sm:$0xf]
        %v1777 = vunpack.c.l.b16 %v1773
        %v1778 = vunpack.c.l.b16 %v1774
        %v1779 = vpack.c.b16 %v1778, %v1777
        %1781 = vmatprep.subr.bf16.mxu0 0
        %1782 = vmatpush1.bf16.msra.mxu0 %v1779
        %1783 = vmatprep.subr.bf16.mxu0 0
        %1784 = vmatpush1.bf16.msra.mxu0 0
        %1785 = vmatprep.subr.bf16.mxu0 0
        %1786 = vmatpush1.bf16.msra.mxu0 0
        %1787 = vmatprep.subr.bf16.mxu0 0
        %1788 = vmatpush1.bf16.msra.mxu0 0
        %1789 = vmatprep.subr.bf16.mxu0 0
        %1790 = vmatpush1.bf16.msra.mxu0 0
        %1791 = vmatprep.subr.bf16.mxu0 0
        %1792 = vmatpush1.bf16.msra.mxu0 0
        %1793 = vmatprep.subr.bf16.mxu0 0
        %1794 = vmatpush1.bf16.msra.mxu0 0
        %1795 = vmatprep.subr.bf16.mxu0 0
        %1796 = vmatpush1.bf16.msra.mxu0 0
        %1797 = vmatprep.subr.bf16.mxu0 0
        %1798 = vmatpush1.bf16.msra.mxu0 0
        %1799 = vmatprep.subr.bf16.mxu0 0
        %1800 = vmatpush1.bf16.msra.mxu0 0
        %1801 = vmatprep.subr.bf16.mxu0 0
        %1802 = vmatpush1.bf16.msra.mxu0 0
        %1803 = vmatprep.subr.bf16.mxu0 0
        %1804 = vmatpush1.bf16.msra.mxu0 0
        %1805 = vmatprep.subr.bf16.mxu0 0
        %1806 = vmatpush1.bf16.msra.mxu0 0
        %1807 = vmatprep.subr.bf16.mxu0 0
        %1808 = vmatpush1.bf16.msra.mxu0 0
        %1809 = vmatprep.subr.bf16.mxu0 0
        %1810 = vmatpush1.bf16.msra.mxu0 0
        %1811 = vmatprep.subr.bf16.mxu0 0
        %1812 = vmatpush1.bf16.msra.mxu0 0
        %1813 = vmatprep.mubr.bf16.mxu0 0
        %1814 = vmatmul.mubr.bf16.gmra.mrb[0].mxu0 %v586
        %v1815 = vpop.f32.mrb[0].mxu0
        %v1816 = vadd.f32 0.0, %v1815
        %v1817 = vpop.f32.mrb[0].mxu0
        %v1818 = vpop.f32.mrb[0].mxu0
        %v1819 = vadd.f32 0.0, %v1818
        %v1820 = vpop.f32.mrb[0].mxu0
        %1821 = vmatprep.mubr.bf16.mxu0 0
        %1822 = vmatmul.mubr.bf16.gmra.mrb[0].mxu0 %v601
        %v1823 = vpop.f32.mrb[0].mxu0
        %v1824 = vadd.f32 0.0, %v1823
        %v1825 = vpop.f32.mrb[0].mxu0
        %v1826 = vpop.f32.mrb[0].mxu0
        %v1827 = vadd.f32 0.0, %v1826
        %v1828 = vpop.f32.mrb[0].mxu0
        %1829 = vmatprep.mubr.bf16.mxu0 0
        %1830 = vmatmul.mubr.bf16.gmra.mrb[0].mxu0 %v604
        %v1831 = vpop.f32.mrb[0].mxu0
        %v1832 = vadd.f32 0.0, %v1831
        %v1833 = vpop.f32.mrb[0].mxu0
        %v1834 = vpop.f32.mrb[0].mxu0
        %v1835 = vadd.f32 0.0, %v1834
        %v1836 = vpop.f32.mrb[0].mxu0
        %1837 = vmatprep.mubr.bf16.mxu0 0
        %1838 = vmatmul.mubr.bf16.gmra.mrb[0].mxu0 %v607
        %v1839 = vpop.f32.mrb[0].mxu0
        %v1840 = vadd.f32 0.0, %v1839
        %v1841 = vpop.f32.mrb[0].mxu0
        %v1842 = vpop.f32.mrb[0].mxu0
        %v1843 = vadd.f32 0.0, %v1842
        %v1844 = vpop.f32.mrb[0].mxu0
        %1845 = vmatprep.mubr.bf16.mxu0 0
        %1846 = vmatmul.mubr.bf16.gmra.mrb[0].mxu0 %v586
        %v1847 = vpop.f32.mrb[0].mxu0
        %v1848 = vadd.f32 0.0, %v1847
        %v1849 = vpop.f32.mrb[0].mxu0
        %v1850 = vpop.f32.mrb[0].mxu0
        %v1851 = vadd.f32 0.0, %v1850
        %v1852 = vpop.f32.mrb[0].mxu0
        %1853 = vmatprep.mubr.bf16.mxu0 0
        %1854 = vmatmul.mubr.bf16.gmra.mrb[0].mxu0 %v613
        %v1855 = vpop.f32.mrb[0].mxu0
        %v1856 = vadd.f32 0.0, %v1855
        %v1857 = vpop.f32.mrb[0].mxu0
        %v1858 = vpop.f32.mrb[0].mxu0
        %v1859 = vadd.f32 0.0, %v1858
        %v1860 = vpop.f32.mrb[0].mxu0
        %1861 = vmatprep.mubr.bf16.mxu0 0
        %1862 = vmatmul.mubr.bf16.gmra.mrb[0].mxu0 %v616
        %v1863 = vpop.f32.mrb[0].mxu0
        %v1864 = vadd.f32 0.0, %v1863
        %v1865 = vpop.f32.mrb[0].mxu0
        %v1866 = vpop.f32.mrb[0].mxu0
        %v1867 = vadd.f32 0.0, %v1866
        %v1868 = vpop.f32.mrb[0].mxu0
        %1869 = vmatprep.mubr.bf16.mxu0 0
        %1870 = vmatmul.mubr.bf16.gmra.mrb[0].mxu0 %v619
        %v1871 = vpop.f32.mrb[0].mxu0
        %v1872 = vadd.f32 0.0, %v1871
        %v1873 = vpop.f32.mrb[0].mxu0
        %v1874 = vpop.f32.mrb[0].mxu0
        %v1875 = vadd.f32 0.0, %v1874
        %v1876 = vpop.f32.mrb[0].mxu0
        %1877 = vmatprep.mubr.bf16.mxu0 0
        %1878 = vmatmul.mubr.bf16.gmra.mrb[0].mxu0 %v586
        %v1879 = vpop.f32.mrb[0].mxu0
        %v1880 = vadd.f32 0.0, %v1879
        %v1881 = vpop.f32.mrb[0].mxu0
        %v1882 = vpop.f32.mrb[0].mxu0
        %v1883 = vadd.f32 0.0, %v1882
        %v1884 = vpop.f32.mrb[0].mxu0
        %1885 = vmatprep.mubr.bf16.mxu0 0
        %1886 = vmatmul.mubr.bf16.gmra.mrb[0].mxu0 %v1164
        %v1887 = vpop.f32.mrb[0].mxu0
        %v1888 = vadd.f32 0.0, %v1887
        %v1889 = vpop.f32.mrb[0].mxu0
        %v1890 = vpop.f32.mrb[0].mxu0
        %v1891 = vadd.f32 0.0, %v1890
        %v1892 = vpop.f32.mrb[0].mxu0
        %1893 = vmatprep.mubr.bf16.mxu0 0
        %1894 = vmatmul.mubr.bf16.gmra.mrb[0].mxu0 %v1167
        %v1895 = vpop.f32.mrb[0].mxu0
        %v1896 = vadd.f32 0.0, %v1895
        %v1897 = vpop.f32.mrb[0].mxu0
        %v1898 = vpop.f32.mrb[0].mxu0
        %v1899 = vadd.f32 0.0, %v1898
        %v1900 = vpop.f32.mrb[0].mxu0
        %1901 = vmatprep.mubr.bf16.mxu0 0
        %1902 = vmatmul.mubr.bf16.gmra.mrb[0].mxu0 %v1170
        %v1903 = vpop.f32.mrb[0].mxu0
        %v1904 = vadd.f32 0.0, %v1903
        %v1905 = vpop.f32.mrb[0].mxu0
        %v1906 = vpop.f32.mrb[0].mxu0
        %v1907 = vadd.f32 0.0, %v1906
        %v1908 = vpop.f32.mrb[0].mxu0
        %1909 = vmatprep.mubr.bf16.mxu0 0
        %1910 = vmatmul.mubr.bf16.gmra.mrb[0].mxu0 %v586
        %v1911 = vpop.f32.mrb[0].mxu0
        %v1912 = vadd.f32 0.0, %v1911
        %v1913 = vpop.f32.mrb[0].mxu0
        %v1914 = vpop.f32.mrb[0].mxu0
        %v1915 = vadd.f32 0.0, %v1914
        %v1916 = vpop.f32.mrb[0].mxu0
        %1917 = vmatprep.mubr.bf16.mxu0 0
        %1918 = vmatmul.mubr.bf16.gmra.mrb[0].mxu0 %v586
        %v1919 = vpop.f32.mrb[0].mxu0
        %v1920 = vadd.f32 0.0, %v1919
        %v1921 = vpop.f32.mrb[0].mxu0
        %v1922 = vpop.f32.mrb[0].mxu0
        %v1923 = vadd.f32 0.0, %v1922
        %v1924 = vpop.f32.mrb[0].mxu0
        %1925 = vmatprep.mubr.bf16.mxu0 0
        %1926 = vmatmul.mubr.bf16.gmra.mrb[0].mxu0 %v586
        %v1927 = vpop.f32.mrb[0].mxu0
        %v1928 = vadd.f32 0.0, %v1927
        %v1929 = vpop.f32.mrb[0].mxu0
        %v1930 = vpop.f32.mrb[0].mxu0
        %v1931 = vadd.f32 0.0, %v1930
        %v1932 = vpop.f32.mrb[0].mxu0
        %1933 = vmatprep.mubr.bf16.mxu0 0
        %1934 = vmatmul.mubr.bf16.gmra.mrb[0].mxu0 %v586
        %v1935 = vpop.f32.mrb[0].mxu0
        %v1936 = vadd.f32 0.0, %v1935
        %v1937 = vpop.f32.mrb[0].mxu0
        %v1938 = vpop.f32.mrb[0].mxu0
        %v1939 = vadd.f32 0.0, %v1938
        %v1940 = vpop.f32.mrb[0].mxu0
        %1941 = vdwg.mxu0
        %v1942 = vadd.f32 %v1740, %v1816
        %v1943 = vadd.f32 %v1741, %v1819
        %v1944 = vadd.f32 %v1742, %v1824
        %v1945 = vadd.f32 %v1743, %v1827
        %v1946 = vadd.f32 %v1744, %v1832
        %v1947 = vadd.f32 %v1745, %v1835
        %v1948 = vadd.f32 %v1746, %v1840
        %v1949 = vadd.f32 %v1747, %v1843
        %v1950 = vadd.f32 %v1748, %v1848
        %v1951 = vadd.f32 %v1749, %v1851
        %v1952 = vadd.f32 %v1750, %v1856
        %v1953 = vadd.f32 %v1751, %v1859
        %v1954 = vadd.f32 %v1752, %v1864
        %v1955 = vadd.f32 %v1753, %v1867
        %v1956 = vadd.f32 %v1754, %v1872
        %v1957 = vadd.f32 %v1755, %v1875
        %v1958 = vadd.f32 %v1756, %v1880
        %v1959 = vadd.f32 %v1757, %v1883
        %v1960 = vadd.f32 %v1758, %v1888
        %v1961 = vadd.f32 %v1759, %v1891
        %v1962 = vadd.f32 %v1760, %v1896
        %v1963 = vadd.f32 %v1761, %v1899
        %v1964 = vadd.f32 %v1762, %v1904
        %v1965 = vadd.f32 %v1763, %v1907
        %v1966 = vadd.f32 %v1764, %v1912
        %v1967 = vadd.f32 %v1765, %v1915
        %v1968 = vadd.f32 %v1766, %v1920
        %v1969 = vadd.f32 %v1767, %v1923
        %v1970 = vadd.f32 %v1768, %v1928
        %v1971 = vadd.f32 %v1769, %v1931
        %v1972 = vadd.f32 %v1770, %v1936
        %v1973 = vadd.f32 %v1771, %v1939
        %s1974 = scalar_lea.vmem [#allocation3], 56
        %v1975 = vld [vmem:[%s1974] sm:$0xf]
        %v1976 = vld [vmem:[%s1974 + $0x4] sm:$0xf]
        %v1979 = vunpack.c.l.b16 %v1975
        %v1980 = vunpack.c.l.b16 %v1976
        %v1981 = vpack.c.b16 %v1980, %v1979
        %1983 = vmatprep.subr.bf16.mxu0 0
        %1984 = vmatpush1.bf16.msra.mxu0 %v1981
        %1985 = vmatprep.subr.bf16.mxu0 0
        %1986 = vmatpush1.bf16.msra.mxu0 0
        %1987 = vmatprep.subr.bf16.mxu0 0
        %1988 = vmatpush1.bf16.msra.mxu0 0
        %1989 = vmatprep.subr.bf16.mxu0 0
        %1990 = vmatpush1.bf16.msra.mxu0 0
        %1991 = vmatprep.subr.bf16.mxu0 0
        %1992 = vmatpush1.bf16.msra.mxu0 0
        %1993 = vmatprep.subr.bf16.mxu0 0
        %1994 = vmatpush1.bf16.msra.mxu0 0
        %1995 = vmatprep.subr.bf16.mxu0 0
        %1996 = vmatpush1.bf16.msra.mxu0 0
        %1997 = vmatprep.subr.bf16.mxu0 0
        %1998 = vmatpush1.bf16.msra.mxu0 0
        %1999 = vmatprep.subr.bf16.mxu0 0
        %2000 = vmatpush1.bf16.msra.mxu0 0
        %2001 = vmatprep.subr.bf16.mxu0 0
        %2002 = vmatpush1.bf16.msra.mxu0 0
        %2003 = vmatprep.subr.bf16.mxu0 0
        %2004 = vmatpush1.bf16.msra.mxu0 0
        %2005 = vmatprep.subr.bf16.mxu0 0
        %2006 = vmatpush1.bf16.msra.mxu0 0
        %2007 = vmatprep.subr.bf16.mxu0 0
        %2008 = vmatpush1.bf16.msra.mxu0 0
        %2009 = vmatprep.subr.bf16.mxu0 0
        %2010 = vmatpush1.bf16.msra.mxu0 0
        %2011 = vmatprep.subr.bf16.mxu0 0
        %2012 = vmatpush1.bf16.msra.mxu0 0
        %2013 = vmatprep.subr.bf16.mxu0 0
        %2014 = vmatpush1.bf16.msra.mxu0 0
        %2015 = vmatprep.mubr.bf16.mxu0 0
        %2016 = vmatmul.mubr.bf16.gmra.mrb[0].mxu0 %v601
        %v2017 = vpop.f32.mrb[0].mxu0
        %v2018 = vadd.f32 0.0, %v2017
        %v2019 = vpop.f32.mrb[0].mxu0
        %v2020 = vpop.f32.mrb[0].mxu0
        %v2021 = vadd.f32 0.0, %v2020
        %v2022 = vpop.f32.mrb[0].mxu0
        %2023 = vmatprep.mubr.bf16.mxu0 0
        %2024 = vmatmul.mubr.bf16.gmra.mrb[0].mxu0 %v604
        %v2025 = vpop.f32.mrb[0].mxu0
        %v2026 = vadd.f32 0.0, %v2025
        %v2027 = vpop.f32.mrb[0].mxu0
        %v2028 = vpop.f32.mrb[0].mxu0
        %v2029 = vadd.f32 0.0, %v2028
        %v2030 = vpop.f32.mrb[0].mxu0
        %2031 = vmatprep.mubr.bf16.mxu0 0
        %2032 = vmatmul.mubr.bf16.gmra.mrb[0].mxu0 %v607
        %v2033 = vpop.f32.mrb[0].mxu0
        %v2034 = vadd.f32 0.0, %v2033
        %v2035 = vpop.f32.mrb[0].mxu0
        %v2036 = vpop.f32.mrb[0].mxu0
        %v2037 = vadd.f32 0.0, %v2036
        %v2038 = vpop.f32.mrb[0].mxu0
        %2039 = vmatprep.mubr.bf16.mxu0 0
        %2040 = vmatmul.mubr.bf16.gmra.mrb[0].mxu0 %v610
        %v2041 = vpop.f32.mrb[0].mxu0
        %v2042 = vadd.f32 0.0, %v2041
        %v2043 = vpop.f32.mrb[0].mxu0
        %v2044 = vpop.f32.mrb[0].mxu0
        %v2045 = vadd.f32 0.0, %v2044
        %v2046 = vpop.f32.mrb[0].mxu0
        %2047 = vmatprep.mubr.bf16.mxu0 0
        %2048 = vmatmul.mubr.bf16.gmra.mrb[0].mxu0 %v613
        %v2049 = vpop.f32.mrb[0].mxu0
        %v2050 = vadd.f32 0.0, %v2049
        %v2051 = vpop.f32.mrb[0].mxu0
        %v2052 = vpop.f32.mrb[0].mxu0
        %v2053 = vadd.f32 0.0, %v2052
        %v2054 = vpop.f32.mrb[0].mxu0
        %2055 = vmatprep.mubr.bf16.mxu0 0
        %2056 = vmatmul.mubr.bf16.gmra.mrb[0].mxu0 %v616
        %v2057 = vpop.f32.mrb[0].mxu0
        %v2058 = vadd.f32 0.0, %v2057
        %v2059 = vpop.f32.mrb[0].mxu0
        %v2060 = vpop.f32.mrb[0].mxu0
        %v2061 = vadd.f32 0.0, %v2060
        %v2062 = vpop.f32.mrb[0].mxu0
        %2063 = vmatprep.mubr.bf16.mxu0 0
        %2064 = vmatmul.mubr.bf16.gmra.mrb[0].mxu0 %v619
        %v2065 = vpop.f32.mrb[0].mxu0
        %v2066 = vadd.f32 0.0, %v2065
        %v2067 = vpop.f32.mrb[0].mxu0
        %v2068 = vpop.f32.mrb[0].mxu0
        %v2069 = vadd.f32 0.0, %v2068
        %v2070 = vpop.f32.mrb[0].mxu0
        %2071 = vmatprep.mubr.bf16.mxu0 0
        %2072 = vmatmul.mubr.bf16.gmra.mrb[0].mxu0 %v622
        %v2073 = vpop.f32.mrb[0].mxu0
        %v2074 = vadd.f32 0.0, %v2073
        %v2075 = vpop.f32.mrb[0].mxu0
        %v2076 = vpop.f32.mrb[0].mxu0
        %v2077 = vadd.f32 0.0, %v2076
        %v2078 = vpop.f32.mrb[0].mxu0
        %2079 = vmatprep.mubr.bf16.mxu0 0
        %2080 = vmatmul.mubr.bf16.gmra.mrb[0].mxu0 %v1164
        %v2081 = vpop.f32.mrb[0].mxu0
        %v2082 = vadd.f32 0.0, %v2081
        %v2083 = vpop.f32.mrb[0].mxu0
        %v2084 = vpop.f32.mrb[0].mxu0
        %v2085 = vadd.f32 0.0, %v2084
        %v2086 = vpop.f32.mrb[0].mxu0
        %2087 = vmatprep.mubr.bf16.mxu0 0
        %2088 = vmatmul.mubr.bf16.gmra.mrb[0].mxu0 %v1167
        %v2089 = vpop.f32.mrb[0].mxu0
        %v2090 = vadd.f32 0.0, %v2089
        %v2091 = vpop.f32.mrb[0].mxu0
        %v2092 = vpop.f32.mrb[0].mxu0
        %v2093 = vadd.f32 0.0, %v2092
        %v2094 = vpop.f32.mrb[0].mxu0
        %2095 = vmatprep.mubr.bf16.mxu0 0
        %2096 = vmatmul.mubr.bf16.gmra.mrb[0].mxu0 %v1170
        %v2097 = vpop.f32.mrb[0].mxu0
        %v2098 = vadd.f32 0.0, %v2097
        %v2099 = vpop.f32.mrb[0].mxu0
        %v2100 = vpop.f32.mrb[0].mxu0
        %v2101 = vadd.f32 0.0, %v2100
        %v2102 = vpop.f32.mrb[0].mxu0
        %2103 = vmatprep.mubr.bf16.mxu0 0
        %2104 = vmatmul.mubr.bf16.gmra.mrb[0].mxu0 %v1375
        %v2105 = vpop.f32.mrb[0].mxu0
        %v2106 = vadd.f32 0.0, %v2105
        %v2107 = vpop.f32.mrb[0].mxu0
        %v2108 = vpop.f32.mrb[0].mxu0
        %v2109 = vadd.f32 0.0, %v2108
        %v2110 = vpop.f32.mrb[0].mxu0
        %2111 = vmatprep.mubr.bf16.mxu0 0
        %2112 = vmatmul.mubr.bf16.gmra.mrb[0].mxu0 %v586
        %v2113 = vpop.f32.mrb[0].mxu0
        %v2114 = vadd.f32 0.0, %v2113
        %v2115 = vpop.f32.mrb[0].mxu0
        %v2116 = vpop.f32.mrb[0].mxu0
        %v2117 = vadd.f32 0.0, %v2116
        %v2118 = vpop.f32.mrb[0].mxu0
        %2119 = vmatprep.mubr.bf16.mxu0 0
        %2120 = vmatmul.mubr.bf16.gmra.mrb[0].mxu0 %v586
        %v2121 = vpop.f32.mrb[0].mxu0
        %v2122 = vadd.f32 0.0, %v2121
        %v2123 = vpop.f32.mrb[0].mxu0
        %v2124 = vpop.f32.mrb[0].mxu0
        %v2125 = vadd.f32 0.0, %v2124
        %v2126 = vpop.f32.mrb[0].mxu0
        %2127 = vmatprep.mubr.bf16.mxu0 0
        %2128 = vmatmul.mubr.bf16.gmra.mrb[0].mxu0 %v586
        %v2129 = vpop.f32.mrb[0].mxu0
        %v2130 = vadd.f32 0.0, %v2129
        %v2131 = vpop.f32.mrb[0].mxu0
        %v2132 = vpop.f32.mrb[0].mxu0
        %v2133 = vadd.f32 0.0, %v2132
        %v2134 = vpop.f32.mrb[0].mxu0
        %2135 = vmatprep.mubr.bf16.mxu0 0
        %2136 = vmatmul.mubr.bf16.gmra.mrb[0].mxu0 %v586
        %v2137 = vpop.f32.mrb[0].mxu0
        %v2138 = vadd.f32 0.0, %v2137
        %v2139 = vpop.f32.mrb[0].mxu0
        %v2140 = vpop.f32.mrb[0].mxu0
        %v2141 = vadd.f32 0.0, %v2140
        %v2142 = vpop.f32.mrb[0].mxu0
        %2143 = vdwg.mxu0
        %v2144 = vadd.f32 %v1942, %v2018
        %v2145 = vadd.f32 %v1943, %v2021
        %v2146 = vadd.f32 %v1944, %v2026
        %v2147 = vadd.f32 %v1945, %v2029
        %v2148 = vadd.f32 %v1946, %v2034
        %v2149 = vadd.f32 %v1947, %v2037
        %v2150 = vadd.f32 %v1948, %v2042
        %v2151 = vadd.f32 %v1949, %v2045
        %v2152 = vadd.f32 %v1950, %v2050
        %v2153 = vadd.f32 %v1951, %v2053
        %v2154 = vadd.f32 %v1952, %v2058
        %v2155 = vadd.f32 %v1953, %v2061
        %v2156 = vadd.f32 %v1954, %v2066
        %v2157 = vadd.f32 %v1955, %v2069
        %v2158 = vadd.f32 %v1956, %v2074
        %v2159 = vadd.f32 %v1957, %v2077
        %v2160 = vadd.f32 %v1958, %v2082
        %v2161 = vadd.f32 %v1959, %v2085
        %v2162 = vadd.f32 %v1960, %v2090
        %v2163 = vadd.f32 %v1961, %v2093
        %v2164 = vadd.f32 %v1962, %v2098
        %v2165 = vadd.f32 %v1963, %v2101
        %v2166 = vadd.f32 %v1964, %v2106
        %v2167 = vadd.f32 %v1965, %v2109
        %v2168 = vadd.f32 %v1966, %v2114
        %v2169 = vadd.f32 %v1967, %v2117
        %v2170 = vadd.f32 %v1968, %v2122
        %v2171 = vadd.f32 %v1969, %v2125
        %v2172 = vadd.f32 %v1970, %v2130
        %v2173 = vadd.f32 %v1971, %v2133
        %v2174 = vadd.f32 %v1972, %v2138
        %v2175 = vadd.f32 %v1973, %v2141
        %s2176 = scalar_lea.vmem [#allocation3], 64
        %v2177 = vld [vmem:[%s2176] sm:$0xf]
        %v2178 = vld [vmem:[%s2176 + $0x4] sm:$0xf]
        %v2181 = vunpack.c.l.b16 %v2177
        %v2182 = vunpack.c.l.b16 %v2178
        %v2183 = vpack.c.b16 %v2182, %v2181
        %2185 = vmatprep.subr.bf16.mxu0 0
        %2186 = vmatpush1.bf16.msra.mxu0 %v2183
        %2187 = vmatprep.subr.bf16.mxu0 0
        %2188 = vmatpush1.bf16.msra.mxu0 0
        %2189 = vmatprep.subr.bf16.mxu0 0
        %2190 = vmatpush1.bf16.msra.mxu0 0
        %2191 = vmatprep.subr.bf16.mxu0 0
        %2192 = vmatpush1.bf16.msra.mxu0 0
        %2193 = vmatprep.subr.bf16.mxu0 0
        %2194 = vmatpush1.bf16.msra.mxu0 0
        %2195 = vmatprep.subr.bf16.mxu0 0
        %2196 = vmatpush1.bf16.msra.mxu0 0
        %2197 = vmatprep.subr.bf16.mxu0 0
        %2198 = vmatpush1.bf16.msra.mxu0 0
        %2199 = vmatprep.subr.bf16.mxu0 0
        %2200 = vmatpush1.bf16.msra.mxu0 0
        %2201 = vmatprep.subr.bf16.mxu0 0
        %2202 = vmatpush1.bf16.msra.mxu0 0
        %2203 = vmatprep.subr.bf16.mxu0 0
        %2204 = vmatpush1.bf16.msra.mxu0 0
        %2205 = vmatprep.subr.bf16.mxu0 0
        %2206 = vmatpush1.bf16.msra.mxu0 0
        %2207 = vmatprep.subr.bf16.mxu0 0
        %2208 = vmatpush1.bf16.msra.mxu0 0
        %2209 = vmatprep.subr.bf16.mxu0 0
        %2210 = vmatpush1.bf16.msra.mxu0 0
        %2211 = vmatprep.subr.bf16.mxu0 0
        %2212 = vmatpush1.bf16.msra.mxu0 0
        %2213 = vmatprep.subr.bf16.mxu0 0
        %2214 = vmatpush1.bf16.msra.mxu0 0
        %2215 = vmatprep.subr.bf16.mxu0 0
        %2216 = vmatpush1.bf16.msra.mxu0 0
        %2217 = vmatprep.mubr.bf16.mxu0 0
        %2218 = vmatmul.mubr.bf16.gmra.mrb[0].mxu0 %v604
        %v2219 = vpop.f32.mrb[0].mxu0
        %v2220 = vadd.f32 0.0, %v2219
        %v2221 = vpop.f32.mrb[0].mxu0
        %v2222 = vpop.f32.mrb[0].mxu0
        %v2223 = vadd.f32 0.0, %v2222
        %v2224 = vpop.f32.mrb[0].mxu0
        %2225 = vmatprep.mubr.bf16.mxu0 0
        %2226 = vmatmul.mubr.bf16.gmra.mrb[0].mxu0 %v607
        %v2227 = vpop.f32.mrb[0].mxu0
        %v2228 = vadd.f32 0.0, %v2227
        %v2229 = vpop.f32.mrb[0].mxu0
        %v2230 = vpop.f32.mrb[0].mxu0
        %v2231 = vadd.f32 0.0, %v2230
        %v2232 = vpop.f32.mrb[0].mxu0
        %2233 = vmatprep.mubr.bf16.mxu0 0
        %2234 = vmatmul.mubr.bf16.gmra.mrb[0].mxu0 %v610
        %v2235 = vpop.f32.mrb[0].mxu0
        %v2236 = vadd.f32 0.0, %v2235
        %v2237 = vpop.f32.mrb[0].mxu0
        %v2238 = vpop.f32.mrb[0].mxu0
        %v2239 = vadd.f32 0.0, %v2238
        %v2240 = vpop.f32.mrb[0].mxu0
        %2241 = vmatprep.mubr.bf16.mxu0 0
        %2242 = vmatmul.mubr.bf16.gmra.mrb[0].mxu0 %v586
        %v2243 = vpop.f32.mrb[0].mxu0
        %v2244 = vadd.f32 0.0, %v2243
        %v2245 = vpop.f32.mrb[0].mxu0
        %v2246 = vpop.f32.mrb[0].mxu0
        %v2247 = vadd.f32 0.0, %v2246
        %v2248 = vpop.f32.mrb[0].mxu0
        %2249 = vmatprep.mubr.bf16.mxu0 0
        %2250 = vmatmul.mubr.bf16.gmra.mrb[0].mxu0 %v616
        %v2251 = vpop.f32.mrb[0].mxu0
        %v2252 = vadd.f32 0.0, %v2251
        %v2253 = vpop.f32.mrb[0].mxu0
        %v2254 = vpop.f32.mrb[0].mxu0
        %v2255 = vadd.f32 0.0, %v2254
        %v2256 = vpop.f32.mrb[0].mxu0
        %2257 = vmatprep.mubr.bf16.mxu0 0
        %2258 = vmatmul.mubr.bf16.gmra.mrb[0].mxu0 %v619
        %v2259 = vpop.f32.mrb[0].mxu0
        %v2260 = vadd.f32 0.0, %v2259
        %v2261 = vpop.f32.mrb[0].mxu0
        %v2262 = vpop.f32.mrb[0].mxu0
        %v2263 = vadd.f32 0.0, %v2262
        %v2264 = vpop.f32.mrb[0].mxu0
        %2265 = vmatprep.mubr.bf16.mxu0 0
        %2266 = vmatmul.mubr.bf16.gmra.mrb[0].mxu0 %v622
        %v2267 = vpop.f32.mrb[0].mxu0
        %v2268 = vadd.f32 0.0, %v2267
        %v2269 = vpop.f32.mrb[0].mxu0
        %v2270 = vpop.f32.mrb[0].mxu0
        %v2271 = vadd.f32 0.0, %v2270
        %v2272 = vpop.f32.mrb[0].mxu0
        %2273 = vmatprep.mubr.bf16.mxu0 0
        %2274 = vmatmul.mubr.bf16.gmra.mrb[0].mxu0 %v586
        %v2275 = vpop.f32.mrb[0].mxu0
        %v2276 = vadd.f32 0.0, %v2275
        %v2277 = vpop.f32.mrb[0].mxu0
        %v2278 = vpop.f32.mrb[0].mxu0
        %v2279 = vadd.f32 0.0, %v2278
        %v2280 = vpop.f32.mrb[0].mxu0
        %2281 = vmatprep.mubr.bf16.mxu0 0
        %2282 = vmatmul.mubr.bf16.gmra.mrb[0].mxu0 %v1167
        %v2283 = vpop.f32.mrb[0].mxu0
        %v2284 = vadd.f32 0.0, %v2283
        %v2285 = vpop.f32.mrb[0].mxu0
        %v2286 = vpop.f32.mrb[0].mxu0
        %v2287 = vadd.f32 0.0, %v2286
        %v2288 = vpop.f32.mrb[0].mxu0
        %2289 = vmatprep.mubr.bf16.mxu0 0
        %2290 = vmatmul.mubr.bf16.gmra.mrb[0].mxu0 %v1170
        %v2291 = vpop.f32.mrb[0].mxu0
        %v2292 = vadd.f32 0.0, %v2291
        %v2293 = vpop.f32.mrb[0].mxu0
        %v2294 = vpop.f32.mrb[0].mxu0
        %v2295 = vadd.f32 0.0, %v2294
        %v2296 = vpop.f32.mrb[0].mxu0
        %2297 = vmatprep.mubr.bf16.mxu0 0
        %2298 = vmatmul.mubr.bf16.gmra.mrb[0].mxu0 %v1375
        %v2299 = vpop.f32.mrb[0].mxu0
        %v2300 = vadd.f32 0.0, %v2299
        %v2301 = vpop.f32.mrb[0].mxu0
        %v2302 = vpop.f32.mrb[0].mxu0
        %v2303 = vadd.f32 0.0, %v2302
        %v2304 = vpop.f32.mrb[0].mxu0
        %2305 = vmatprep.mubr.bf16.mxu0 0
        %2306 = vmatmul.mubr.bf16.gmra.mrb[0].mxu0 %v586
        %v2307 = vpop.f32.mrb[0].mxu0
        %v2308 = vadd.f32 0.0, %v2307
        %v2309 = vpop.f32.mrb[0].mxu0
        %v2310 = vpop.f32.mrb[0].mxu0
        %v2311 = vadd.f32 0.0, %v2310
        %v2312 = vpop.f32.mrb[0].mxu0
        %2313 = vmatprep.mubr.bf16.mxu0 0
        %2314 = vmatmul.mubr.bf16.gmra.mrb[0].mxu0 %v586
        %v2315 = vpop.f32.mrb[0].mxu0
        %v2316 = vadd.f32 0.0, %v2315
        %v2317 = vpop.f32.mrb[0].mxu0
        %v2318 = vpop.f32.mrb[0].mxu0
        %v2319 = vadd.f32 0.0, %v2318
        %v2320 = vpop.f32.mrb[0].mxu0
        %2321 = vmatprep.mubr.bf16.mxu0 0
        %2322 = vmatmul.mubr.bf16.gmra.mrb[0].mxu0 %v586
        %v2323 = vpop.f32.mrb[0].mxu0
        %v2324 = vadd.f32 0.0, %v2323
        %v2325 = vpop.f32.mrb[0].mxu0
        %v2326 = vpop.f32.mrb[0].mxu0
        %v2327 = vadd.f32 0.0, %v2326
        %v2328 = vpop.f32.mrb[0].mxu0
        %2329 = vmatprep.mubr.bf16.mxu0 0
        %2330 = vmatmul.mubr.bf16.gmra.mrb[0].mxu0 %v586
        %v2331 = vpop.f32.mrb[0].mxu0
        %v2332 = vadd.f32 0.0, %v2331
        %v2333 = vpop.f32.mrb[0].mxu0
        %v2334 = vpop.f32.mrb[0].mxu0
        %v2335 = vadd.f32 0.0, %v2334
        %v2336 = vpop.f32.mrb[0].mxu0
        %2337 = vmatprep.mubr.bf16.mxu0 0
        %2338 = vmatmul.mubr.bf16.gmra.mrb[0].mxu0 %v586
        %v2339 = vpop.f32.mrb[0].mxu0
        %v2340 = vadd.f32 0.0, %v2339
        %v2341 = vpop.f32.mrb[0].mxu0
        %v2342 = vpop.f32.mrb[0].mxu0
        %v2343 = vadd.f32 0.0, %v2342
        %v2344 = vpop.f32.mrb[0].mxu0
        %2345 = vdwg.mxu0
        %v2346 = vadd.f32 %v2144, %v2220
        %v2347 = vadd.f32 %v2145, %v2223
        %v2348 = vadd.f32 %v2146, %v2228
        %v2349 = vadd.f32 %v2147, %v2231
        %v2350 = vadd.f32 %v2148, %v2236
        %v2351 = vadd.f32 %v2149, %v2239
        %v2352 = vadd.f32 %v2150, %v2244
        %v2353 = vadd.f32 %v2151, %v2247
        %v2354 = vadd.f32 %v2152, %v2252
        %v2355 = vadd.f32 %v2153, %v2255
        %v2356 = vadd.f32 %v2154, %v2260
        %v2357 = vadd.f32 %v2155, %v2263
        %v2358 = vadd.f32 %v2156, %v2268
        %v2359 = vadd.f32 %v2157, %v2271
        %v2360 = vadd.f32 %v2158, %v2276
        %v2361 = vadd.f32 %v2159, %v2279
        %v2362 = vadd.f32 %v2160, %v2284
        %v2363 = vadd.f32 %v2161, %v2287
        %v2364 = vadd.f32 %v2162, %v2292
        %v2365 = vadd.f32 %v2163, %v2295
        %v2366 = vadd.f32 %v2164, %v2300
        %v2367 = vadd.f32 %v2165, %v2303
        %v2368 = vadd.f32 %v2166, %v2308
        %v2369 = vadd.f32 %v2167, %v2311
        %v2370 = vadd.f32 %v2168, %v2316
        %v2371 = vadd.f32 %v2169, %v2319
        %v2372 = vadd.f32 %v2170, %v2324
        %v2373 = vadd.f32 %v2171, %v2327
        %v2374 = vadd.f32 %v2172, %v2332
        %v2375 = vadd.f32 %v2173, %v2335
        %v2376 = vadd.f32 %v2174, %v2340
        %v2377 = vadd.f32 %v2175, %v2343
        %v2378 = vld [vmem:[%s2] sm:$0x1]
        %v2380 = vlaneseq
        %v2381 = vshrl.u32 %v2380, 7
        %v2382 = vsub.s32 0, %v2381
        %v2383 = vrot.slane %v2378, %v2382
        %v2385 = vadd.f32 %v2346, %v2383
        %v2386 = vadd.f32 %v2347, %v2383
        %v2387 = vadd.f32 %v2348, %v2383
        %v2388 = vadd.f32 %v2349, %v2383
        %v2389 = vadd.f32 %v2350, %v2383
        %v2390 = vadd.f32 %v2351, %v2383
        %v2391 = vadd.f32 %v2352, %v2383
        %v2392 = vadd.f32 %v2353, %v2383
        %v2393 = vadd.f32 %v2354, %v2383
        %v2394 = vadd.f32 %v2355, %v2383
        %v2395 = vadd.f32 %v2356, %v2383
        %v2396 = vadd.f32 %v2357, %v2383
        %v2397 = vadd.f32 %v2358, %v2383
        %v2398 = vadd.f32 %v2359, %v2383
        %v2399 = vadd.f32 %v2360, %v2383
        %v2400 = vadd.f32 %v2361, %v2383
        %v2401 = vadd.f32 %v2362, %v2383
        %v2402 = vadd.f32 %v2363, %v2383
        %v2403 = vadd.f32 %v2364, %v2383
        %v2404 = vadd.f32 %v2365, %v2383
        %v2405 = vadd.f32 %v2366, %v2383
        %v2406 = vadd.f32 %v2367, %v2383
        %v2407 = vadd.f32 %v2368, %v2383
        %v2408 = vadd.f32 %v2369, %v2383
        %v2409 = vadd.f32 %v2370, %v2383
        %v2410 = vadd.f32 %v2371, %v2383
        %v2411 = vadd.f32 %v2372, %v2383
        %v2412 = vadd.f32 %v2373, %v2383
        %v2413 = vadd.f32 %v2374, %v2383
        %v2414 = vadd.f32 %v2375, %v2383
        %v2415 = vadd.f32 %v2376, %v2383
        %v2416 = vadd.f32 %v2377, %v2383
        %v2417 = vmax.f32 %v2385, 0.0
        %v2418 = vmax.f32 %v2386, 0.0
        %v2419 = vmax.f32 %v2387, 0.0
        %v2420 = vmax.f32 %v2388, 0.0
        %v2421 = vmax.f32 %v2389, 0.0
        %v2422 = vmax.f32 %v2390, 0.0
        %v2423 = vmax.f32 %v2391, 0.0
        %v2424 = vmax.f32 %v2392, 0.0
        %v2425 = vmax.f32 %v2393, 0.0
        %v2426 = vmax.f32 %v2394, 0.0
        %v2427 = vmax.f32 %v2395, 0.0
        %v2428 = vmax.f32 %v2396, 0.0
        %v2429 = vmax.f32 %v2397, 0.0
        %v2430 = vmax.f32 %v2398, 0.0
        %v2431 = vmax.f32 %v2399, 0.0
        %v2432 = vmax.f32 %v2400, 0.0
        %v2433 = vmax.f32 %v2401, 0.0
        %v2434 = vmax.f32 %v2402, 0.0
        %v2435 = vmax.f32 %v2403, 0.0
        %v2436 = vmax.f32 %v2404, 0.0
        %v2437 = vmax.f32 %v2405, 0.0
        %v2438 = vmax.f32 %v2406, 0.0
        %v2439 = vmax.f32 %v2407, 0.0
        %v2440 = vmax.f32 %v2408, 0.0
        %v2441 = vmax.f32 %v2409, 0.0
        %v2442 = vmax.f32 %v2410, 0.0
        %v2443 = vmax.f32 %v2411, 0.0
        %v2444 = vmax.f32 %v2412, 0.0
        %v2445 = vmax.f32 %v2413, 0.0
        %v2446 = vmax.f32 %v2414, 0.0
        %v2447 = vmax.f32 %v2415, 0.0
        %v2448 = vmax.f32 %v2416, 0.0
        %v2449 = vpack.c.bf16 %v2418, %v2417
        %v2450 = vpack.c.bf16 %v2420, %v2419
        %v2451 = vpack.c.bf16 %v2422, %v2421
        %v2452 = vpack.c.bf16 %v2424, %v2423
        %v2453 = vpack.c.bf16 %v2426, %v2425
        %v2454 = vpack.c.bf16 %v2428, %v2427
        %v2455 = vpack.c.bf16 %v2430, %v2429
        %v2456 = vpack.c.bf16 %v2432, %v2431
        %v2457 = vpack.c.bf16 %v2434, %v2433
        %v2458 = vpack.c.bf16 %v2436, %v2435
        %v2459 = vpack.c.bf16 %v2438, %v2437
        %v2460 = vpack.c.bf16 %v2440, %v2439
        %v2461 = vpack.c.bf16 %v2442, %v2441
        %v2462 = vpack.c.bf16 %v2444, %v2443
        %v2463 = vpack.c.bf16 %v2446, %v2445
        %v2464 = vpack.c.bf16 %v2448, %v2447
        %v2465 = vld [vmem:[%s3] sm:$0xf]
        %v2466 = vld [vmem:[%s3 + $0x4] sm:$0xf]
        %v2467 = vld [vmem:[%s3 + $0x8] sm:$0xf]
        %v2468 = vld [vmem:[%s3 + $0xc] sm:$0xf]
        %s2469 = scalar_lea.vmem %s3, 16
        %v2470 = vld [vmem:[%s2469] sm:$0xf]
        %v2471 = vld [vmem:[%s2469 + $0x4] sm:$0xf]
        %v2472 = vld [vmem:[%s2469 + $0x8] sm:$0xf]
        %v2473 = vld [vmem:[%s2469 + $0xc] sm:$0xf]
        %v2478 = vunpack.c.l.b16 %v2470
        %v2479 = vunpack.c.l.b16 %v2471
        %v2480 = vunpack.c.l.b16 %v2472
        %v2481 = vunpack.c.l.b16 %v2473
        %v2482 = vpack.c.b16 %v2479, %v2478
        %v2483 = vpack.c.b16 %v2481, %v2480
        %vm2486 = vcmask 261120
        %v2487 = vsel %vm2486, 0, 0
        %v2490 = vsel %vm2486, %v2449, 0
        %v2493 = vsel %vm2486, %v2450, 0
        %v2496 = vsel %vm2486, %v2451, 0
        %v2499 = vsel %vm2486, %v2452, 0
        %v2502 = vsel %vm2486, %v2453, 0
        %v2505 = vsel %vm2486, %v2454, 0
        %v2508 = vsel %vm2486, %v2455, 0
        %v2511 = vsel %vm2486, %v2456, 0
        %v2514 = vsel %vm2486, %v2457, 0
        %v2517 = vsel %vm2486, %v2458, 0
        %v2520 = vsel %vm2486, %v2459, 0
        %v2523 = vsel %vm2486, %v2460, 0
        %2525 = vmatprep.subr.bf16.mxu0 0
        %2526 = vmatpush1.bf16.msra.mxu0 %v2482
        %2527 = vmatprep.subr.bf16.mxu0 0
        %2528 = vmatpush1.bf16.msra.mxu0 %v2483
        %2529 = vmatprep.subr.bf16.mxu0 0
        %2530 = vmatpush1.bf16.msra.mxu0 0
        %2531 = vmatprep.subr.bf16.mxu0 0
        %2532 = vmatpush1.bf16.msra.mxu0 0
        %2533 = vmatprep.subr.bf16.mxu0 0
        %2534 = vmatpush1.bf16.msra.mxu0 0
        %2535 = vmatprep.subr.bf16.mxu0 0
        %2536 = vmatpush1.bf16.msra.mxu0 0
        %2537 = vmatprep.subr.bf16.mxu0 0
        %2538 = vmatpush1.bf16.msra.mxu0 0
        %2539 = vmatprep.subr.bf16.mxu0 0
        %2540 = vmatpush1.bf16.msra.mxu0 0
        %2541 = vmatprep.subr.bf16.mxu0 0
        %2542 = vmatpush1.bf16.msra.mxu0 0
        %2543 = vmatprep.subr.bf16.mxu0 0
        %2544 = vmatpush1.bf16.msra.mxu0 0
        %2545 = vmatprep.subr.bf16.mxu0 0
        %2546 = vmatpush1.bf16.msra.mxu0 0
        %2547 = vmatprep.subr.bf16.mxu0 0
        %2548 = vmatpush1.bf16.msra.mxu0 0
        %2549 = vmatprep.subr.bf16.mxu0 0
        %2550 = vmatpush1.bf16.msra.mxu0 0
        %2551 = vmatprep.subr.bf16.mxu0 0
        %2552 = vmatpush1.bf16.msra.mxu0 0
        %2553 = vmatprep.subr.bf16.mxu0 0
        %2554 = vmatpush1.bf16.msra.mxu0 0
        %2555 = vmatprep.subr.bf16.mxu0 0
        %2556 = vmatpush1.bf16.msra.mxu0 0
        %2557 = vmatprep.mubr.bf16.mxu0 0
        %2558 = vmatmul.mubr.bf16.gmra.mrb[0].mxu0 %v2487
        %v2559 = vpop.f32.mrb[0].mxu0
        %v2560 = vadd.f32 0.0, %v2559
        %v2561 = vpop.f32.mrb[0].mxu0
        %v2562 = vpop.f32.mrb[0].mxu0
        %v2563 = vadd.f32 0.0, %v2562
        %v2564 = vpop.f32.mrb[0].mxu0
        %2565 = vmatprep.mubr.bf16.mxu0 0
        %2566 = vmatmul.mubr.bf16.gmra.mrb[0].mxu0 %v2487
        %v2567 = vpop.f32.mrb[0].mxu0
        %v2568 = vadd.f32 0.0, %v2567
        %v2569 = vpop.f32.mrb[0].mxu0
        %v2570 = vpop.f32.mrb[0].mxu0
        %v2571 = vadd.f32 0.0, %v2570
        %v2572 = vpop.f32.mrb[0].mxu0
        %2573 = vmatprep.mubr.bf16.mxu0 0
        %2574 = vmatmul.mubr.bf16.gmra.mrb[0].mxu0 %v2487
        %v2575 = vpop.f32.mrb[0].mxu0
        %v2576 = vadd.f32 0.0, %v2575
        %v2577 = vpop.f32.mrb[0].mxu0
        %v2578 = vpop.f32.mrb[0].mxu0
        %v2579 = vadd.f32 0.0, %v2578
        %v2580 = vpop.f32.mrb[0].mxu0
        %2581 = vmatprep.mubr.bf16.mxu0 0
        %2582 = vmatmul.mubr.bf16.gmra.mrb[0].mxu0 %v2487
        %v2583 = vpop.f32.mrb[0].mxu0
        %v2584 = vadd.f32 0.0, %v2583
        %v2585 = vpop.f32.mrb[0].mxu0
        %v2586 = vpop.f32.mrb[0].mxu0
        %v2587 = vadd.f32 0.0, %v2586
        %v2588 = vpop.f32.mrb[0].mxu0
        %2589 = vmatprep.mubr.bf16.mxu0 0
        %2590 = vmatmul.mubr.bf16.gmra.mrb[0].mxu0 %v2490
        %v2591 = vpop.f32.mrb[0].mxu0
        %v2592 = vadd.f32 0.0, %v2591
        %v2593 = vpop.f32.mrb[0].mxu0
        %v2594 = vpop.f32.mrb[0].mxu0
        %v2595 = vadd.f32 0.0, %v2594
        %v2596 = vpop.f32.mrb[0].mxu0
        %2597 = vmatprep.mubr.bf16.mxu0 0
        %2598 = vmatmul.mubr.bf16.gmra.mrb[0].mxu0 %v2493
        %v2599 = vpop.f32.mrb[0].mxu0
        %v2600 = vadd.f32 0.0, %v2599
        %v2601 = vpop.f32.mrb[0].mxu0
        %v2602 = vpop.f32.mrb[0].mxu0
        %v2603 = vadd.f32 0.0, %v2602
        %v2604 = vpop.f32.mrb[0].mxu0
        %2605 = vmatprep.mubr.bf16.mxu0 0
        %2606 = vmatmul.mubr.bf16.gmra.mrb[0].mxu0 %v2496
        %v2607 = vpop.f32.mrb[0].mxu0
        %v2608 = vadd.f32 0.0, %v2607
        %v2609 = vpop.f32.mrb[0].mxu0
        %v2610 = vpop.f32.mrb[0].mxu0
        %v2611 = vadd.f32 0.0, %v2610
        %v2612 = vpop.f32.mrb[0].mxu0
        %2613 = vmatprep.mubr.bf16.mxu0 0
        %2614 = vmatmul.mubr.bf16.gmra.mrb[0].mxu0 %v2499
        %v2615 = vpop.f32.mrb[0].mxu0
        %v2616 = vadd.f32 0.0, %v2615
        %v2617 = vpop.f32.mrb[0].mxu0
        %v2618 = vpop.f32.mrb[0].mxu0
        %v2619 = vadd.f32 0.0, %v2618
        %v2620 = vpop.f32.mrb[0].mxu0
        %2621 = vmatprep.mubr.bf16.mxu0 0
        %2622 = vmatmul.mubr.bf16.gmra.mrb[0].mxu0 %v2502
        %v2623 = vpop.f32.mrb[0].mxu0
        %v2624 = vadd.f32 0.0, %v2623
        %v2625 = vpop.f32.mrb[0].mxu0
        %v2626 = vpop.f32.mrb[0].mxu0
        %v2627 = vadd.f32 0.0, %v2626
        %v2628 = vpop.f32.mrb[0].mxu0
        %2629 = vmatprep.mubr.bf16.mxu0 0
        %2630 = vmatmul.mubr.bf16.gmra.mrb[0].mxu0 %v2505
        %v2631 = vpop.f32.mrb[0].mxu0
        %v2632 = vadd.f32 0.0, %v2631
        %v2633 = vpop.f32.mrb[0].mxu0
        %v2634 = vpop.f32.mrb[0].mxu0
        %v2635 = vadd.f32 0.0, %v2634
        %v2636 = vpop.f32.mrb[0].mxu0
        %2637 = vmatprep.mubr.bf16.mxu0 0
        %2638 = vmatmul.mubr.bf16.gmra.mrb[0].mxu0 %v2508
        %v2639 = vpop.f32.mrb[0].mxu0
        %v2640 = vadd.f32 0.0, %v2639
        %v2641 = vpop.f32.mrb[0].mxu0
        %v2642 = vpop.f32.mrb[0].mxu0
        %v2643 = vadd.f32 0.0, %v2642
        %v2644 = vpop.f32.mrb[0].mxu0
        %2645 = vmatprep.mubr.bf16.mxu0 0
        %2646 = vmatmul.mubr.bf16.gmra.mrb[0].mxu0 %v2511
        %v2647 = vpop.f32.mrb[0].mxu0
        %v2648 = vadd.f32 0.0, %v2647
        %v2649 = vpop.f32.mrb[0].mxu0
        %v2650 = vpop.f32.mrb[0].mxu0
        %v2651 = vadd.f32 0.0, %v2650
        %v2652 = vpop.f32.mrb[0].mxu0
        %2653 = vmatprep.mubr.bf16.mxu0 0
        %2654 = vmatmul.mubr.bf16.gmra.mrb[0].mxu0 %v2514
        %v2655 = vpop.f32.mrb[0].mxu0
        %v2656 = vadd.f32 0.0, %v2655
        %v2657 = vpop.f32.mrb[0].mxu0
        %v2658 = vpop.f32.mrb[0].mxu0
        %v2659 = vadd.f32 0.0, %v2658
        %v2660 = vpop.f32.mrb[0].mxu0
        %2661 = vmatprep.mubr.bf16.mxu0 0
        %2662 = vmatmul.mubr.bf16.gmra.mrb[0].mxu0 %v2517
        %v2663 = vpop.f32.mrb[0].mxu0
        %v2664 = vadd.f32 0.0, %v2663
        %v2665 = vpop.f32.mrb[0].mxu0
        %v2666 = vpop.f32.mrb[0].mxu0
        %v2667 = vadd.f32 0.0, %v2666
        %v2668 = vpop.f32.mrb[0].mxu0
        %2669 = vmatprep.mubr.bf16.mxu0 0
        %2670 = vmatmul.mubr.bf16.gmra.mrb[0].mxu0 %v2520
        %v2671 = vpop.f32.mrb[0].mxu0
        %v2672 = vadd.f32 0.0, %v2671
        %v2673 = vpop.f32.mrb[0].mxu0
        %v2674 = vpop.f32.mrb[0].mxu0
        %v2675 = vadd.f32 0.0, %v2674
        %v2676 = vpop.f32.mrb[0].mxu0
        %2677 = vmatprep.mubr.bf16.mxu0 0
        %2678 = vmatmul.mubr.bf16.gmra.mrb[0].mxu0 %v2523
        %v2679 = vpop.f32.mrb[0].mxu0
        %v2680 = vadd.f32 0.0, %v2679
        %v2681 = vpop.f32.mrb[0].mxu0
        %v2682 = vpop.f32.mrb[0].mxu0
        %v2683 = vadd.f32 0.0, %v2682
        %v2684 = vpop.f32.mrb[0].mxu0
        %2685 = vdwg.mxu0
        %v2690 = vunpack.c.l.b16 %v2465
        %v2691 = vunpack.c.l.b16 %v2466
        %v2692 = vunpack.c.l.b16 %v2467
        %v2693 = vunpack.c.l.b16 %v2468
        %v2694 = vpack.c.b16 %v2691, %v2690
        %v2695 = vpack.c.b16 %v2693, %v2692
        %2698 = vmatprep.subr.bf16.mxu0 0
        %2699 = vmatpush1.bf16.msra.mxu0 %v2694
        %2700 = vmatprep.subr.bf16.mxu0 0
        %2701 = vmatpush1.bf16.msra.mxu0 %v2695
        %2702 = vmatprep.subr.bf16.mxu0 0
        %2703 = vmatpush1.bf16.msra.mxu0 0
        %2704 = vmatprep.subr.bf16.mxu0 0
        %2705 = vmatpush1.bf16.msra.mxu0 0
        %2706 = vmatprep.subr.bf16.mxu0 0
        %2707 = vmatpush1.bf16.msra.mxu0 0
        %2708 = vmatprep.subr.bf16.mxu0 0
        %2709 = vmatpush1.bf16.msra.mxu0 0
        %2710 = vmatprep.subr.bf16.mxu0 0
        %2711 = vmatpush1.bf16.msra.mxu0 0
        %2712 = vmatprep.subr.bf16.mxu0 0
        %2713 = vmatpush1.bf16.msra.mxu0 0
        %2714 = vmatprep.subr.bf16.mxu0 0
        %2715 = vmatpush1.bf16.msra.mxu0 0
        %2716 = vmatprep.subr.bf16.mxu0 0
        %2717 = vmatpush1.bf16.msra.mxu0 0
        %2718 = vmatprep.subr.bf16.mxu0 0
        %2719 = vmatpush1.bf16.msra.mxu0 0
        %2720 = vmatprep.subr.bf16.mxu0 0
        %2721 = vmatpush1.bf16.msra.mxu0 0
        %2722 = vmatprep.subr.bf16.mxu0 0
        %2723 = vmatpush1.bf16.msra.mxu0 0
        %2724 = vmatprep.subr.bf16.mxu0 0
        %2725 = vmatpush1.bf16.msra.mxu0 0
        %2726 = vmatprep.subr.bf16.mxu0 0
        %2727 = vmatpush1.bf16.msra.mxu0 0
        %2728 = vmatprep.subr.bf16.mxu0 0
        %2729 = vmatpush1.bf16.msra.mxu0 0
        %2730 = vmatprep.mubr.bf16.mxu0 0
        %2731 = vmatmul.mubr.bf16.gmra.mrb[0].mxu0 %v2487
        %v2732 = vpop.f32.mrb[0].mxu0
        %v2733 = vadd.f32 %v2560, %v2732
        %v2734 = vpop.f32.mrb[0].mxu0
        %v2735 = vpop.f32.mrb[0].mxu0
        %v2736 = vadd.f32 %v2563, %v2735
        %v2737 = vpop.f32.mrb[0].mxu0
        %2738 = vmatprep.mubr.bf16.mxu0 0
        %2739 = vmatmul.mubr.bf16.gmra.mrb[0].mxu0 %v2487
        %v2740 = vpop.f32.mrb[0].mxu0
        %v2741 = vadd.f32 %v2568, %v2740
        %v2742 = vpop.f32.mrb[0].mxu0
        %v2743 = vpop.f32.mrb[0].mxu0
        %v2744 = vadd.f32 %v2571, %v2743
        %v2745 = vpop.f32.mrb[0].mxu0
        %2746 = vmatprep.mubr.bf16.mxu0 0
        %2747 = vmatmul.mubr.bf16.gmra.mrb[0].mxu0 %v2487
        %v2748 = vpop.f32.mrb[0].mxu0
        %v2749 = vadd.f32 %v2576, %v2748
        %v2750 = vpop.f32.mrb[0].mxu0
        %v2751 = vpop.f32.mrb[0].mxu0
        %v2752 = vadd.f32 %v2579, %v2751
        %v2753 = vpop.f32.mrb[0].mxu0
        %2754 = vmatprep.mubr.bf16.mxu0 0
        %2755 = vmatmul.mubr.bf16.gmra.mrb[0].mxu0 %v2487
        %v2756 = vpop.f32.mrb[0].mxu0
        %v2757 = vadd.f32 %v2584, %v2756
        %v2758 = vpop.f32.mrb[0].mxu0
        %v2759 = vpop.f32.mrb[0].mxu0
        %v2760 = vadd.f32 %v2587, %v2759
        %v2761 = vpop.f32.mrb[0].mxu0
        %2762 = vmatprep.mubr.bf16.mxu0 0
        %2763 = vmatmul.mubr.bf16.gmra.mrb[0].mxu0 %v2487
        %v2764 = vpop.f32.mrb[0].mxu0
        %v2765 = vadd.f32 %v2592, %v2764
        %v2766 = vpop.f32.mrb[0].mxu0
        %v2767 = vpop.f32.mrb[0].mxu0
        %v2768 = vadd.f32 %v2595, %v2767
        %v2769 = vpop.f32.mrb[0].mxu0
        %2770 = vmatprep.mubr.bf16.mxu0 0
        %2771 = vmatmul.mubr.bf16.gmra.mrb[0].mxu0 %v2490
        %v2772 = vpop.f32.mrb[0].mxu0
        %v2773 = vadd.f32 %v2600, %v2772
        %v2774 = vpop.f32.mrb[0].mxu0
        %v2775 = vpop.f32.mrb[0].mxu0
        %v2776 = vadd.f32 %v2603, %v2775
        %v2777 = vpop.f32.mrb[0].mxu0
        %2778 = vmatprep.mubr.bf16.mxu0 0
        %2779 = vmatmul.mubr.bf16.gmra.mrb[0].mxu0 %v2493
        %v2780 = vpop.f32.mrb[0].mxu0
        %v2781 = vadd.f32 %v2608, %v2780
        %v2782 = vpop.f32.mrb[0].mxu0
        %v2783 = vpop.f32.mrb[0].mxu0
        %v2784 = vadd.f32 %v2611, %v2783
        %v2785 = vpop.f32.mrb[0].mxu0
        %2786 = vmatprep.mubr.bf16.mxu0 0
        %2787 = vmatmul.mubr.bf16.gmra.mrb[0].mxu0 %v2496
        %v2788 = vpop.f32.mrb[0].mxu0
        %v2789 = vadd.f32 %v2616, %v2788
        %v2790 = vpop.f32.mrb[0].mxu0
        %v2791 = vpop.f32.mrb[0].mxu0
        %v2792 = vadd.f32 %v2619, %v2791
        %v2793 = vpop.f32.mrb[0].mxu0
        %2794 = vmatprep.mubr.bf16.mxu0 0
        %2795 = vmatmul.mubr.bf16.gmra.mrb[0].mxu0 %v2487
        %v2796 = vpop.f32.mrb[0].mxu0
        %v2797 = vadd.f32 %v2624, %v2796
        %v2798 = vpop.f32.mrb[0].mxu0
        %v2799 = vpop.f32.mrb[0].mxu0
        %v2800 = vadd.f32 %v2627, %v2799
        %v2801 = vpop.f32.mrb[0].mxu0
        %2802 = vmatprep.mubr.bf16.mxu0 0
        %2803 = vmatmul.mubr.bf16.gmra.mrb[0].mxu0 %v2502
        %v2804 = vpop.f32.mrb[0].mxu0
        %v2805 = vadd.f32 %v2632, %v2804
        %v2806 = vpop.f32.mrb[0].mxu0
        %v2807 = vpop.f32.mrb[0].mxu0
        %v2808 = vadd.f32 %v2635, %v2807
        %v2809 = vpop.f32.mrb[0].mxu0
        %2810 = vmatprep.mubr.bf16.mxu0 0
        %2811 = vmatmul.mubr.bf16.gmra.mrb[0].mxu0 %v2505
        %v2812 = vpop.f32.mrb[0].mxu0
        %v2813 = vadd.f32 %v2640, %v2812
        %v2814 = vpop.f32.mrb[0].mxu0
        %v2815 = vpop.f32.mrb[0].mxu0
        %v2816 = vadd.f32 %v2643, %v2815
        %v2817 = vpop.f32.mrb[0].mxu0
        %2818 = vmatprep.mubr.bf16.mxu0 0
        %2819 = vmatmul.mubr.bf16.gmra.mrb[0].mxu0 %v2508
        %v2820 = vpop.f32.mrb[0].mxu0
        %v2821 = vadd.f32 %v2648, %v2820
        %v2822 = vpop.f32.mrb[0].mxu0
        %v2823 = vpop.f32.mrb[0].mxu0
        %v2824 = vadd.f32 %v2651, %v2823
        %v2825 = vpop.f32.mrb[0].mxu0
        %2826 = vmatprep.mubr.bf16.mxu0 0
        %2827 = vmatmul.mubr.bf16.gmra.mrb[0].mxu0 %v2487
        %v2828 = vpop.f32.mrb[0].mxu0
        %v2829 = vadd.f32 %v2656, %v2828
        %v2830 = vpop.f32.mrb[0].mxu0
        %v2831 = vpop.f32.mrb[0].mxu0
        %v2832 = vadd.f32 %v2659, %v2831
        %v2833 = vpop.f32.mrb[0].mxu0
        %2834 = vmatprep.mubr.bf16.mxu0 0
        %2835 = vmatmul.mubr.bf16.gmra.mrb[0].mxu0 %v2514
        %v2836 = vpop.f32.mrb[0].mxu0
        %v2837 = vadd.f32 %v2664, %v2836
        %v2838 = vpop.f32.mrb[0].mxu0
        %v2839 = vpop.f32.mrb[0].mxu0
        %v2840 = vadd.f32 %v2667, %v2839
        %v2841 = vpop.f32.mrb[0].mxu0
        %2842 = vmatprep.mubr.bf16.mxu0 0
        %2843 = vmatmul.mubr.bf16.gmra.mrb[0].mxu0 %v2517
        %v2844 = vpop.f32.mrb[0].mxu0
        %v2845 = vadd.f32 %v2672, %v2844
        %v2846 = vpop.f32.mrb[0].mxu0
        %v2847 = vpop.f32.mrb[0].mxu0
        %v2848 = vadd.f32 %v2675, %v2847
        %v2849 = vpop.f32.mrb[0].mxu0
        %2850 = vmatprep.mubr.bf16.mxu0 0
        %2851 = vmatmul.mubr.bf16.gmra.mrb[0].mxu0 %v2520
        %v2852 = vpop.f32.mrb[0].mxu0
        %v2853 = vadd.f32 %v2680, %v2852
        %v2854 = vpop.f32.mrb[0].mxu0
        %v2855 = vpop.f32.mrb[0].mxu0
        %v2856 = vadd.f32 %v2683, %v2855
        %v2857 = vpop.f32.mrb[0].mxu0
        %2858 = vdwg.mxu0
        %s2859 = scalar_lea.vmem %s3, 32
        %v2860 = vld [vmem:[%s2859] sm:$0xf]
        %v2861 = vld [vmem:[%s2859 + $0x4] sm:$0xf]
        %v2862 = vld [vmem:[%s2859 + $0x8] sm:$0xf]
        %v2863 = vld [vmem:[%s2859 + $0xc] sm:$0xf]
        %v2868 = vunpack.c.l.b16 %v2860
        %v2869 = vunpack.c.l.b16 %v2861
        %v2870 = vunpack.c.l.b16 %v2862
        %v2871 = vunpack.c.l.b16 %v2863
        %v2872 = vpack.c.b16 %v2869, %v2868
        %v2873 = vpack.c.b16 %v2871, %v2870
        %2876 = vmatprep.subr.bf16.mxu0 0
        %2877 = vmatpush1.bf16.msra.mxu0 %v2872
        %2878 = vmatprep.subr.bf16.mxu0 0
        %2879 = vmatpush1.bf16.msra.mxu0 %v2873
        %2880 = vmatprep.subr.bf16.mxu0 0
        %2881 = vmatpush1.bf16.msra.mxu0 0
        %2882 = vmatprep.subr.bf16.mxu0 0
        %2883 = vmatpush1.bf16.msra.mxu0 0
        %2884 = vmatprep.subr.bf16.mxu0 0
        %2885 = vmatpush1.bf16.msra.mxu0 0
        %2886 = vmatprep.subr.bf16.mxu0 0
        %2887 = vmatpush1.bf16.msra.mxu0 0
        %2888 = vmatprep.subr.bf16.mxu0 0
        %2889 = vmatpush1.bf16.msra.mxu0 0
        %2890 = vmatprep.subr.bf16.mxu0 0
        %2891 = vmatpush1.bf16.msra.mxu0 0
        %2892 = vmatprep.subr.bf16.mxu0 0
        %2893 = vmatpush1.bf16.msra.mxu0 0
        %2894 = vmatprep.subr.bf16.mxu0 0
        %2895 = vmatpush1.bf16.msra.mxu0 0
        %2896 = vmatprep.subr.bf16.mxu0 0
        %2897 = vmatpush1.bf16.msra.mxu0 0
        %2898 = vmatprep.subr.bf16.mxu0 0
        %2899 = vmatpush1.bf16.msra.mxu0 0
        %2900 = vmatprep.subr.bf16.mxu0 0
        %2901 = vmatpush1.bf16.msra.mxu0 0
        %2902 = vmatprep.subr.bf16.mxu0 0
        %2903 = vmatpush1.bf16.msra.mxu0 0
        %2904 = vmatprep.subr.bf16.mxu0 0
        %2905 = vmatpush1.bf16.msra.mxu0 0
        %2906 = vmatprep.subr.bf16.mxu0 0
        %2907 = vmatpush1.bf16.msra.mxu0 0
        %2908 = vmatprep.mubr.bf16.mxu0 0
        %2909 = vmatmul.mubr.bf16.gmra.mrb[0].mxu0 %v2487
        %v2910 = vpop.f32.mrb[0].mxu0
        %v2911 = vadd.f32 0.0, %v2910
        %v2912 = vpop.f32.mrb[0].mxu0
        %v2913 = vpop.f32.mrb[0].mxu0
        %v2914 = vadd.f32 0.0, %v2913
        %v2915 = vpop.f32.mrb[0].mxu0
        %2916 = vmatprep.mubr.bf16.mxu0 0
        %2917 = vmatmul.mubr.bf16.gmra.mrb[0].mxu0 %v2487
        %v2918 = vpop.f32.mrb[0].mxu0
        %v2919 = vadd.f32 0.0, %v2918
        %v2920 = vpop.f32.mrb[0].mxu0
        %v2921 = vpop.f32.mrb[0].mxu0
        %v2922 = vadd.f32 0.0, %v2921
        %v2923 = vpop.f32.mrb[0].mxu0
        %2924 = vmatprep.mubr.bf16.mxu0 0
        %2925 = vmatmul.mubr.bf16.gmra.mrb[0].mxu0 %v2487
        %v2926 = vpop.f32.mrb[0].mxu0
        %v2927 = vadd.f32 0.0, %v2926
        %v2928 = vpop.f32.mrb[0].mxu0
        %v2929 = vpop.f32.mrb[0].mxu0
        %v2930 = vadd.f32 0.0, %v2929
        %v2931 = vpop.f32.mrb[0].mxu0
        %2932 = vmatprep.mubr.bf16.mxu0 0
        %2933 = vmatmul.mubr.bf16.gmra.mrb[0].mxu0 %v2487
        %v2934 = vpop.f32.mrb[0].mxu0
        %v2935 = vadd.f32 0.0, %v2934
        %v2936 = vpop.f32.mrb[0].mxu0
        %v2937 = vpop.f32.mrb[0].mxu0
        %v2938 = vadd.f32 0.0, %v2937
        %v2939 = vpop.f32.mrb[0].mxu0
        %2940 = vmatprep.mubr.bf16.mxu0 0
        %2941 = vmatmul.mubr.bf16.gmra.mrb[0].mxu0 %v2493
        %v2942 = vpop.f32.mrb[0].mxu0
        %v2943 = vadd.f32 0.0, %v2942
        %v2944 = vpop.f32.mrb[0].mxu0
        %v2945 = vpop.f32.mrb[0].mxu0
        %v2946 = vadd.f32 0.0, %v2945
        %v2947 = vpop.f32.mrb[0].mxu0
        %2948 = vmatprep.mubr.bf16.mxu0 0
        %2949 = vmatmul.mubr.bf16.gmra.mrb[0].mxu0 %v2496
        %v2950 = vpop.f32.mrb[0].mxu0
        %v2951 = vadd.f32 0.0, %v2950
        %v2952 = vpop.f32.mrb[0].mxu0
        %v2953 = vpop.f32.mrb[0].mxu0
        %v2954 = vadd.f32 0.0, %v2953
        %v2955 = vpop.f32.mrb[0].mxu0
        %2956 = vmatprep.mubr.bf16.mxu0 0
        %2957 = vmatmul.mubr.bf16.gmra.mrb[0].mxu0 %v2499
        %v2958 = vpop.f32.mrb[0].mxu0
        %v2959 = vadd.f32 0.0, %v2958
        %v2960 = vpop.f32.mrb[0].mxu0
        %v2961 = vpop.f32.mrb[0].mxu0
        %v2962 = vadd.f32 0.0, %v2961
        %v2963 = vpop.f32.mrb[0].mxu0
        %2964 = vmatprep.mubr.bf16.mxu0 0
        %2965 = vmatmul.mubr.bf16.gmra.mrb[0].mxu0 %v2487
        %v2966 = vpop.f32.mrb[0].mxu0
        %v2967 = vadd.f32 0.0, %v2966
        %v2968 = vpop.f32.mrb[0].mxu0
        %v2969 = vpop.f32.mrb[0].mxu0
        %v2970 = vadd.f32 0.0, %v2969
        %v2971 = vpop.f32.mrb[0].mxu0
        %2972 = vmatprep.mubr.bf16.mxu0 0
        %2973 = vmatmul.mubr.bf16.gmra.mrb[0].mxu0 %v2505
        %v2974 = vpop.f32.mrb[0].mxu0
        %v2975 = vadd.f32 0.0, %v2974
        %v2976 = vpop.f32.mrb[0].mxu0
        %v2977 = vpop.f32.mrb[0].mxu0
        %v2978 = vadd.f32 0.0, %v2977
        %v2979 = vpop.f32.mrb[0].mxu0
        %2980 = vmatprep.mubr.bf16.mxu0 0
        %2981 = vmatmul.mubr.bf16.gmra.mrb[0].mxu0 %v2508
        %v2982 = vpop.f32.mrb[0].mxu0
        %v2983 = vadd.f32 0.0, %v2982
        %v2984 = vpop.f32.mrb[0].mxu0
        %v2985 = vpop.f32.mrb[0].mxu0
        %v2986 = vadd.f32 0.0, %v2985
        %v2987 = vpop.f32.mrb[0].mxu0
        %2988 = vmatprep.mubr.bf16.mxu0 0
        %2989 = vmatmul.mubr.bf16.gmra.mrb[0].mxu0 %v2511
        %v2990 = vpop.f32.mrb[0].mxu0
        %v2991 = vadd.f32 0.0, %v2990
        %v2992 = vpop.f32.mrb[0].mxu0
        %v2993 = vpop.f32.mrb[0].mxu0
        %v2994 = vadd.f32 0.0, %v2993
        %v2995 = vpop.f32.mrb[0].mxu0
        %2996 = vmatprep.mubr.bf16.mxu0 0
        %2997 = vmatmul.mubr.bf16.gmra.mrb[0].mxu0 %v2487
        %v2998 = vpop.f32.mrb[0].mxu0
        %v2999 = vadd.f32 0.0, %v2998
        %v3000 = vpop.f32.mrb[0].mxu0
        %v3001 = vpop.f32.mrb[0].mxu0
        %v3002 = vadd.f32 0.0, %v3001
        %v3003 = vpop.f32.mrb[0].mxu0
        %3004 = vmatprep.mubr.bf16.mxu0 0
        %3005 = vmatmul.mubr.bf16.gmra.mrb[0].mxu0 %v2517
        %v3006 = vpop.f32.mrb[0].mxu0
        %v3007 = vadd.f32 0.0, %v3006
        %v3008 = vpop.f32.mrb[0].mxu0
        %v3009 = vpop.f32.mrb[0].mxu0
        %v3010 = vadd.f32 0.0, %v3009
        %v3011 = vpop.f32.mrb[0].mxu0
        %3012 = vmatprep.mubr.bf16.mxu0 0
        %3013 = vmatmul.mubr.bf16.gmra.mrb[0].mxu0 %v2520
        %v3014 = vpop.f32.mrb[0].mxu0
        %v3015 = vadd.f32 0.0, %v3014
        %v3016 = vpop.f32.mrb[0].mxu0
        %v3017 = vpop.f32.mrb[0].mxu0
        %v3018 = vadd.f32 0.0, %v3017
        %v3019 = vpop.f32.mrb[0].mxu0
        %3020 = vmatprep.mubr.bf16.mxu0 0
        %3021 = vmatmul.mubr.bf16.gmra.mrb[0].mxu0 %v2523
        %v3022 = vpop.f32.mrb[0].mxu0
        %v3023 = vadd.f32 0.0, %v3022
        %v3024 = vpop.f32.mrb[0].mxu0
        %v3025 = vpop.f32.mrb[0].mxu0
        %v3026 = vadd.f32 0.0, %v3025
        %v3027 = vpop.f32.mrb[0].mxu0
        %3028 = vmatprep.mubr.bf16.mxu0 0
        %3029 = vmatmul.mubr.bf16.gmra.mrb[0].mxu0 %v2487
        %v3030 = vpop.f32.mrb[0].mxu0
        %v3031 = vadd.f32 0.0, %v3030
        %v3032 = vpop.f32.mrb[0].mxu0
        %v3033 = vpop.f32.mrb[0].mxu0
        %v3034 = vadd.f32 0.0, %v3033
        %v3035 = vpop.f32.mrb[0].mxu0
        %3036 = vdwg.mxu0
        %v3037 = vadd.f32 %v2733, %v2911
        %v3038 = vadd.f32 %v2736, %v2914
        %v3039 = vadd.f32 %v2741, %v2919
        %v3040 = vadd.f32 %v2744, %v2922
        %v3041 = vadd.f32 %v2749, %v2927
        %v3042 = vadd.f32 %v2752, %v2930
        %v3043 = vadd.f32 %v2757, %v2935
        %v3044 = vadd.f32 %v2760, %v2938
        %v3045 = vadd.f32 %v2765, %v2943
        %v3046 = vadd.f32 %v2768, %v2946
        %v3047 = vadd.f32 %v2773, %v2951
        %v3048 = vadd.f32 %v2776, %v2954
        %v3049 = vadd.f32 %v2781, %v2959
        %v3050 = vadd.f32 %v2784, %v2962
        %v3051 = vadd.f32 %v2789, %v2967
        %v3052 = vadd.f32 %v2792, %v2970
        %v3053 = vadd.f32 %v2797, %v2975
        %v3054 = vadd.f32 %v2800, %v2978
        %v3055 = vadd.f32 %v2805, %v2983
        %v3056 = vadd.f32 %v2808, %v2986
        %v3057 = vadd.f32 %v2813, %v2991
        %v3058 = vadd.f32 %v2816, %v2994
        %v3059 = vadd.f32 %v2821, %v2999
        %v3060 = vadd.f32 %v2824, %v3002
        %v3061 = vadd.f32 %v2829, %v3007
        %v3062 = vadd.f32 %v2832, %v3010
        %v3063 = vadd.f32 %v2837, %v3015
        %v3064 = vadd.f32 %v2840, %v3018
        %v3065 = vadd.f32 %v2845, %v3023
        %v3066 = vadd.f32 %v2848, %v3026
        %v3067 = vadd.f32 %v2853, %v3031
        %v3068 = vadd.f32 %v2856, %v3034
        %s3069 = scalar_lea.vmem %s3, 48
        %v3070 = vld [vmem:[%s3069] sm:$0xf]
        %v3071 = vld [vmem:[%s3069 + $0x4] sm:$0xf]
        %v3072 = vld [vmem:[%s3069 + $0x8] sm:$0xf]
        %v3073 = vld [vmem:[%s3069 + $0xc] sm:$0xf]
        %v3078 = vunpack.c.l.b16 %v3070
        %v3079 = vunpack.c.l.b16 %v3071
        %v3080 = vunpack.c.l.b16 %v3072
        %v3081 = vunpack.c.l.b16 %v3073
        %v3082 = vpack.c.b16 %v3079, %v3078
        %v3083 = vpack.c.b16 %v3081, %v3080
        %v3087 = vsel %vm2486, %v2461, 0
        %v3090 = vsel %vm2486, %v2462, 0
        %v3093 = vsel %vm2486, %v2463, 0
        %3095 = vmatprep.subr.bf16.mxu0 0
        %3096 = vmatpush1.bf16.msra.mxu0 %v3082
        %3097 = vmatprep.subr.bf16.mxu0 0
        %3098 = vmatpush1.bf16.msra.mxu0 %v3083
        %3099 = vmatprep.subr.bf16.mxu0 0
        %3100 = vmatpush1.bf16.msra.mxu0 0
        %3101 = vmatprep.subr.bf16.mxu0 0
        %3102 = vmatpush1.bf16.msra.mxu0 0
        %3103 = vmatprep.subr.bf16.mxu0 0
        %3104 = vmatpush1.bf16.msra.mxu0 0
        %3105 = vmatprep.subr.bf16.mxu0 0
        %3106 = vmatpush1.bf16.msra.mxu0 0
        %3107 = vmatprep.subr.bf16.mxu0 0
        %3108 = vmatpush1.bf16.msra.mxu0 0
        %3109 = vmatprep.subr.bf16.mxu0 0
        %3110 = vmatpush1.bf16.msra.mxu0 0
        %3111 = vmatprep.subr.bf16.mxu0 0
        %3112 = vmatpush1.bf16.msra.mxu0 0
        %3113 = vmatprep.subr.bf16.mxu0 0
        %3114 = vmatpush1.bf16.msra.mxu0 0
        %3115 = vmatprep.subr.bf16.mxu0 0
        %3116 = vmatpush1.bf16.msra.mxu0 0
        %3117 = vmatprep.subr.bf16.mxu0 0
        %3118 = vmatpush1.bf16.msra.mxu0 0
        %3119 = vmatprep.subr.bf16.mxu0 0
        %3120 = vmatpush1.bf16.msra.mxu0 0
        %3121 = vmatprep.subr.bf16.mxu0 0
        %3122 = vmatpush1.bf16.msra.mxu0 0
        %3123 = vmatprep.subr.bf16.mxu0 0
        %3124 = vmatpush1.bf16.msra.mxu0 0
        %3125 = vmatprep.subr.bf16.mxu0 0
        %3126 = vmatpush1.bf16.msra.mxu0 0
        %3127 = vmatprep.mubr.bf16.mxu0 0
        %3128 = vmatmul.mubr.bf16.gmra.mrb[0].mxu0 %v2487
        %v3129 = vpop.f32.mrb[0].mxu0
        %v3130 = vadd.f32 0.0, %v3129
        %v3131 = vpop.f32.mrb[0].mxu0
        %v3132 = vpop.f32.mrb[0].mxu0
        %v3133 = vadd.f32 0.0, %v3132
        %v3134 = vpop.f32.mrb[0].mxu0
        %3135 = vmatprep.mubr.bf16.mxu0 0
        %3136 = vmatmul.mubr.bf16.gmra.mrb[0].mxu0 %v2490
        %v3137 = vpop.f32.mrb[0].mxu0
        %v3138 = vadd.f32 0.0, %v3137
        %v3139 = vpop.f32.mrb[0].mxu0
        %v3140 = vpop.f32.mrb[0].mxu0
        %v3141 = vadd.f32 0.0, %v3140
        %v3142 = vpop.f32.mrb[0].mxu0
        %3143 = vmatprep.mubr.bf16.mxu0 0
        %3144 = vmatmul.mubr.bf16.gmra.mrb[0].mxu0 %v2493
        %v3145 = vpop.f32.mrb[0].mxu0
        %v3146 = vadd.f32 0.0, %v3145
        %v3147 = vpop.f32.mrb[0].mxu0
        %v3148 = vpop.f32.mrb[0].mxu0
        %v3149 = vadd.f32 0.0, %v3148
        %v3150 = vpop.f32.mrb[0].mxu0
        %3151 = vmatprep.mubr.bf16.mxu0 0
        %3152 = vmatmul.mubr.bf16.gmra.mrb[0].mxu0 %v2496
        %v3153 = vpop.f32.mrb[0].mxu0
        %v3154 = vadd.f32 0.0, %v3153
        %v3155 = vpop.f32.mrb[0].mxu0
        %v3156 = vpop.f32.mrb[0].mxu0
        %v3157 = vadd.f32 0.0, %v3156
        %v3158 = vpop.f32.mrb[0].mxu0
        %3159 = vmatprep.mubr.bf16.mxu0 0
        %3160 = vmatmul.mubr.bf16.gmra.mrb[0].mxu0 %v2487
        %v3161 = vpop.f32.mrb[0].mxu0
        %v3162 = vadd.f32 0.0, %v3161
        %v3163 = vpop.f32.mrb[0].mxu0
        %v3164 = vpop.f32.mrb[0].mxu0
        %v3165 = vadd.f32 0.0, %v3164
        %v3166 = vpop.f32.mrb[0].mxu0
        %3167 = vmatprep.mubr.bf16.mxu0 0
        %3168 = vmatmul.mubr.bf16.gmra.mrb[0].mxu0 %v2502
        %v3169 = vpop.f32.mrb[0].mxu0
        %v3170 = vadd.f32 0.0, %v3169
        %v3171 = vpop.f32.mrb[0].mxu0
        %v3172 = vpop.f32.mrb[0].mxu0
        %v3173 = vadd.f32 0.0, %v3172
        %v3174 = vpop.f32.mrb[0].mxu0
        %3175 = vmatprep.mubr.bf16.mxu0 0
        %3176 = vmatmul.mubr.bf16.gmra.mrb[0].mxu0 %v2505
        %v3177 = vpop.f32.mrb[0].mxu0
        %v3178 = vadd.f32 0.0, %v3177
        %v3179 = vpop.f32.mrb[0].mxu0
        %v3180 = vpop.f32.mrb[0].mxu0
        %v3181 = vadd.f32 0.0, %v3180
        %v3182 = vpop.f32.mrb[0].mxu0
        %3183 = vmatprep.mubr.bf16.mxu0 0
        %3184 = vmatmul.mubr.bf16.gmra.mrb[0].mxu0 %v2508
        %v3185 = vpop.f32.mrb[0].mxu0
        %v3186 = vadd.f32 0.0, %v3185
        %v3187 = vpop.f32.mrb[0].mxu0
        %v3188 = vpop.f32.mrb[0].mxu0
        %v3189 = vadd.f32 0.0, %v3188
        %v3190 = vpop.f32.mrb[0].mxu0
        %3191 = vmatprep.mubr.bf16.mxu0 0
        %3192 = vmatmul.mubr.bf16.gmra.mrb[0].mxu0 %v2487
        %v3193 = vpop.f32.mrb[0].mxu0
        %v3194 = vadd.f32 0.0, %v3193
        %v3195 = vpop.f32.mrb[0].mxu0
        %v3196 = vpop.f32.mrb[0].mxu0
        %v3197 = vadd.f32 0.0, %v3196
        %v3198 = vpop.f32.mrb[0].mxu0
        %3199 = vmatprep.mubr.bf16.mxu0 0
        %3200 = vmatmul.mubr.bf16.gmra.mrb[0].mxu0 %v2514
        %v3201 = vpop.f32.mrb[0].mxu0
        %v3202 = vadd.f32 0.0, %v3201
        %v3203 = vpop.f32.mrb[0].mxu0
        %v3204 = vpop.f32.mrb[0].mxu0
        %v3205 = vadd.f32 0.0, %v3204
        %v3206 = vpop.f32.mrb[0].mxu0
        %3207 = vmatprep.mubr.bf16.mxu0 0
        %3208 = vmatmul.mubr.bf16.gmra.mrb[0].mxu0 %v2517
        %v3209 = vpop.f32.mrb[0].mxu0
        %v3210 = vadd.f32 0.0, %v3209
        %v3211 = vpop.f32.mrb[0].mxu0
        %v3212 = vpop.f32.mrb[0].mxu0
        %v3213 = vadd.f32 0.0, %v3212
        %v3214 = vpop.f32.mrb[0].mxu0
        %3215 = vmatprep.mubr.bf16.mxu0 0
        %3216 = vmatmul.mubr.bf16.gmra.mrb[0].mxu0 %v2520
        %v3217 = vpop.f32.mrb[0].mxu0
        %v3218 = vadd.f32 0.0, %v3217
        %v3219 = vpop.f32.mrb[0].mxu0
        %v3220 = vpop.f32.mrb[0].mxu0
        %v3221 = vadd.f32 0.0, %v3220
        %v3222 = vpop.f32.mrb[0].mxu0
        %3223 = vmatprep.mubr.bf16.mxu0 0
        %3224 = vmatmul.mubr.bf16.gmra.mrb[0].mxu0 %v2487
        %v3225 = vpop.f32.mrb[0].mxu0
        %v3226 = vadd.f32 0.0, %v3225
        %v3227 = vpop.f32.mrb[0].mxu0
        %v3228 = vpop.f32.mrb[0].mxu0
        %v3229 = vadd.f32 0.0, %v3228
        %v3230 = vpop.f32.mrb[0].mxu0
        %3231 = vmatprep.mubr.bf16.mxu0 0
        %3232 = vmatmul.mubr.bf16.gmra.mrb[0].mxu0 %v3087
        %v3233 = vpop.f32.mrb[0].mxu0
        %v3234 = vadd.f32 0.0, %v3233
        %v3235 = vpop.f32.mrb[0].mxu0
        %v3236 = vpop.f32.mrb[0].mxu0
        %v3237 = vadd.f32 0.0, %v3236
        %v3238 = vpop.f32.mrb[0].mxu0
        %3239 = vmatprep.mubr.bf16.mxu0 0
        %3240 = vmatmul.mubr.bf16.gmra.mrb[0].mxu0 %v3090
        %v3241 = vpop.f32.mrb[0].mxu0
        %v3242 = vadd.f32 0.0, %v3241
        %v3243 = vpop.f32.mrb[0].mxu0
        %v3244 = vpop.f32.mrb[0].mxu0
        %v3245 = vadd.f32 0.0, %v3244
        %v3246 = vpop.f32.mrb[0].mxu0
        %3247 = vmatprep.mubr.bf16.mxu0 0
        %3248 = vmatmul.mubr.bf16.gmra.mrb[0].mxu0 %v3093
        %v3249 = vpop.f32.mrb[0].mxu0
        %v3250 = vadd.f32 0.0, %v3249
        %v3251 = vpop.f32.mrb[0].mxu0
        %v3252 = vpop.f32.mrb[0].mxu0
        %v3253 = vadd.f32 0.0, %v3252
        %v3254 = vpop.f32.mrb[0].mxu0
        %3255 = vdwg.mxu0
        %v3256 = vadd.f32 %v3037, %v3130
        %v3257 = vadd.f32 %v3038, %v3133
        %v3258 = vadd.f32 %v3039, %v3138
        %v3259 = vadd.f32 %v3040, %v3141
        %v3260 = vadd.f32 %v3041, %v3146
        %v3261 = vadd.f32 %v3042, %v3149
        %v3262 = vadd.f32 %v3043, %v3154
        %v3263 = vadd.f32 %v3044, %v3157
        %v3264 = vadd.f32 %v3045, %v3162
        %v3265 = vadd.f32 %v3046, %v3165
        %v3266 = vadd.f32 %v3047, %v3170
        %v3267 = vadd.f32 %v3048, %v3173
        %v3268 = vadd.f32 %v3049, %v3178
        %v3269 = vadd.f32 %v3050, %v3181
        %v3270 = vadd.f32 %v3051, %v3186
        %v3271 = vadd.f32 %v3052, %v3189
        %v3272 = vadd.f32 %v3053, %v3194
        %v3273 = vadd.f32 %v3054, %v3197
        %v3274 = vadd.f32 %v3055, %v3202
        %v3275 = vadd.f32 %v3056, %v3205
        %v3276 = vadd.f32 %v3057, %v3210
        %v3277 = vadd.f32 %v3058, %v3213
        %v3278 = vadd.f32 %v3059, %v3218
        %v3279 = vadd.f32 %v3060, %v3221
        %v3280 = vadd.f32 %v3061, %v3226
        %v3281 = vadd.f32 %v3062, %v3229
        %v3282 = vadd.f32 %v3063, %v3234
        %v3283 = vadd.f32 %v3064, %v3237
        %v3284 = vadd.f32 %v3065, %v3242
        %v3285 = vadd.f32 %v3066, %v3245
        %v3286 = vadd.f32 %v3067, %v3250
        %v3287 = vadd.f32 %v3068, %v3253
        %s3288 = scalar_lea.vmem %s3, 64
        %v3289 = vld [vmem:[%s3288] sm:$0xf]
        %v3290 = vld [vmem:[%s3288 + $0x4] sm:$0xf]
        %v3291 = vld [vmem:[%s3288 + $0x8] sm:$0xf]
        %v3292 = vld [vmem:[%s3288 + $0xc] sm:$0xf]
        %v3297 = vunpack.c.l.b16 %v3289
        %v3298 = vunpack.c.l.b16 %v3290
        %v3299 = vunpack.c.l.b16 %v3291
        %v3300 = vunpack.c.l.b16 %v3292
        %v3301 = vpack.c.b16 %v3298, %v3297
        %v3302 = vpack.c.b16 %v3300, %v3299
        %v3306 = vsel %vm2486, %v2464, 0
        %3308 = vmatprep.subr.bf16.mxu0 0
        %3309 = vmatpush1.bf16.msra.mxu0 %v3301
        %3310 = vmatprep.subr.bf16.mxu0 0
        %3311 = vmatpush1.bf16.msra.mxu0 %v3302
        %3312 = vmatprep.subr.bf16.mxu0 0
        %3313 = vmatpush1.bf16.msra.mxu0 0
        %3314 = vmatprep.subr.bf16.mxu0 0
        %3315 = vmatpush1.bf16.msra.mxu0 0
        %3316 = vmatprep.subr.bf16.mxu0 0
        %3317 = vmatpush1.bf16.msra.mxu0 0
        %3318 = vmatprep.subr.bf16.mxu0 0
        %3319 = vmatpush1.bf16.msra.mxu0 0
        %3320 = vmatprep.subr.bf16.mxu0 0
        %3321 = vmatpush1.bf16.msra.mxu0 0
        %3322 = vmatprep.subr.bf16.mxu0 0
        %3323 = vmatpush1.bf16.msra.mxu0 0
        %3324 = vmatprep.subr.bf16.mxu0 0
        %3325 = vmatpush1.bf16.msra.mxu0 0
        %3326 = vmatprep.subr.bf16.mxu0 0
        %3327 = vmatpush1.bf16.msra.mxu0 0
        %3328 = vmatprep.subr.bf16.mxu0 0
        %3329 = vmatpush1.bf16.msra.mxu0 0
        %3330 = vmatprep.subr.bf16.mxu0 0
        %3331 = vmatpush1.bf16.msra.mxu0 0
        %3332 = vmatprep.subr.bf16.mxu0 0
        %3333 = vmatpush1.bf16.msra.mxu0 0
        %3334 = vmatprep.subr.bf16.mxu0 0
        %3335 = vmatpush1.bf16.msra.mxu0 0
        %3336 = vmatprep.subr.bf16.mxu0 0
        %3337 = vmatpush1.bf16.msra.mxu0 0
        %3338 = vmatprep.subr.bf16.mxu0 0
        %3339 = vmatpush1.bf16.msra.mxu0 0
        %3340 = vmatprep.mubr.bf16.mxu0 0
        %3341 = vmatmul.mubr.bf16.gmra.mrb[0].mxu0 %v2490
        %v3342 = vpop.f32.mrb[0].mxu0
        %v3343 = vadd.f32 0.0, %v3342
        %v3344 = vpop.f32.mrb[0].mxu0
        %v3345 = vpop.f32.mrb[0].mxu0
        %v3346 = vadd.f32 0.0, %v3345
        %v3347 = vpop.f32.mrb[0].mxu0
        %3348 = vmatprep.mubr.bf16.mxu0 0
        %3349 = vmatmul.mubr.bf16.gmra.mrb[0].mxu0 %v2493
        %v3350 = vpop.f32.mrb[0].mxu0
        %v3351 = vadd.f32 0.0, %v3350
        %v3352 = vpop.f32.mrb[0].mxu0
        %v3353 = vpop.f32.mrb[0].mxu0
        %v3354 = vadd.f32 0.0, %v3353
        %v3355 = vpop.f32.mrb[0].mxu0
        %3356 = vmatprep.mubr.bf16.mxu0 0
        %3357 = vmatmul.mubr.bf16.gmra.mrb[0].mxu0 %v2496
        %v3358 = vpop.f32.mrb[0].mxu0
        %v3359 = vadd.f32 0.0, %v3358
        %v3360 = vpop.f32.mrb[0].mxu0
        %v3361 = vpop.f32.mrb[0].mxu0
        %v3362 = vadd.f32 0.0, %v3361
        %v3363 = vpop.f32.mrb[0].mxu0
        %3364 = vmatprep.mubr.bf16.mxu0 0
        %3365 = vmatmul.mubr.bf16.gmra.mrb[0].mxu0 %v2499
        %v3366 = vpop.f32.mrb[0].mxu0
        %v3367 = vadd.f32 0.0, %v3366
        %v3368 = vpop.f32.mrb[0].mxu0
        %v3369 = vpop.f32.mrb[0].mxu0
        %v3370 = vadd.f32 0.0, %v3369
        %v3371 = vpop.f32.mrb[0].mxu0
        %3372 = vmatprep.mubr.bf16.mxu0 0
        %3373 = vmatmul.mubr.bf16.gmra.mrb[0].mxu0 %v2502
        %v3374 = vpop.f32.mrb[0].mxu0
        %v3375 = vadd.f32 0.0, %v3374
        %v3376 = vpop.f32.mrb[0].mxu0
        %v3377 = vpop.f32.mrb[0].mxu0
        %v3378 = vadd.f32 0.0, %v3377
        %v3379 = vpop.f32.mrb[0].mxu0
        %3380 = vmatprep.mubr.bf16.mxu0 0
        %3381 = vmatmul.mubr.bf16.gmra.mrb[0].mxu0 %v2505
        %v3382 = vpop.f32.mrb[0].mxu0
        %v3383 = vadd.f32 0.0, %v3382
        %v3384 = vpop.f32.mrb[0].mxu0
        %v3385 = vpop.f32.mrb[0].mxu0
        %v3386 = vadd.f32 0.0, %v3385
        %v3387 = vpop.f32.mrb[0].mxu0
        %3388 = vmatprep.mubr.bf16.mxu0 0
        %3389 = vmatmul.mubr.bf16.gmra.mrb[0].mxu0 %v2508
        %v3390 = vpop.f32.mrb[0].mxu0
        %v3391 = vadd.f32 0.0, %v3390
        %v3392 = vpop.f32.mrb[0].mxu0
        %v3393 = vpop.f32.mrb[0].mxu0
        %v3394 = vadd.f32 0.0, %v3393
        %v3395 = vpop.f32.mrb[0].mxu0
        %3396 = vmatprep.mubr.bf16.mxu0 0
        %3397 = vmatmul.mubr.bf16.gmra.mrb[0].mxu0 %v2511
        %v3398 = vpop.f32.mrb[0].mxu0
        %v3399 = vadd.f32 0.0, %v3398
        %v3400 = vpop.f32.mrb[0].mxu0
        %v3401 = vpop.f32.mrb[0].mxu0
        %v3402 = vadd.f32 0.0, %v3401
        %v3403 = vpop.f32.mrb[0].mxu0
        %3404 = vmatprep.mubr.bf16.mxu0 0
        %3405 = vmatmul.mubr.bf16.gmra.mrb[0].mxu0 %v2514
        %v3406 = vpop.f32.mrb[0].mxu0
        %v3407 = vadd.f32 0.0, %v3406
        %v3408 = vpop.f32.mrb[0].mxu0
        %v3409 = vpop.f32.mrb[0].mxu0
        %v3410 = vadd.f32 0.0, %v3409
        %v3411 = vpop.f32.mrb[0].mxu0
        %3412 = vmatprep.mubr.bf16.mxu0 0
        %3413 = vmatmul.mubr.bf16.gmra.mrb[0].mxu0 %v2517
        %v3414 = vpop.f32.mrb[0].mxu0
        %v3415 = vadd.f32 0.0, %v3414
        %v3416 = vpop.f32.mrb[0].mxu0
        %v3417 = vpop.f32.mrb[0].mxu0
        %v3418 = vadd.f32 0.0, %v3417
        %v3419 = vpop.f32.mrb[0].mxu0
        %3420 = vmatprep.mubr.bf16.mxu0 0
        %3421 = vmatmul.mubr.bf16.gmra.mrb[0].mxu0 %v2520
        %v3422 = vpop.f32.mrb[0].mxu0
        %v3423 = vadd.f32 0.0, %v3422
        %v3424 = vpop.f32.mrb[0].mxu0
        %v3425 = vpop.f32.mrb[0].mxu0
        %v3426 = vadd.f32 0.0, %v3425
        %v3427 = vpop.f32.mrb[0].mxu0
        %3428 = vmatprep.mubr.bf16.mxu0 0
        %3429 = vmatmul.mubr.bf16.gmra.mrb[0].mxu0 %v2523
        %v3430 = vpop.f32.mrb[0].mxu0
        %v3431 = vadd.f32 0.0, %v3430
        %v3432 = vpop.f32.mrb[0].mxu0
        %v3433 = vpop.f32.mrb[0].mxu0
        %v3434 = vadd.f32 0.0, %v3433
        %v3435 = vpop.f32.mrb[0].mxu0
        %3436 = vmatprep.mubr.bf16.mxu0 0
        %3437 = vmatmul.mubr.bf16.gmra.mrb[0].mxu0 %v3087
        %v3438 = vpop.f32.mrb[0].mxu0
        %v3439 = vadd.f32 0.0, %v3438
        %v3440 = vpop.f32.mrb[0].mxu0
        %v3441 = vpop.f32.mrb[0].mxu0
        %v3442 = vadd.f32 0.0, %v3441
        %v3443 = vpop.f32.mrb[0].mxu0
        %3444 = vmatprep.mubr.bf16.mxu0 0
        %3445 = vmatmul.mubr.bf16.gmra.mrb[0].mxu0 %v3090
        %v3446 = vpop.f32.mrb[0].mxu0
        %v3447 = vadd.f32 0.0, %v3446
        %v3448 = vpop.f32.mrb[0].mxu0
        %v3449 = vpop.f32.mrb[0].mxu0
        %v3450 = vadd.f32 0.0, %v3449
        %v3451 = vpop.f32.mrb[0].mxu0
        %3452 = vmatprep.mubr.bf16.mxu0 0
        %3453 = vmatmul.mubr.bf16.gmra.mrb[0].mxu0 %v3093
        %v3454 = vpop.f32.mrb[0].mxu0
        %v3455 = vadd.f32 0.0, %v3454
        %v3456 = vpop.f32.mrb[0].mxu0
        %v3457 = vpop.f32.mrb[0].mxu0
        %v3458 = vadd.f32 0.0, %v3457
        %v3459 = vpop.f32.mrb[0].mxu0
        %3460 = vmatprep.mubr.bf16.mxu0 0
        %3461 = vmatmul.mubr.bf16.gmra.mrb[0].mxu0 %v3306
        %v3462 = vpop.f32.mrb[0].mxu0
        %v3463 = vadd.f32 0.0, %v3462
        %v3464 = vpop.f32.mrb[0].mxu0
        %v3465 = vpop.f32.mrb[0].mxu0
        %v3466 = vadd.f32 0.0, %v3465
        %v3467 = vpop.f32.mrb[0].mxu0
        %3468 = vdwg.mxu0
        %v3469 = vadd.f32 %v3256, %v3343
        %v3470 = vadd.f32 %v3257, %v3346
        %v3471 = vadd.f32 %v3258, %v3351
        %v3472 = vadd.f32 %v3259, %v3354
        %v3473 = vadd.f32 %v3260, %v3359
        %v3474 = vadd.f32 %v3261, %v3362
        %v3475 = vadd.f32 %v3262, %v3367
        %v3476 = vadd.f32 %v3263, %v3370
        %v3477 = vadd.f32 %v3264, %v3375
        %v3478 = vadd.f32 %v3265, %v3378
        %v3479 = vadd.f32 %v3266, %v3383
        %v3480 = vadd.f32 %v3267, %v3386
        %v3481 = vadd.f32 %v3268, %v3391
        %v3482 = vadd.f32 %v3269, %v3394
        %v3483 = vadd.f32 %v3270, %v3399
        %v3484 = vadd.f32 %v3271, %v3402
        %v3485 = vadd.f32 %v3272, %v3407
        %v3486 = vadd.f32 %v3273, %v3410
        %v3487 = vadd.f32 %v3274, %v3415
        %v3488 = vadd.f32 %v3275, %v3418
        %v3489 = vadd.f32 %v3276, %v3423
        %v3490 = vadd.f32 %v3277, %v3426
        %v3491 = vadd.f32 %v3278, %v3431
        %v3492 = vadd.f32 %v3279, %v3434
        %v3493 = vadd.f32 %v3280, %v3439
        %v3494 = vadd.f32 %v3281, %v3442
        %v3495 = vadd.f32 %v3282, %v3447
        %v3496 = vadd.f32 %v3283, %v3450
        %v3497 = vadd.f32 %v3284, %v3455
        %v3498 = vadd.f32 %v3285, %v3458
        %v3499 = vadd.f32 %v3286, %v3463
        %v3500 = vadd.f32 %v3287, %v3466
        %s3501 = scalar_lea.vmem %s3, 80
        %v3502 = vld [vmem:[%s3501] sm:$0xf]
        %v3503 = vld [vmem:[%s3501 + $0x4] sm:$0xf]
        %v3504 = vld [vmem:[%s3501 + $0x8] sm:$0xf]
        %v3505 = vld [vmem:[%s3501 + $0xc] sm:$0xf]
        %v3510 = vunpack.c.l.b16 %v3502
        %v3511 = vunpack.c.l.b16 %v3503
        %v3512 = vunpack.c.l.b16 %v3504
        %v3513 = vunpack.c.l.b16 %v3505
        %v3514 = vpack.c.b16 %v3511, %v3510
        %v3515 = vpack.c.b16 %v3513, %v3512
        %3518 = vmatprep.subr.bf16.mxu0 0
        %3519 = vmatpush1.bf16.msra.mxu0 %v3514
        %3520 = vmatprep.subr.bf16.mxu0 0
        %3521 = vmatpush1.bf16.msra.mxu0 %v3515
        %3522 = vmatprep.subr.bf16.mxu0 0
        %3523 = vmatpush1.bf16.msra.mxu0 0
        %3524 = vmatprep.subr.bf16.mxu0 0
        %3525 = vmatpush1.bf16.msra.mxu0 0
        %3526 = vmatprep.subr.bf16.mxu0 0
        %3527 = vmatpush1.bf16.msra.mxu0 0
        %3528 = vmatprep.subr.bf16.mxu0 0
        %3529 = vmatpush1.bf16.msra.mxu0 0
        %3530 = vmatprep.subr.bf16.mxu0 0
        %3531 = vmatpush1.bf16.msra.mxu0 0
        %3532 = vmatprep.subr.bf16.mxu0 0
        %3533 = vmatpush1.bf16.msra.mxu0 0
        %3534 = vmatprep.subr.bf16.mxu0 0
        %3535 = vmatpush1.bf16.msra.mxu0 0
        %3536 = vmatprep.subr.bf16.mxu0 0
        %3537 = vmatpush1.bf16.msra.mxu0 0
        %3538 = vmatprep.subr.bf16.mxu0 0
        %3539 = vmatpush1.bf16.msra.mxu0 0
        %3540 = vmatprep.subr.bf16.mxu0 0
        %3541 = vmatpush1.bf16.msra.mxu0 0
        %3542 = vmatprep.subr.bf16.mxu0 0
        %3543 = vmatpush1.bf16.msra.mxu0 0
        %3544 = vmatprep.subr.bf16.mxu0 0
        %3545 = vmatpush1.bf16.msra.mxu0 0
        %3546 = vmatprep.subr.bf16.mxu0 0
        %3547 = vmatpush1.bf16.msra.mxu0 0
        %3548 = vmatprep.subr.bf16.mxu0 0
        %3549 = vmatpush1.bf16.msra.mxu0 0
        %3550 = vmatprep.mubr.bf16.mxu0 0
        %3551 = vmatmul.mubr.bf16.gmra.mrb[0].mxu0 %v2493
        %v3552 = vpop.f32.mrb[0].mxu0
        %v3553 = vadd.f32 0.0, %v3552
        %v3554 = vpop.f32.mrb[0].mxu0
        %v3555 = vpop.f32.mrb[0].mxu0
        %v3556 = vadd.f32 0.0, %v3555
        %v3557 = vpop.f32.mrb[0].mxu0
        %3558 = vmatprep.mubr.bf16.mxu0 0
        %3559 = vmatmul.mubr.bf16.gmra.mrb[0].mxu0 %v2496
        %v3560 = vpop.f32.mrb[0].mxu0
        %v3561 = vadd.f32 0.0, %v3560
        %v3562 = vpop.f32.mrb[0].mxu0
        %v3563 = vpop.f32.mrb[0].mxu0
        %v3564 = vadd.f32 0.0, %v3563
        %v3565 = vpop.f32.mrb[0].mxu0
        %3566 = vmatprep.mubr.bf16.mxu0 0
        %3567 = vmatmul.mubr.bf16.gmra.mrb[0].mxu0 %v2499
        %v3568 = vpop.f32.mrb[0].mxu0
        %v3569 = vadd.f32 0.0, %v3568
        %v3570 = vpop.f32.mrb[0].mxu0
        %v3571 = vpop.f32.mrb[0].mxu0
        %v3572 = vadd.f32 0.0, %v3571
        %v3573 = vpop.f32.mrb[0].mxu0
        %3574 = vmatprep.mubr.bf16.mxu0 0
        %3575 = vmatmul.mubr.bf16.gmra.mrb[0].mxu0 %v2487
        %v3576 = vpop.f32.mrb[0].mxu0
        %v3577 = vadd.f32 0.0, %v3576
        %v3578 = vpop.f32.mrb[0].mxu0
        %v3579 = vpop.f32.mrb[0].mxu0
        %v3580 = vadd.f32 0.0, %v3579
        %v3581 = vpop.f32.mrb[0].mxu0
        %3582 = vmatprep.mubr.bf16.mxu0 0
        %3583 = vmatmul.mubr.bf16.gmra.mrb[0].mxu0 %v2505
        %v3584 = vpop.f32.mrb[0].mxu0
        %v3585 = vadd.f32 0.0, %v3584
        %v3586 = vpop.f32.mrb[0].mxu0
        %v3587 = vpop.f32.mrb[0].mxu0
        %v3588 = vadd.f32 0.0, %v3587
        %v3589 = vpop.f32.mrb[0].mxu0
        %3590 = vmatprep.mubr.bf16.mxu0 0
        %3591 = vmatmul.mubr.bf16.gmra.mrb[0].mxu0 %v2508
        %v3592 = vpop.f32.mrb[0].mxu0
        %v3593 = vadd.f32 0.0, %v3592
        %v3594 = vpop.f32.mrb[0].mxu0
        %v3595 = vpop.f32.mrb[0].mxu0
        %v3596 = vadd.f32 0.0, %v3595
        %v3597 = vpop.f32.mrb[0].mxu0
        %3598 = vmatprep.mubr.bf16.mxu0 0
        %3599 = vmatmul.mubr.bf16.gmra.mrb[0].mxu0 %v2511
        %v3600 = vpop.f32.mrb[0].mxu0
        %v3601 = vadd.f32 0.0, %v3600
        %v3602 = vpop.f32.mrb[0].mxu0
        %v3603 = vpop.f32.mrb[0].mxu0
        %v3604 = vadd.f32 0.0, %v3603
        %v3605 = vpop.f32.mrb[0].mxu0
        %3606 = vmatprep.mubr.bf16.mxu0 0
        %3607 = vmatmul.mubr.bf16.gmra.mrb[0].mxu0 %v2487
        %v3608 = vpop.f32.mrb[0].mxu0
        %v3609 = vadd.f32 0.0, %v3608
        %v3610 = vpop.f32.mrb[0].mxu0
        %v3611 = vpop.f32.mrb[0].mxu0
        %v3612 = vadd.f32 0.0, %v3611
        %v3613 = vpop.f32.mrb[0].mxu0
        %3614 = vmatprep.mubr.bf16.mxu0 0
        %3615 = vmatmul.mubr.bf16.gmra.mrb[0].mxu0 %v2517
        %v3616 = vpop.f32.mrb[0].mxu0
        %v3617 = vadd.f32 0.0, %v3616
        %v3618 = vpop.f32.mrb[0].mxu0
        %v3619 = vpop.f32.mrb[0].mxu0
        %v3620 = vadd.f32 0.0, %v3619
        %v3621 = vpop.f32.mrb[0].mxu0
        %3622 = vmatprep.mubr.bf16.mxu0 0
        %3623 = vmatmul.mubr.bf16.gmra.mrb[0].mxu0 %v2520
        %v3624 = vpop.f32.mrb[0].mxu0
        %v3625 = vadd.f32 0.0, %v3624
        %v3626 = vpop.f32.mrb[0].mxu0
        %v3627 = vpop.f32.mrb[0].mxu0
        %v3628 = vadd.f32 0.0, %v3627
        %v3629 = vpop.f32.mrb[0].mxu0
        %3630 = vmatprep.mubr.bf16.mxu0 0
        %3631 = vmatmul.mubr.bf16.gmra.mrb[0].mxu0 %v2523
        %v3632 = vpop.f32.mrb[0].mxu0
        %v3633 = vadd.f32 0.0, %v3632
        %v3634 = vpop.f32.mrb[0].mxu0
        %v3635 = vpop.f32.mrb[0].mxu0
        %v3636 = vadd.f32 0.0, %v3635
        %v3637 = vpop.f32.mrb[0].mxu0
        %3638 = vmatprep.mubr.bf16.mxu0 0
        %3639 = vmatmul.mubr.bf16.gmra.mrb[0].mxu0 %v2487
        %v3640 = vpop.f32.mrb[0].mxu0
        %v3641 = vadd.f32 0.0, %v3640
        %v3642 = vpop.f32.mrb[0].mxu0
        %v3643 = vpop.f32.mrb[0].mxu0
        %v3644 = vadd.f32 0.0, %v3643
        %v3645 = vpop.f32.mrb[0].mxu0
        %3646 = vmatprep.mubr.bf16.mxu0 0
        %3647 = vmatmul.mubr.bf16.gmra.mrb[0].mxu0 %v3090
        %v3648 = vpop.f32.mrb[0].mxu0
        %v3649 = vadd.f32 0.0, %v3648
        %v3650 = vpop.f32.mrb[0].mxu0
        %v3651 = vpop.f32.mrb[0].mxu0
        %v3652 = vadd.f32 0.0, %v3651
        %v3653 = vpop.f32.mrb[0].mxu0
        %3654 = vmatprep.mubr.bf16.mxu0 0
        %3655 = vmatmul.mubr.bf16.gmra.mrb[0].mxu0 %v3093
        %v3656 = vpop.f32.mrb[0].mxu0
        %v3657 = vadd.f32 0.0, %v3656
        %v3658 = vpop.f32.mrb[0].mxu0
        %v3659 = vpop.f32.mrb[0].mxu0
        %v3660 = vadd.f32 0.0, %v3659
        %v3661 = vpop.f32.mrb[0].mxu0
        %3662 = vmatprep.mubr.bf16.mxu0 0
        %3663 = vmatmul.mubr.bf16.gmra.mrb[0].mxu0 %v3306
        %v3664 = vpop.f32.mrb[0].mxu0
        %v3665 = vadd.f32 0.0, %v3664
        %v3666 = vpop.f32.mrb[0].mxu0
        %v3667 = vpop.f32.mrb[0].mxu0
        %v3668 = vadd.f32 0.0, %v3667
        %v3669 = vpop.f32.mrb[0].mxu0
        %3670 = vmatprep.mubr.bf16.mxu0 0
        %3671 = vmatmul.mubr.bf16.gmra.mrb[0].mxu0 %v2487
        %v3672 = vpop.f32.mrb[0].mxu0
        %v3673 = vadd.f32 0.0, %v3672
        %v3674 = vpop.f32.mrb[0].mxu0
        %v3675 = vpop.f32.mrb[0].mxu0
        %v3676 = vadd.f32 0.0, %v3675
        %v3677 = vpop.f32.mrb[0].mxu0
        %3678 = vdwg.mxu0
        %v3679 = vadd.f32 %v3469, %v3553
        %v3680 = vadd.f32 %v3470, %v3556
        %v3681 = vadd.f32 %v3471, %v3561
        %v3682 = vadd.f32 %v3472, %v3564
        %v3683 = vadd.f32 %v3473, %v3569
        %v3684 = vadd.f32 %v3474, %v3572
        %v3685 = vadd.f32 %v3475, %v3577
        %v3686 = vadd.f32 %v3476, %v3580
        %v3687 = vadd.f32 %v3477, %v3585
        %v3688 = vadd.f32 %v3478, %v3588
        %v3689 = vadd.f32 %v3479, %v3593
        %v3690 = vadd.f32 %v3480, %v3596
        %v3691 = vadd.f32 %v3481, %v3601
        %v3692 = vadd.f32 %v3482, %v3604
        %v3693 = vadd.f32 %v3483, %v3609
        %v3694 = vadd.f32 %v3484, %v3612
        %v3695 = vadd.f32 %v3485, %v3617
        %v3696 = vadd.f32 %v3486, %v3620
        %v3697 = vadd.f32 %v3487, %v3625
        %v3698 = vadd.f32 %v3488, %v3628
        %v3699 = vadd.f32 %v3489, %v3633
        %v3700 = vadd.f32 %v3490, %v3636
        %v3701 = vadd.f32 %v3491, %v3641
        %v3702 = vadd.f32 %v3492, %v3644
        %v3703 = vadd.f32 %v3493, %v3649
        %v3704 = vadd.f32 %v3494, %v3652
        %v3705 = vadd.f32 %v3495, %v3657
        %v3706 = vadd.f32 %v3496, %v3660
        %v3707 = vadd.f32 %v3497, %v3665
        %v3708 = vadd.f32 %v3498, %v3668
        %v3709 = vadd.f32 %v3499, %v3673
        %v3710 = vadd.f32 %v3500, %v3676
        %s3711 = scalar_lea.vmem %s3, 96
        %v3712 = vld [vmem:[%s3711] sm:$0xf]
        %v3713 = vld [vmem:[%s3711 + $0x4] sm:$0xf]
        %v3714 = vld [vmem:[%s3711 + $0x8] sm:$0xf]
        %v3715 = vld [vmem:[%s3711 + $0xc] sm:$0xf]
        %v3720 = vunpack.c.l.b16 %v3712
        %v3721 = vunpack.c.l.b16 %v3713
        %v3722 = vunpack.c.l.b16 %v3714
        %v3723 = vunpack.c.l.b16 %v3715
        %v3724 = vpack.c.b16 %v3721, %v3720
        %v3725 = vpack.c.b16 %v3723, %v3722
        %3728 = vmatprep.subr.bf16.mxu0 0
        %3729 = vmatpush1.bf16.msra.mxu0 %v3724
        %3730 = vmatprep.subr.bf16.mxu0 0
        %3731 = vmatpush1.bf16.msra.mxu0 %v3725
        %3732 = vmatprep.subr.bf16.mxu0 0
        %3733 = vmatpush1.bf16.msra.mxu0 0
        %3734 = vmatprep.subr.bf16.mxu0 0
        %3735 = vmatpush1.bf16.msra.mxu0 0
        %3736 = vmatprep.subr.bf16.mxu0 0
        %3737 = vmatpush1.bf16.msra.mxu0 0
        %3738 = vmatprep.subr.bf16.mxu0 0
        %3739 = vmatpush1.bf16.msra.mxu0 0
        %3740 = vmatprep.subr.bf16.mxu0 0
        %3741 = vmatpush1.bf16.msra.mxu0 0
        %3742 = vmatprep.subr.bf16.mxu0 0
        %3743 = vmatpush1.bf16.msra.mxu0 0
        %3744 = vmatprep.subr.bf16.mxu0 0
        %3745 = vmatpush1.bf16.msra.mxu0 0
        %3746 = vmatprep.subr.bf16.mxu0 0
        %3747 = vmatpush1.bf16.msra.mxu0 0
        %3748 = vmatprep.subr.bf16.mxu0 0
        %3749 = vmatpush1.bf16.msra.mxu0 0
        %3750 = vmatprep.subr.bf16.mxu0 0
        %3751 = vmatpush1.bf16.msra.mxu0 0
        %3752 = vmatprep.subr.bf16.mxu0 0
        %3753 = vmatpush1.bf16.msra.mxu0 0
        %3754 = vmatprep.subr.bf16.mxu0 0
        %3755 = vmatpush1.bf16.msra.mxu0 0
        %3756 = vmatprep.subr.bf16.mxu0 0
        %3757 = vmatpush1.bf16.msra.mxu0 0
        %3758 = vmatprep.subr.bf16.mxu0 0
        %3759 = vmatpush1.bf16.msra.mxu0 0
        %3760 = vmatprep.mubr.bf16.mxu0 0
        %3761 = vmatmul.mubr.bf16.gmra.mrb[0].mxu0 %v2487
        %v3762 = vpop.f32.mrb[0].mxu0
        %v3763 = vadd.f32 0.0, %v3762
        %v3764 = vpop.f32.mrb[0].mxu0
        %v3765 = vpop.f32.mrb[0].mxu0
        %v3766 = vadd.f32 0.0, %v3765
        %v3767 = vpop.f32.mrb[0].mxu0
        %3768 = vmatprep.mubr.bf16.mxu0 0
        %3769 = vmatmul.mubr.bf16.gmra.mrb[0].mxu0 %v2502
        %v3770 = vpop.f32.mrb[0].mxu0
        %v3771 = vadd.f32 0.0, %v3770
        %v3772 = vpop.f32.mrb[0].mxu0
        %v3773 = vpop.f32.mrb[0].mxu0
        %v3774 = vadd.f32 0.0, %v3773
        %v3775 = vpop.f32.mrb[0].mxu0
        %3776 = vmatprep.mubr.bf16.mxu0 0
        %3777 = vmatmul.mubr.bf16.gmra.mrb[0].mxu0 %v2505
        %v3778 = vpop.f32.mrb[0].mxu0
        %v3779 = vadd.f32 0.0, %v3778
        %v3780 = vpop.f32.mrb[0].mxu0
        %v3781 = vpop.f32.mrb[0].mxu0
        %v3782 = vadd.f32 0.0, %v3781
        %v3783 = vpop.f32.mrb[0].mxu0
        %3784 = vmatprep.mubr.bf16.mxu0 0
        %3785 = vmatmul.mubr.bf16.gmra.mrb[0].mxu0 %v2508
        %v3786 = vpop.f32.mrb[0].mxu0
        %v3787 = vadd.f32 0.0, %v3786
        %v3788 = vpop.f32.mrb[0].mxu0
        %v3789 = vpop.f32.mrb[0].mxu0
        %v3790 = vadd.f32 0.0, %v3789
        %v3791 = vpop.f32.mrb[0].mxu0
        %3792 = vmatprep.mubr.bf16.mxu0 0
        %3793 = vmatmul.mubr.bf16.gmra.mrb[0].mxu0 %v2487
        %v3794 = vpop.f32.mrb[0].mxu0
        %v3795 = vadd.f32 0.0, %v3794
        %v3796 = vpop.f32.mrb[0].mxu0
        %v3797 = vpop.f32.mrb[0].mxu0
        %v3798 = vadd.f32 0.0, %v3797
        %v3799 = vpop.f32.mrb[0].mxu0
        %3800 = vmatprep.mubr.bf16.mxu0 0
        %3801 = vmatmul.mubr.bf16.gmra.mrb[0].mxu0 %v2514
        %v3802 = vpop.f32.mrb[0].mxu0
        %v3803 = vadd.f32 0.0, %v3802
        %v3804 = vpop.f32.mrb[0].mxu0
        %v3805 = vpop.f32.mrb[0].mxu0
        %v3806 = vadd.f32 0.0, %v3805
        %v3807 = vpop.f32.mrb[0].mxu0
        %3808 = vmatprep.mubr.bf16.mxu0 0
        %3809 = vmatmul.mubr.bf16.gmra.mrb[0].mxu0 %v2517
        %v3810 = vpop.f32.mrb[0].mxu0
        %v3811 = vadd.f32 0.0, %v3810
        %v3812 = vpop.f32.mrb[0].mxu0
        %v3813 = vpop.f32.mrb[0].mxu0
        %v3814 = vadd.f32 0.0, %v3813
        %v3815 = vpop.f32.mrb[0].mxu0
        %3816 = vmatprep.mubr.bf16.mxu0 0
        %3817 = vmatmul.mubr.bf16.gmra.mrb[0].mxu0 %v2520
        %v3818 = vpop.f32.mrb[0].mxu0
        %v3819 = vadd.f32 0.0, %v3818
        %v3820 = vpop.f32.mrb[0].mxu0
        %v3821 = vpop.f32.mrb[0].mxu0
        %v3822 = vadd.f32 0.0, %v3821
        %v3823 = vpop.f32.mrb[0].mxu0
        %3824 = vmatprep.mubr.bf16.mxu0 0
        %3825 = vmatmul.mubr.bf16.gmra.mrb[0].mxu0 %v2487
        %v3826 = vpop.f32.mrb[0].mxu0
        %v3827 = vadd.f32 0.0, %v3826
        %v3828 = vpop.f32.mrb[0].mxu0
        %v3829 = vpop.f32.mrb[0].mxu0
        %v3830 = vadd.f32 0.0, %v3829
        %v3831 = vpop.f32.mrb[0].mxu0
        %3832 = vmatprep.mubr.bf16.mxu0 0
        %3833 = vmatmul.mubr.bf16.gmra.mrb[0].mxu0 %v3087
        %v3834 = vpop.f32.mrb[0].mxu0
        %v3835 = vadd.f32 0.0, %v3834
        %v3836 = vpop.f32.mrb[0].mxu0
        %v3837 = vpop.f32.mrb[0].mxu0
        %v3838 = vadd.f32 0.0, %v3837
        %v3839 = vpop.f32.mrb[0].mxu0
        %3840 = vmatprep.mubr.bf16.mxu0 0
        %3841 = vmatmul.mubr.bf16.gmra.mrb[0].mxu0 %v3090
        %v3842 = vpop.f32.mrb[0].mxu0
        %v3843 = vadd.f32 0.0, %v3842
        %v3844 = vpop.f32.mrb[0].mxu0
        %v3845 = vpop.f32.mrb[0].mxu0
        %v3846 = vadd.f32 0.0, %v3845
        %v3847 = vpop.f32.mrb[0].mxu0
        %3848 = vmatprep.mubr.bf16.mxu0 0
        %3849 = vmatmul.mubr.bf16.gmra.mrb[0].mxu0 %v3093
        %v3850 = vpop.f32.mrb[0].mxu0
        %v3851 = vadd.f32 0.0, %v3850
        %v3852 = vpop.f32.mrb[0].mxu0
        %v3853 = vpop.f32.mrb[0].mxu0
        %v3854 = vadd.f32 0.0, %v3853
        %v3855 = vpop.f32.mrb[0].mxu0
        %3856 = vmatprep.mubr.bf16.mxu0 0
        %3857 = vmatmul.mubr.bf16.gmra.mrb[0].mxu0 %v2487
        %v3858 = vpop.f32.mrb[0].mxu0
        %v3859 = vadd.f32 0.0, %v3858
        %v3860 = vpop.f32.mrb[0].mxu0
        %v3861 = vpop.f32.mrb[0].mxu0
        %v3862 = vadd.f32 0.0, %v3861
        %v3863 = vpop.f32.mrb[0].mxu0
        %3864 = vmatprep.mubr.bf16.mxu0 0
        %3865 = vmatmul.mubr.bf16.gmra.mrb[0].mxu0 %v2487
        %v3866 = vpop.f32.mrb[0].mxu0
        %v3867 = vadd.f32 0.0, %v3866
        %v3868 = vpop.f32.mrb[0].mxu0
        %v3869 = vpop.f32.mrb[0].mxu0
        %v3870 = vadd.f32 0.0, %v3869
        %v3871 = vpop.f32.mrb[0].mxu0
        %3872 = vmatprep.mubr.bf16.mxu0 0
        %3873 = vmatmul.mubr.bf16.gmra.mrb[0].mxu0 %v2487
        %v3874 = vpop.f32.mrb[0].mxu0
        %v3875 = vadd.f32 0.0, %v3874
        %v3876 = vpop.f32.mrb[0].mxu0
        %v3877 = vpop.f32.mrb[0].mxu0
        %v3878 = vadd.f32 0.0, %v3877
        %v3879 = vpop.f32.mrb[0].mxu0
        %3880 = vmatprep.mubr.bf16.mxu0 0
        %3881 = vmatmul.mubr.bf16.gmra.mrb[0].mxu0 %v2487
        %v3882 = vpop.f32.mrb[0].mxu0
        %v3883 = vadd.f32 0.0, %v3882
        %v3884 = vpop.f32.mrb[0].mxu0
        %v3885 = vpop.f32.mrb[0].mxu0
        %v3886 = vadd.f32 0.0, %v3885
        %v3887 = vpop.f32.mrb[0].mxu0
        %3888 = vdwg.mxu0
        %v3889 = vadd.f32 %v3679, %v3763
        %v3890 = vadd.f32 %v3680, %v3766
        %v3891 = vadd.f32 %v3681, %v3771
        %v3892 = vadd.f32 %v3682, %v3774
        %v3893 = vadd.f32 %v3683, %v3779
        %v3894 = vadd.f32 %v3684, %v3782
        %v3895 = vadd.f32 %v3685, %v3787
        %v3896 = vadd.f32 %v3686, %v3790
        %v3897 = vadd.f32 %v3687, %v3795
        %v3898 = vadd.f32 %v3688, %v3798
        %v3899 = vadd.f32 %v3689, %v3803
        %v3900 = vadd.f32 %v3690, %v3806
        %v3901 = vadd.f32 %v3691, %v3811
        %v3902 = vadd.f32 %v3692, %v3814
        %v3903 = vadd.f32 %v3693, %v3819
        %v3904 = vadd.f32 %v3694, %v3822
        %v3905 = vadd.f32 %v3695, %v3827
        %v3906 = vadd.f32 %v3696, %v3830
        %v3907 = vadd.f32 %v3697, %v3835
        %v3908 = vadd.f32 %v3698, %v3838
        %v3909 = vadd.f32 %v3699, %v3843
        %v3910 = vadd.f32 %v3700, %v3846
        %v3911 = vadd.f32 %v3701, %v3851
        %v3912 = vadd.f32 %v3702, %v3854
        %v3913 = vadd.f32 %v3703, %v3859
        %v3914 = vadd.f32 %v3704, %v3862
        %v3915 = vadd.f32 %v3705, %v3867
        %v3916 = vadd.f32 %v3706, %v3870
        %v3917 = vadd.f32 %v3707, %v3875
        %v3918 = vadd.f32 %v3708, %v3878
        %v3919 = vadd.f32 %v3709, %v3883
        %v3920 = vadd.f32 %v3710, %v3886
        %s3921 = scalar_lea.vmem %s3, 112
        %v3922 = vld [vmem:[%s3921] sm:$0xf]
        %v3923 = vld [vmem:[%s3921 + $0x4] sm:$0xf]
        %v3924 = vld [vmem:[%s3921 + $0x8] sm:$0xf]
        %v3925 = vld [vmem:[%s3921 + $0xc] sm:$0xf]
        %v3930 = vunpack.c.l.b16 %v3922
        %v3931 = vunpack.c.l.b16 %v3923
        %v3932 = vunpack.c.l.b16 %v3924
        %v3933 = vunpack.c.l.b16 %v3925
        %v3934 = vpack.c.b16 %v3931, %v3930
        %v3935 = vpack.c.b16 %v3933, %v3932
        %3938 = vmatprep.subr.bf16.mxu0 0
        %3939 = vmatpush1.bf16.msra.mxu0 %v3934
        %3940 = vmatprep.subr.bf16.mxu0 0
        %3941 = vmatpush1.bf16.msra.mxu0 %v3935
        %3942 = vmatprep.subr.bf16.mxu0 0
        %3943 = vmatpush1.bf16.msra.mxu0 0
        %3944 = vmatprep.subr.bf16.mxu0 0
        %3945 = vmatpush1.bf16.msra.mxu0 0
        %3946 = vmatprep.subr.bf16.mxu0 0
        %3947 = vmatpush1.bf16.msra.mxu0 0
        %3948 = vmatprep.subr.bf16.mxu0 0
        %3949 = vmatpush1.bf16.msra.mxu0 0
        %3950 = vmatprep.subr.bf16.mxu0 0
        %3951 = vmatpush1.bf16.msra.mxu0 0
        %3952 = vmatprep.subr.bf16.mxu0 0
        %3953 = vmatpush1.bf16.msra.mxu0 0
        %3954 = vmatprep.subr.bf16.mxu0 0
        %3955 = vmatpush1.bf16.msra.mxu0 0
        %3956 = vmatprep.subr.bf16.mxu0 0
        %3957 = vmatpush1.bf16.msra.mxu0 0
        %3958 = vmatprep.subr.bf16.mxu0 0
        %3959 = vmatpush1.bf16.msra.mxu0 0
        %3960 = vmatprep.subr.bf16.mxu0 0
        %3961 = vmatpush1.bf16.msra.mxu0 0
        %3962 = vmatprep.subr.bf16.mxu0 0
        %3963 = vmatpush1.bf16.msra.mxu0 0
        %3964 = vmatprep.subr.bf16.mxu0 0
        %3965 = vmatpush1.bf16.msra.mxu0 0
        %3966 = vmatprep.subr.bf16.mxu0 0
        %3967 = vmatpush1.bf16.msra.mxu0 0
        %3968 = vmatprep.subr.bf16.mxu0 0
        %3969 = vmatpush1.bf16.msra.mxu0 0
        %3970 = vmatprep.mubr.bf16.mxu0 0
        %3971 = vmatmul.mubr.bf16.gmra.mrb[0].mxu0 %v2502
        %v3972 = vpop.f32.mrb[0].mxu0
        %v3973 = vadd.f32 0.0, %v3972
        %v3974 = vpop.f32.mrb[0].mxu0
        %v3975 = vpop.f32.mrb[0].mxu0
        %v3976 = vadd.f32 0.0, %v3975
        %v3977 = vpop.f32.mrb[0].mxu0
        %3978 = vmatprep.mubr.bf16.mxu0 0
        %3979 = vmatmul.mubr.bf16.gmra.mrb[0].mxu0 %v2505
        %v3980 = vpop.f32.mrb[0].mxu0
        %v3981 = vadd.f32 0.0, %v3980
        %v3982 = vpop.f32.mrb[0].mxu0
        %v3983 = vpop.f32.mrb[0].mxu0
        %v3984 = vadd.f32 0.0, %v3983
        %v3985 = vpop.f32.mrb[0].mxu0
        %3986 = vmatprep.mubr.bf16.mxu0 0
        %3987 = vmatmul.mubr.bf16.gmra.mrb[0].mxu0 %v2508
        %v3988 = vpop.f32.mrb[0].mxu0
        %v3989 = vadd.f32 0.0, %v3988
        %v3990 = vpop.f32.mrb[0].mxu0
        %v3991 = vpop.f32.mrb[0].mxu0
        %v3992 = vadd.f32 0.0, %v3991
        %v3993 = vpop.f32.mrb[0].mxu0
        %3994 = vmatprep.mubr.bf16.mxu0 0
        %3995 = vmatmul.mubr.bf16.gmra.mrb[0].mxu0 %v2511
        %v3996 = vpop.f32.mrb[0].mxu0
        %v3997 = vadd.f32 0.0, %v3996
        %v3998 = vpop.f32.mrb[0].mxu0
        %v3999 = vpop.f32.mrb[0].mxu0
        %v4000 = vadd.f32 0.0, %v3999
        %v4001 = vpop.f32.mrb[0].mxu0
        %4002 = vmatprep.mubr.bf16.mxu0 0
        %4003 = vmatmul.mubr.bf16.gmra.mrb[0].mxu0 %v2514
        %v4004 = vpop.f32.mrb[0].mxu0
        %v4005 = vadd.f32 0.0, %v4004
        %v4006 = vpop.f32.mrb[0].mxu0
        %v4007 = vpop.f32.mrb[0].mxu0
        %v4008 = vadd.f32 0.0, %v4007
        %v4009 = vpop.f32.mrb[0].mxu0
        %4010 = vmatprep.mubr.bf16.mxu0 0
        %4011 = vmatmul.mubr.bf16.gmra.mrb[0].mxu0 %v2517
        %v4012 = vpop.f32.mrb[0].mxu0
        %v4013 = vadd.f32 0.0, %v4012
        %v4014 = vpop.f32.mrb[0].mxu0
        %v4015 = vpop.f32.mrb[0].mxu0
        %v4016 = vadd.f32 0.0, %v4015
        %v4017 = vpop.f32.mrb[0].mxu0
        %4018 = vmatprep.mubr.bf16.mxu0 0
        %4019 = vmatmul.mubr.bf16.gmra.mrb[0].mxu0 %v2520
        %v4020 = vpop.f32.mrb[0].mxu0
        %v4021 = vadd.f32 0.0, %v4020
        %v4022 = vpop.f32.mrb[0].mxu0
        %v4023 = vpop.f32.mrb[0].mxu0
        %v4024 = vadd.f32 0.0, %v4023
        %v4025 = vpop.f32.mrb[0].mxu0
        %4026 = vmatprep.mubr.bf16.mxu0 0
        %4027 = vmatmul.mubr.bf16.gmra.mrb[0].mxu0 %v2523
        %v4028 = vpop.f32.mrb[0].mxu0
        %v4029 = vadd.f32 0.0, %v4028
        %v4030 = vpop.f32.mrb[0].mxu0
        %v4031 = vpop.f32.mrb[0].mxu0
        %v4032 = vadd.f32 0.0, %v4031
        %v4033 = vpop.f32.mrb[0].mxu0
        %4034 = vmatprep.mubr.bf16.mxu0 0
        %4035 = vmatmul.mubr.bf16.gmra.mrb[0].mxu0 %v3087
        %v4036 = vpop.f32.mrb[0].mxu0
        %v4037 = vadd.f32 0.0, %v4036
        %v4038 = vpop.f32.mrb[0].mxu0
        %v4039 = vpop.f32.mrb[0].mxu0
        %v4040 = vadd.f32 0.0, %v4039
        %v4041 = vpop.f32.mrb[0].mxu0
        %4042 = vmatprep.mubr.bf16.mxu0 0
        %4043 = vmatmul.mubr.bf16.gmra.mrb[0].mxu0 %v3090
        %v4044 = vpop.f32.mrb[0].mxu0
        %v4045 = vadd.f32 0.0, %v4044
        %v4046 = vpop.f32.mrb[0].mxu0
        %v4047 = vpop.f32.mrb[0].mxu0
        %v4048 = vadd.f32 0.0, %v4047
        %v4049 = vpop.f32.mrb[0].mxu0
        %4050 = vmatprep.mubr.bf16.mxu0 0
        %4051 = vmatmul.mubr.bf16.gmra.mrb[0].mxu0 %v3093
        %v4052 = vpop.f32.mrb[0].mxu0
        %v4053 = vadd.f32 0.0, %v4052
        %v4054 = vpop.f32.mrb[0].mxu0
        %v4055 = vpop.f32.mrb[0].mxu0
        %v4056 = vadd.f32 0.0, %v4055
        %v4057 = vpop.f32.mrb[0].mxu0
        %4058 = vmatprep.mubr.bf16.mxu0 0
        %4059 = vmatmul.mubr.bf16.gmra.mrb[0].mxu0 %v3306
        %v4060 = vpop.f32.mrb[0].mxu0
        %v4061 = vadd.f32 0.0, %v4060
        %v4062 = vpop.f32.mrb[0].mxu0
        %v4063 = vpop.f32.mrb[0].mxu0
        %v4064 = vadd.f32 0.0, %v4063
        %v4065 = vpop.f32.mrb[0].mxu0
        %4066 = vmatprep.mubr.bf16.mxu0 0
        %4067 = vmatmul.mubr.bf16.gmra.mrb[0].mxu0 %v2487
        %v4068 = vpop.f32.mrb[0].mxu0
        %v4069 = vadd.f32 0.0, %v4068
        %v4070 = vpop.f32.mrb[0].mxu0
        %v4071 = vpop.f32.mrb[0].mxu0
        %v4072 = vadd.f32 0.0, %v4071
        %v4073 = vpop.f32.mrb[0].mxu0
        %4074 = vmatprep.mubr.bf16.mxu0 0
        %4075 = vmatmul.mubr.bf16.gmra.mrb[0].mxu0 %v2487
        %v4076 = vpop.f32.mrb[0].mxu0
        %v4077 = vadd.f32 0.0, %v4076
        %v4078 = vpop.f32.mrb[0].mxu0
        %v4079 = vpop.f32.mrb[0].mxu0
        %v4080 = vadd.f32 0.0, %v4079
        %v4081 = vpop.f32.mrb[0].mxu0
        %4082 = vmatprep.mubr.bf16.mxu0 0
        %4083 = vmatmul.mubr.bf16.gmra.mrb[0].mxu0 %v2487
        %v4084 = vpop.f32.mrb[0].mxu0
        %v4085 = vadd.f32 0.0, %v4084
        %v4086 = vpop.f32.mrb[0].mxu0
        %v4087 = vpop.f32.mrb[0].mxu0
        %v4088 = vadd.f32 0.0, %v4087
        %v4089 = vpop.f32.mrb[0].mxu0
        %4090 = vmatprep.mubr.bf16.mxu0 0
        %4091 = vmatmul.mubr.bf16.gmra.mrb[0].mxu0 %v2487
        %v4092 = vpop.f32.mrb[0].mxu0
        %v4093 = vadd.f32 0.0, %v4092
        %v4094 = vpop.f32.mrb[0].mxu0
        %v4095 = vpop.f32.mrb[0].mxu0
        %v4096 = vadd.f32 0.0, %v4095
        %v4097 = vpop.f32.mrb[0].mxu0
        %4098 = vdwg.mxu0
        %v4099 = vadd.f32 %v3889, %v3973
        %v4100 = vadd.f32 %v3890, %v3976
        %v4101 = vadd.f32 %v3891, %v3981
        %v4102 = vadd.f32 %v3892, %v3984
        %v4103 = vadd.f32 %v3893, %v3989
        %v4104 = vadd.f32 %v3894, %v3992
        %v4105 = vadd.f32 %v3895, %v3997
        %v4106 = vadd.f32 %v3896, %v4000
        %v4107 = vadd.f32 %v3897, %v4005
        %v4108 = vadd.f32 %v3898, %v4008
        %v4109 = vadd.f32 %v3899, %v4013
        %v4110 = vadd.f32 %v3900, %v4016
        %v4111 = vadd.f32 %v3901, %v4021
        %v4112 = vadd.f32 %v3902, %v4024
        %v4113 = vadd.f32 %v3903, %v4029
        %v4114 = vadd.f32 %v3904, %v4032
        %v4115 = vadd.f32 %v3905, %v4037
        %v4116 = vadd.f32 %v3906, %v4040
        %v4117 = vadd.f32 %v3907, %v4045
        %v4118 = vadd.f32 %v3908, %v4048
        %v4119 = vadd.f32 %v3909, %v4053
        %v4120 = vadd.f32 %v3910, %v4056
        %v4121 = vadd.f32 %v3911, %v4061
        %v4122 = vadd.f32 %v3912, %v4064
        %v4123 = vadd.f32 %v3913, %v4069
        %v4124 = vadd.f32 %v3914, %v4072
        %v4125 = vadd.f32 %v3915, %v4077
        %v4126 = vadd.f32 %v3916, %v4080
        %v4127 = vadd.f32 %v3917, %v4085
        %v4128 = vadd.f32 %v3918, %v4088
        %v4129 = vadd.f32 %v3919, %v4093
        %v4130 = vadd.f32 %v3920, %v4096
        %s4131 = scalar_lea.vmem %s3, 128
        %v4132 = vld [vmem:[%s4131] sm:$0xf]
        %v4133 = vld [vmem:[%s4131 + $0x4] sm:$0xf]
        %v4134 = vld [vmem:[%s4131 + $0x8] sm:$0xf]
        %v4135 = vld [vmem:[%s4131 + $0xc] sm:$0xf]
        %v4140 = vunpack.c.l.b16 %v4132
        %v4141 = vunpack.c.l.b16 %v4133
        %v4142 = vunpack.c.l.b16 %v4134
        %v4143 = vunpack.c.l.b16 %v4135
        %v4144 = vpack.c.b16 %v4141, %v4140
        %v4145 = vpack.c.b16 %v4143, %v4142
        %4148 = vmatprep.subr.bf16.mxu0 0
        %4149 = vmatpush1.bf16.msra.mxu0 %v4144
        %4150 = vmatprep.subr.bf16.mxu0 0
        %4151 = vmatpush1.bf16.msra.mxu0 %v4145
        %4152 = vmatprep.subr.bf16.mxu0 0
        %4153 = vmatpush1.bf16.msra.mxu0 0
        %4154 = vmatprep.subr.bf16.mxu0 0
        %4155 = vmatpush1.bf16.msra.mxu0 0
        %4156 = vmatprep.subr.bf16.mxu0 0
        %4157 = vmatpush1.bf16.msra.mxu0 0
        %4158 = vmatprep.subr.bf16.mxu0 0
        %4159 = vmatpush1.bf16.msra.mxu0 0
        %4160 = vmatprep.subr.bf16.mxu0 0
        %4161 = vmatpush1.bf16.msra.mxu0 0
        %4162 = vmatprep.subr.bf16.mxu0 0
        %4163 = vmatpush1.bf16.msra.mxu0 0
        %4164 = vmatprep.subr.bf16.mxu0 0
        %4165 = vmatpush1.bf16.msra.mxu0 0
        %4166 = vmatprep.subr.bf16.mxu0 0
        %4167 = vmatpush1.bf16.msra.mxu0 0
        %4168 = vmatprep.subr.bf16.mxu0 0
        %4169 = vmatpush1.bf16.msra.mxu0 0
        %4170 = vmatprep.subr.bf16.mxu0 0
        %4171 = vmatpush1.bf16.msra.mxu0 0
        %4172 = vmatprep.subr.bf16.mxu0 0
        %4173 = vmatpush1.bf16.msra.mxu0 0
        %4174 = vmatprep.subr.bf16.mxu0 0
        %4175 = vmatpush1.bf16.msra.mxu0 0
        %4176 = vmatprep.subr.bf16.mxu0 0
        %4177 = vmatpush1.bf16.msra.mxu0 0
        %4178 = vmatprep.subr.bf16.mxu0 0
        %4179 = vmatpush1.bf16.msra.mxu0 0
        %4180 = vmatprep.mubr.bf16.mxu0 0
        %4181 = vmatmul.mubr.bf16.gmra.mrb[0].mxu0 %v2505
        %v4182 = vpop.f32.mrb[0].mxu0
        %v4183 = vadd.f32 0.0, %v4182
        %v4184 = vpop.f32.mrb[0].mxu0
        %v4185 = vpop.f32.mrb[0].mxu0
        %v4186 = vadd.f32 0.0, %v4185
        %v4187 = vpop.f32.mrb[0].mxu0
        %4188 = vmatprep.mubr.bf16.mxu0 0
        %4189 = vmatmul.mubr.bf16.gmra.mrb[0].mxu0 %v2508
        %v4190 = vpop.f32.mrb[0].mxu0
        %v4191 = vadd.f32 0.0, %v4190
        %v4192 = vpop.f32.mrb[0].mxu0
        %v4193 = vpop.f32.mrb[0].mxu0
        %v4194 = vadd.f32 0.0, %v4193
        %v4195 = vpop.f32.mrb[0].mxu0
        %4196 = vmatprep.mubr.bf16.mxu0 0
        %4197 = vmatmul.mubr.bf16.gmra.mrb[0].mxu0 %v2511
        %v4198 = vpop.f32.mrb[0].mxu0
        %v4199 = vadd.f32 0.0, %v4198
        %v4200 = vpop.f32.mrb[0].mxu0
        %v4201 = vpop.f32.mrb[0].mxu0
        %v4202 = vadd.f32 0.0, %v4201
        %v4203 = vpop.f32.mrb[0].mxu0
        %4204 = vmatprep.mubr.bf16.mxu0 0
        %4205 = vmatmul.mubr.bf16.gmra.mrb[0].mxu0 %v2487
        %v4206 = vpop.f32.mrb[0].mxu0
        %v4207 = vadd.f32 0.0, %v4206
        %v4208 = vpop.f32.mrb[0].mxu0
        %v4209 = vpop.f32.mrb[0].mxu0
        %v4210 = vadd.f32 0.0, %v4209
        %v4211 = vpop.f32.mrb[0].mxu0
        %4212 = vmatprep.mubr.bf16.mxu0 0
        %4213 = vmatmul.mubr.bf16.gmra.mrb[0].mxu0 %v2517
        %v4214 = vpop.f32.mrb[0].mxu0
        %v4215 = vadd.f32 0.0, %v4214
        %v4216 = vpop.f32.mrb[0].mxu0
        %v4217 = vpop.f32.mrb[0].mxu0
        %v4218 = vadd.f32 0.0, %v4217
        %v4219 = vpop.f32.mrb[0].mxu0
        %4220 = vmatprep.mubr.bf16.mxu0 0
        %4221 = vmatmul.mubr.bf16.gmra.mrb[0].mxu0 %v2520
        %v4222 = vpop.f32.mrb[0].mxu0
        %v4223 = vadd.f32 0.0, %v4222
        %v4224 = vpop.f32.mrb[0].mxu0
        %v4225 = vpop.f32.mrb[0].mxu0
        %v4226 = vadd.f32 0.0, %v4225
        %v4227 = vpop.f32.mrb[0].mxu0
        %4228 = vmatprep.mubr.bf16.mxu0 0
        %4229 = vmatmul.mubr.bf16.gmra.mrb[0].mxu0 %v2523
        %v4230 = vpop.f32.mrb[0].mxu0
        %v4231 = vadd.f32 0.0, %v4230
        %v4232 = vpop.f32.mrb[0].mxu0
        %v4233 = vpop.f32.mrb[0].mxu0
        %v4234 = vadd.f32 0.0, %v4233
        %v4235 = vpop.f32.mrb[0].mxu0
        %4236 = vmatprep.mubr.bf16.mxu0 0
        %4237 = vmatmul.mubr.bf16.gmra.mrb[0].mxu0 %v2487
        %v4238 = vpop.f32.mrb[0].mxu0
        %v4239 = vadd.f32 0.0, %v4238
        %v4240 = vpop.f32.mrb[0].mxu0
        %v4241 = vpop.f32.mrb[0].mxu0
        %v4242 = vadd.f32 0.0, %v4241
        %v4243 = vpop.f32.mrb[0].mxu0
        %4244 = vmatprep.mubr.bf16.mxu0 0
        %4245 = vmatmul.mubr.bf16.gmra.mrb[0].mxu0 %v3090
        %v4246 = vpop.f32.mrb[0].mxu0
        %v4247 = vadd.f32 0.0, %v4246
        %v4248 = vpop.f32.mrb[0].mxu0
        %v4249 = vpop.f32.mrb[0].mxu0
        %v4250 = vadd.f32 0.0, %v4249
        %v4251 = vpop.f32.mrb[0].mxu0
        %4252 = vmatprep.mubr.bf16.mxu0 0
        %4253 = vmatmul.mubr.bf16.gmra.mrb[0].mxu0 %v3093
        %v4254 = vpop.f32.mrb[0].mxu0
        %v4255 = vadd.f32 0.0, %v4254
        %v4256 = vpop.f32.mrb[0].mxu0
        %v4257 = vpop.f32.mrb[0].mxu0
        %v4258 = vadd.f32 0.0, %v4257
        %v4259 = vpop.f32.mrb[0].mxu0
        %4260 = vmatprep.mubr.bf16.mxu0 0
        %4261 = vmatmul.mubr.bf16.gmra.mrb[0].mxu0 %v3306
        %v4262 = vpop.f32.mrb[0].mxu0
        %v4263 = vadd.f32 0.0, %v4262
        %v4264 = vpop.f32.mrb[0].mxu0
        %v4265 = vpop.f32.mrb[0].mxu0
        %v4266 = vadd.f32 0.0, %v4265
        %v4267 = vpop.f32.mrb[0].mxu0
        %4268 = vmatprep.mubr.bf16.mxu0 0
        %4269 = vmatmul.mubr.bf16.gmra.mrb[0].mxu0 %v2487
        %v4270 = vpop.f32.mrb[0].mxu0
        %v4271 = vadd.f32 0.0, %v4270
        %v4272 = vpop.f32.mrb[0].mxu0
        %v4273 = vpop.f32.mrb[0].mxu0
        %v4274 = vadd.f32 0.0, %v4273
        %v4275 = vpop.f32.mrb[0].mxu0
        %4276 = vmatprep.mubr.bf16.mxu0 0
        %4277 = vmatmul.mubr.bf16.gmra.mrb[0].mxu0 %v2487
        %v4278 = vpop.f32.mrb[0].mxu0
        %v4279 = vadd.f32 0.0, %v4278
        %v4280 = vpop.f32.mrb[0].mxu0
        %v4281 = vpop.f32.mrb[0].mxu0
        %v4282 = vadd.f32 0.0, %v4281
        %v4283 = vpop.f32.mrb[0].mxu0
        %4284 = vmatprep.mubr.bf16.mxu0 0
        %4285 = vmatmul.mubr.bf16.gmra.mrb[0].mxu0 %v2487
        %v4286 = vpop.f32.mrb[0].mxu0
        %v4287 = vadd.f32 0.0, %v4286
        %v4288 = vpop.f32.mrb[0].mxu0
        %v4289 = vpop.f32.mrb[0].mxu0
        %v4290 = vadd.f32 0.0, %v4289
        %v4291 = vpop.f32.mrb[0].mxu0
        %4292 = vmatprep.mubr.bf16.mxu0 0
        %4293 = vmatmul.mubr.bf16.gmra.mrb[0].mxu0 %v2487
        %v4294 = vpop.f32.mrb[0].mxu0
        %v4295 = vadd.f32 0.0, %v4294
        %v4296 = vpop.f32.mrb[0].mxu0
        %v4297 = vpop.f32.mrb[0].mxu0
        %v4298 = vadd.f32 0.0, %v4297
        %v4299 = vpop.f32.mrb[0].mxu0
        %4300 = vmatprep.mubr.bf16.mxu0 0
        %4301 = vmatmul.mubr.bf16.gmra.mrb[0].mxu0 %v2487
        %v4302 = vpop.f32.mrb[0].mxu0
        %v4303 = vadd.f32 0.0, %v4302
        %v4304 = vpop.f32.mrb[0].mxu0
        %v4305 = vpop.f32.mrb[0].mxu0
        %v4306 = vadd.f32 0.0, %v4305
        %v4307 = vpop.f32.mrb[0].mxu0
        %4308 = vdwg.mxu0
        %v4309 = vadd.f32 %v4099, %v4183
        %v4310 = vadd.f32 %v4100, %v4186
        %v4311 = vadd.f32 %v4101, %v4191
        %v4312 = vadd.f32 %v4102, %v4194
        %v4313 = vadd.f32 %v4103, %v4199
        %v4314 = vadd.f32 %v4104, %v4202
        %v4315 = vadd.f32 %v4105, %v4207
        %v4316 = vadd.f32 %v4106, %v4210
        %v4317 = vadd.f32 %v4107, %v4215
        %v4318 = vadd.f32 %v4108, %v4218
        %v4319 = vadd.f32 %v4109, %v4223
        %v4320 = vadd.f32 %v4110, %v4226
        %v4321 = vadd.f32 %v4111, %v4231
        %v4322 = vadd.f32 %v4112, %v4234
        %v4323 = vadd.f32 %v4113, %v4239
        %v4324 = vadd.f32 %v4114, %v4242
        %v4325 = vadd.f32 %v4115, %v4247
        %v4326 = vadd.f32 %v4116, %v4250
        %v4327 = vadd.f32 %v4117, %v4255
        %v4328 = vadd.f32 %v4118, %v4258
        %v4329 = vadd.f32 %v4119, %v4263
        %v4330 = vadd.f32 %v4120, %v4266
        %v4331 = vadd.f32 %v4121, %v4271
        %v4332 = vadd.f32 %v4122, %v4274
        %v4333 = vadd.f32 %v4123, %v4279
        %v4334 = vadd.f32 %v4124, %v4282
        %v4335 = vadd.f32 %v4125, %v4287
        %v4336 = vadd.f32 %v4126, %v4290
        %v4337 = vadd.f32 %v4127, %v4295
        %v4338 = vadd.f32 %v4128, %v4298
        %v4339 = vadd.f32 %v4129, %v4303
        %v4340 = vadd.f32 %v4130, %v4306
        %v4341 = vld [vmem:[%s4] sm:$0x1]
        %v4343 = vlaneseq
        %v4344 = vshrl.u32 %v4343, 7
        %v4345 = vsub.s32 0, %v4344
        %v4346 = vrot.slane %v4341, %v4345
        %v4348 = vadd.f32 %v4309, %v4346
        %v4349 = vadd.f32 %v4310, %v4346
        %v4350 = vadd.f32 %v4311, %v4346
        %v4351 = vadd.f32 %v4312, %v4346
        %v4352 = vadd.f32 %v4313, %v4346
        %v4353 = vadd.f32 %v4314, %v4346
        %v4354 = vadd.f32 %v4315, %v4346
        %v4355 = vadd.f32 %v4316, %v4346
        %v4356 = vadd.f32 %v4317, %v4346
        %v4357 = vadd.f32 %v4318, %v4346
        %v4358 = vadd.f32 %v4319, %v4346
        %v4359 = vadd.f32 %v4320, %v4346
        %v4360 = vadd.f32 %v4321, %v4346
        %v4361 = vadd.f32 %v4322, %v4346
        %v4362 = vadd.f32 %v4323, %v4346
        %v4363 = vadd.f32 %v4324, %v4346
        %v4364 = vadd.f32 %v4325, %v4346
        %v4365 = vadd.f32 %v4326, %v4346
        %v4366 = vadd.f32 %v4327, %v4346
        %v4367 = vadd.f32 %v4328, %v4346
        %v4368 = vadd.f32 %v4329, %v4346
        %v4369 = vadd.f32 %v4330, %v4346
        %v4370 = vadd.f32 %v4331, %v4346
        %v4371 = vadd.f32 %v4332, %v4346
        %v4372 = vadd.f32 %v4333, %v4346
        %v4373 = vadd.f32 %v4334, %v4346
        %v4374 = vadd.f32 %v4335, %v4346
        %v4375 = vadd.f32 %v4336, %v4346
        %v4376 = vadd.f32 %v4337, %v4346
        %v4377 = vadd.f32 %v4338, %v4346
        %v4378 = vadd.f32 %v4339, %v4346
        %v4379 = vadd.f32 %v4340, %v4346
        %v4380 = vmax.f32 %v4348, 0.0
        %v4381 = vmax.f32 %v4349, 0.0
        %v4382 = vmax.f32 %v4350, 0.0
        %v4383 = vmax.f32 %v4351, 0.0
        %v4384 = vmax.f32 %v4352, 0.0
        %v4385 = vmax.f32 %v4353, 0.0
        %v4386 = vmax.f32 %v4354, 0.0
        %v4387 = vmax.f32 %v4355, 0.0
        %v4388 = vmax.f32 %v4356, 0.0
        %v4389 = vmax.f32 %v4357, 0.0
        %v4390 = vmax.f32 %v4358, 0.0
        %v4391 = vmax.f32 %v4359, 0.0
        %v4392 = vmax.f32 %v4360, 0.0
        %v4393 = vmax.f32 %v4361, 0.0
        %v4394 = vmax.f32 %v4362, 0.0
        %v4395 = vmax.f32 %v4363, 0.0
        %v4396 = vmax.f32 %v4364, 0.0
        %v4397 = vmax.f32 %v4365, 0.0
        %v4398 = vmax.f32 %v4366, 0.0
        %v4399 = vmax.f32 %v4367, 0.0
        %v4400 = vmax.f32 %v4368, 0.0
        %v4401 = vmax.f32 %v4369, 0.0
        %v4402 = vmax.f32 %v4370, 0.0
        %v4403 = vmax.f32 %v4371, 0.0
        %v4404 = vmax.f32 %v4372, 0.0
        %v4405 = vmax.f32 %v4373, 0.0
        %v4406 = vmax.f32 %v4374, 0.0
        %v4407 = vmax.f32 %v4375, 0.0
        %v4408 = vmax.f32 %v4376, 0.0
        %v4409 = vmax.f32 %v4377, 0.0
        %v4410 = vmax.f32 %v4378, 0.0
        %v4411 = vmax.f32 %v4379, 0.0
        %v4412 = vpack.c.bf16 %v4381, %v4380
        %v4413 = vpack.c.bf16 %v4383, %v4382
        %v4414 = vpack.c.bf16 %v4385, %v4384
        %v4415 = vpack.c.bf16 %v4387, %v4386
        %v4416 = vpack.c.bf16 %v4389, %v4388
        %v4417 = vpack.c.bf16 %v4391, %v4390
        %v4418 = vpack.c.bf16 %v4393, %v4392
        %v4419 = vpack.c.bf16 %v4395, %v4394
        %v4420 = vpack.c.bf16 %v4397, %v4396
        %v4421 = vpack.c.bf16 %v4399, %v4398
        %v4422 = vpack.c.bf16 %v4401, %v4400
        %v4423 = vpack.c.bf16 %v4403, %v4402
        %v4424 = vpack.c.bf16 %v4405, %v4404
        %v4425 = vpack.c.bf16 %v4407, %v4406
        %v4426 = vpack.c.bf16 %v4409, %v4408
        %v4427 = vpack.c.bf16 %v4411, %v4410
        %v4428 = vld [vmem:[%s5] sm:$0xf]
        %v4429 = vld [vmem:[%s5 + $0x4] sm:$0xf]
        %v4430 = vld [vmem:[%s5 + $0x8] sm:$0xf]
        %v4431 = vld [vmem:[%s5 + $0xc] sm:$0xf]
        %s4432 = scalar_lea.vmem %s5, 16
        %v4433 = vld [vmem:[%s4432] sm:$0xf]
        %v4434 = vld [vmem:[%s4432 + $0x4] sm:$0xf]
        %v4435 = vld [vmem:[%s4432 + $0x8] sm:$0xf]
        %v4436 = vld [vmem:[%s4432 + $0xc] sm:$0xf]
        %v4441 = vunpack.c.l.b16 %v4433
        %v4442 = vunpack.c.l.b16 %v4434
        %v4443 = vunpack.c.l.b16 %v4435
        %v4444 = vunpack.c.l.b16 %v4436
        %v4445 = vpack.c.b16 %v4442, %v4441
        %v4446 = vpack.c.b16 %v4444, %v4443
        %v4450 = vsel %vm2486, %v4413, 0
        %4452 = vmatprep.subr.bf16.mxu0 0
        %4453 = vmatpush1.bf16.msra.mxu0 %v4445
        %4454 = vmatprep.subr.bf16.mxu0 0
        %4455 = vmatpush1.bf16.msra.mxu0 %v4446
        %4456 = vmatprep.subr.bf16.mxu0 0
        %4457 = vmatpush1.bf16.msra.mxu0 0
        %4458 = vmatprep.subr.bf16.mxu0 0
        %4459 = vmatpush1.bf16.msra.mxu0 0
        %4460 = vmatprep.subr.bf16.mxu0 0
        %4461 = vmatpush1.bf16.msra.mxu0 0
        %4462 = vmatprep.subr.bf16.mxu0 0
        %4463 = vmatpush1.bf16.msra.mxu0 0
        %4464 = vmatprep.subr.bf16.mxu0 0
        %4465 = vmatpush1.bf16.msra.mxu0 0
        %4466 = vmatprep.subr.bf16.mxu0 0
        %4467 = vmatpush1.bf16.msra.mxu0 0
        %4468 = vmatprep.subr.bf16.mxu0 0
        %4469 = vmatpush1.bf16.msra.mxu0 0
        %4470 = vmatprep.subr.bf16.mxu0 0
        %4471 = vmatpush1.bf16.msra.mxu0 0
        %4472 = vmatprep.subr.bf16.mxu0 0
        %4473 = vmatpush1.bf16.msra.mxu0 0
        %4474 = vmatprep.subr.bf16.mxu0 0
        %4475 = vmatpush1.bf16.msra.mxu0 0
        %4476 = vmatprep.subr.bf16.mxu0 0
        %4477 = vmatpush1.bf16.msra.mxu0 0
        %4478 = vmatprep.subr.bf16.mxu0 0
        %4479 = vmatpush1.bf16.msra.mxu0 0
        %4480 = vmatprep.subr.bf16.mxu0 0
        %4481 = vmatpush1.bf16.msra.mxu0 0
        %4482 = vmatprep.subr.bf16.mxu0 0
        %4483 = vmatpush1.bf16.msra.mxu0 0
        %4484 = vmatprep.mubr.bf16.mxu0 0
        %4485 = vmatmul.mubr.bf16.gmra.mrb[0].mxu0 %v4450
        %v4486 = vpop.f32.mrb[0].mxu0
        %v4487 = vadd.f32 0.0, %v4486
        %v4488 = vpop.f32.mrb[0].mxu0
        %v4489 = vpop.f32.mrb[0].mxu0
        %v4490 = vadd.f32 0.0, %v4489
        %v4491 = vpop.f32.mrb[0].mxu0
        %4492 = vdwg.mxu0
        %v4497 = vunpack.c.l.b16 %v4428
        %v4498 = vunpack.c.l.b16 %v4429
        %v4499 = vunpack.c.l.b16 %v4430
        %v4500 = vunpack.c.l.b16 %v4431
        %v4501 = vpack.c.b16 %v4498, %v4497
        %v4502 = vpack.c.b16 %v4500, %v4499
        %v4506 = vsel %vm2486, %v4412, 0
        %4508 = vmatprep.subr.bf16.mxu0 0
        %4509 = vmatpush1.bf16.msra.mxu0 %v4501
        %4510 = vmatprep.subr.bf16.mxu0 0
        %4511 = vmatpush1.bf16.msra.mxu0 %v4502
        %4512 = vmatprep.subr.bf16.mxu0 0
        %4513 = vmatpush1.bf16.msra.mxu0 0
        %4514 = vmatprep.subr.bf16.mxu0 0
        %4515 = vmatpush1.bf16.msra.mxu0 0
        %4516 = vmatprep.subr.bf16.mxu0 0
        %4517 = vmatpush1.bf16.msra.mxu0 0
        %4518 = vmatprep.subr.bf16.mxu0 0
        %4519 = vmatpush1.bf16.msra.mxu0 0
        %4520 = vmatprep.subr.bf16.mxu0 0
        %4521 = vmatpush1.bf16.msra.mxu0 0
        %4522 = vmatprep.subr.bf16.mxu0 0
        %4523 = vmatpush1.bf16.msra.mxu0 0
        %4524 = vmatprep.subr.bf16.mxu0 0
        %4525 = vmatpush1.bf16.msra.mxu0 0
        %4526 = vmatprep.subr.bf16.mxu0 0
        %4527 = vmatpush1.bf16.msra.mxu0 0
        %4528 = vmatprep.subr.bf16.mxu0 0
        %4529 = vmatpush1.bf16.msra.mxu0 0
        %4530 = vmatprep.subr.bf16.mxu0 0
        %4531 = vmatpush1.bf16.msra.mxu0 0
        %4532 = vmatprep.subr.bf16.mxu0 0
        %4533 = vmatpush1.bf16.msra.mxu0 0
        %4534 = vmatprep.subr.bf16.mxu0 0
        %4535 = vmatpush1.bf16.msra.mxu0 0
        %4536 = vmatprep.subr.bf16.mxu0 0
        %4537 = vmatpush1.bf16.msra.mxu0 0
        %4538 = vmatprep.subr.bf16.mxu0 0
        %4539 = vmatpush1.bf16.msra.mxu0 0
        %4540 = vmatprep.mubr.bf16.mxu0 0
        %4541 = vmatmul.mubr.bf16.gmra.mrb[0].mxu0 %v4506
        %v4542 = vpop.f32.mrb[0].mxu0
        %v4543 = vadd.f32 %v4487, %v4542
        %v4544 = vpop.f32.mrb[0].mxu0
        %v4545 = vpop.f32.mrb[0].mxu0
        %v4546 = vadd.f32 %v4490, %v4545
        %v4547 = vpop.f32.mrb[0].mxu0
        %4548 = vdwg.mxu0
        %s4549 = scalar_lea.vmem %s5, 32
        %v4550 = vld [vmem:[%s4549] sm:$0xf]
        %v4551 = vld [vmem:[%s4549 + $0x4] sm:$0xf]
        %v4552 = vld [vmem:[%s4549 + $0x8] sm:$0xf]
        %v4553 = vld [vmem:[%s4549 + $0xc] sm:$0xf]
        %v4558 = vunpack.c.l.b16 %v4550
        %v4559 = vunpack.c.l.b16 %v4551
        %v4560 = vunpack.c.l.b16 %v4552
        %v4561 = vunpack.c.l.b16 %v4553
        %v4562 = vpack.c.b16 %v4559, %v4558
        %v4563 = vpack.c.b16 %v4561, %v4560
        %v4567 = vsel %vm2486, %v4414, 0
        %4569 = vmatprep.subr.bf16.mxu0 0
        %4570 = vmatpush1.bf16.msra.mxu0 %v4562
        %4571 = vmatprep.subr.bf16.mxu0 0
        %4572 = vmatpush1.bf16.msra.mxu0 %v4563
        %4573 = vmatprep.subr.bf16.mxu0 0
        %4574 = vmatpush1.bf16.msra.mxu0 0
        %4575 = vmatprep.subr.bf16.mxu0 0
        %4576 = vmatpush1.bf16.msra.mxu0 0
        %4577 = vmatprep.subr.bf16.mxu0 0
        %4578 = vmatpush1.bf16.msra.mxu0 0
        %4579 = vmatprep.subr.bf16.mxu0 0
        %4580 = vmatpush1.bf16.msra.mxu0 0
        %4581 = vmatprep.subr.bf16.mxu0 0
        %4582 = vmatpush1.bf16.msra.mxu0 0
        %4583 = vmatprep.subr.bf16.mxu0 0
        %4584 = vmatpush1.bf16.msra.mxu0 0
        %4585 = vmatprep.subr.bf16.mxu0 0
        %4586 = vmatpush1.bf16.msra.mxu0 0
        %4587 = vmatprep.subr.bf16.mxu0 0
        %4588 = vmatpush1.bf16.msra.mxu0 0
        %4589 = vmatprep.subr.bf16.mxu0 0
        %4590 = vmatpush1.bf16.msra.mxu0 0
        %4591 = vmatprep.subr.bf16.mxu0 0
        %4592 = vmatpush1.bf16.msra.mxu0 0
        %4593 = vmatprep.subr.bf16.mxu0 0
        %4594 = vmatpush1.bf16.msra.mxu0 0
        %4595 = vmatprep.subr.bf16.mxu0 0
        %4596 = vmatpush1.bf16.msra.mxu0 0
        %4597 = vmatprep.subr.bf16.mxu0 0
        %4598 = vmatpush1.bf16.msra.mxu0 0
        %4599 = vmatprep.subr.bf16.mxu0 0
        %4600 = vmatpush1.bf16.msra.mxu0 0
        %4601 = vmatprep.mubr.bf16.mxu0 0
        %4602 = vmatmul.mubr.bf16.gmra.mrb[0].mxu0 %v4567
        %v4603 = vpop.f32.mrb[0].mxu0
        %v4604 = vadd.f32 0.0, %v4603
        %v4605 = vpop.f32.mrb[0].mxu0
        %v4606 = vpop.f32.mrb[0].mxu0
        %v4607 = vadd.f32 0.0, %v4606
        %v4608 = vpop.f32.mrb[0].mxu0
        %4609 = vdwg.mxu0
        %v4610 = vadd.f32 %v4543, %v4604
        %v4611 = vadd.f32 %v4546, %v4607
        %s4612 = scalar_lea.vmem %s5, 48
        %v4613 = vld [vmem:[%s4612] sm:$0xf]
        %v4614 = vld [vmem:[%s4612 + $0x4] sm:$0xf]
        %v4615 = vld [vmem:[%s4612 + $0x8] sm:$0xf]
        %v4616 = vld [vmem:[%s4612 + $0xc] sm:$0xf]
        %v4621 = vunpack.c.l.b16 %v4613
        %v4622 = vunpack.c.l.b16 %v4614
        %v4623 = vunpack.c.l.b16 %v4615
        %v4624 = vunpack.c.l.b16 %v4616
        %v4625 = vpack.c.b16 %v4622, %v4621
        %v4626 = vpack.c.b16 %v4624, %v4623
        %v4630 = vsel %vm2486, %v4415, 0
        %4632 = vmatprep.subr.bf16.mxu0 0
        %4633 = vmatpush1.bf16.msra.mxu0 %v4625
        %4634 = vmatprep.subr.bf16.mxu0 0
        %4635 = vmatpush1.bf16.msra.mxu0 %v4626
        %4636 = vmatprep.subr.bf16.mxu0 0
        %4637 = vmatpush1.bf16.msra.mxu0 0
        %4638 = vmatprep.subr.bf16.mxu0 0
        %4639 = vmatpush1.bf16.msra.mxu0 0
        %4640 = vmatprep.subr.bf16.mxu0 0
        %4641 = vmatpush1.bf16.msra.mxu0 0
        %4642 = vmatprep.subr.bf16.mxu0 0
        %4643 = vmatpush1.bf16.msra.mxu0 0
        %4644 = vmatprep.subr.bf16.mxu0 0
        %4645 = vmatpush1.bf16.msra.mxu0 0
        %4646 = vmatprep.subr.bf16.mxu0 0
        %4647 = vmatpush1.bf16.msra.mxu0 0
        %4648 = vmatprep.subr.bf16.mxu0 0
        %4649 = vmatpush1.bf16.msra.mxu0 0
        %4650 = vmatprep.subr.bf16.mxu0 0
        %4651 = vmatpush1.bf16.msra.mxu0 0
        %4652 = vmatprep.subr.bf16.mxu0 0
        %4653 = vmatpush1.bf16.msra.mxu0 0
        %4654 = vmatprep.subr.bf16.mxu0 0
        %4655 = vmatpush1.bf16.msra.mxu0 0
        %4656 = vmatprep.subr.bf16.mxu0 0
        %4657 = vmatpush1.bf16.msra.mxu0 0
        %4658 = vmatprep.subr.bf16.mxu0 0
        %4659 = vmatpush1.bf16.msra.mxu0 0
        %4660 = vmatprep.subr.bf16.mxu0 0
        %4661 = vmatpush1.bf16.msra.mxu0 0
        %4662 = vmatprep.subr.bf16.mxu0 0
        %4663 = vmatpush1.bf16.msra.mxu0 0
        %4664 = vmatprep.mubr.bf16.mxu0 0
        %4665 = vmatmul.mubr.bf16.gmra.mrb[0].mxu0 %v4630
        %v4666 = vpop.f32.mrb[0].mxu0
        %v4667 = vadd.f32 0.0, %v4666
        %v4668 = vpop.f32.mrb[0].mxu0
        %v4669 = vpop.f32.mrb[0].mxu0
        %v4670 = vadd.f32 0.0, %v4669
        %v4671 = vpop.f32.mrb[0].mxu0
        %4672 = vdwg.mxu0
        %v4673 = vadd.f32 %v4610, %v4667
        %v4674 = vadd.f32 %v4611, %v4670
        %s4675 = scalar_lea.vmem %s5, 64
        %v4676 = vld [vmem:[%s4675] sm:$0xf]
        %v4677 = vld [vmem:[%s4675 + $0x4] sm:$0xf]
        %v4678 = vld [vmem:[%s4675 + $0x8] sm:$0xf]
        %v4679 = vld [vmem:[%s4675 + $0xc] sm:$0xf]
        %v4684 = vunpack.c.l.b16 %v4676
        %v4685 = vunpack.c.l.b16 %v4677
        %v4686 = vunpack.c.l.b16 %v4678
        %v4687 = vunpack.c.l.b16 %v4679
        %v4688 = vpack.c.b16 %v4685, %v4684
        %v4689 = vpack.c.b16 %v4687, %v4686
        %v4693 = vsel %vm2486, %v4416, 0
        %4695 = vmatprep.subr.bf16.mxu0 0
        %4696 = vmatpush1.bf16.msra.mxu0 %v4688
        %4697 = vmatprep.subr.bf16.mxu0 0
        %4698 = vmatpush1.bf16.msra.mxu0 %v4689
        %4699 = vmatprep.subr.bf16.mxu0 0
        %4700 = vmatpush1.bf16.msra.mxu0 0
        %4701 = vmatprep.subr.bf16.mxu0 0
        %4702 = vmatpush1.bf16.msra.mxu0 0
        %4703 = vmatprep.subr.bf16.mxu0 0
        %4704 = vmatpush1.bf16.msra.mxu0 0
        %4705 = vmatprep.subr.bf16.mxu0 0
        %4706 = vmatpush1.bf16.msra.mxu0 0
        %4707 = vmatprep.subr.bf16.mxu0 0
        %4708 = vmatpush1.bf16.msra.mxu0 0
        %4709 = vmatprep.subr.bf16.mxu0 0
        %4710 = vmatpush1.bf16.msra.mxu0 0
        %4711 = vmatprep.subr.bf16.mxu0 0
        %4712 = vmatpush1.bf16.msra.mxu0 0
        %4713 = vmatprep.subr.bf16.mxu0 0
        %4714 = vmatpush1.bf16.msra.mxu0 0
        %4715 = vmatprep.subr.bf16.mxu0 0
        %4716 = vmatpush1.bf16.msra.mxu0 0
        %4717 = vmatprep.subr.bf16.mxu0 0
        %4718 = vmatpush1.bf16.msra.mxu0 0
        %4719 = vmatprep.subr.bf16.mxu0 0
        %4720 = vmatpush1.bf16.msra.mxu0 0
        %4721 = vmatprep.subr.bf16.mxu0 0
        %4722 = vmatpush1.bf16.msra.mxu0 0
        %4723 = vmatprep.subr.bf16.mxu0 0
        %4724 = vmatpush1.bf16.msra.mxu0 0
        %4725 = vmatprep.subr.bf16.mxu0 0
        %4726 = vmatpush1.bf16.msra.mxu0 0
        %4727 = vmatprep.mubr.bf16.mxu0 0
        %4728 = vmatmul.mubr.bf16.gmra.mrb[0].mxu0 %v4693
        %v4729 = vpop.f32.mrb[0].mxu0
        %v4730 = vadd.f32 0.0, %v4729
        %v4731 = vpop.f32.mrb[0].mxu0
        %v4732 = vpop.f32.mrb[0].mxu0
        %v4733 = vadd.f32 0.0, %v4732
        %v4734 = vpop.f32.mrb[0].mxu0
        %4735 = vdwg.mxu0
        %v4736 = vadd.f32 %v4673, %v4730
        %v4737 = vadd.f32 %v4674, %v4733
        %s4738 = scalar_lea.vmem %s5, 80
        %v4739 = vld [vmem:[%s4738] sm:$0xf]
        %v4740 = vld [vmem:[%s4738 + $0x4] sm:$0xf]
        %v4741 = vld [vmem:[%s4738 + $0x8] sm:$0xf]
        %v4742 = vld [vmem:[%s4738 + $0xc] sm:$0xf]
        %v4747 = vunpack.c.l.b16 %v4739
        %v4748 = vunpack.c.l.b16 %v4740
        %v4749 = vunpack.c.l.b16 %v4741
        %v4750 = vunpack.c.l.b16 %v4742
        %v4751 = vpack.c.b16 %v4748, %v4747
        %v4752 = vpack.c.b16 %v4750, %v4749
        %v4756 = vsel %vm2486, %v4417, 0
        %4758 = vmatprep.subr.bf16.mxu0 0
        %4759 = vmatpush1.bf16.msra.mxu0 %v4751
        %4760 = vmatprep.subr.bf16.mxu0 0
        %4761 = vmatpush1.bf16.msra.mxu0 %v4752
        %4762 = vmatprep.subr.bf16.mxu0 0
        %4763 = vmatpush1.bf16.msra.mxu0 0
        %4764 = vmatprep.subr.bf16.mxu0 0
        %4765 = vmatpush1.bf16.msra.mxu0 0
        %4766 = vmatprep.subr.bf16.mxu0 0
        %4767 = vmatpush1.bf16.msra.mxu0 0
        %4768 = vmatprep.subr.bf16.mxu0 0
        %4769 = vmatpush1.bf16.msra.mxu0 0
        %4770 = vmatprep.subr.bf16.mxu0 0
        %4771 = vmatpush1.bf16.msra.mxu0 0
        %4772 = vmatprep.subr.bf16.mxu0 0
        %4773 = vmatpush1.bf16.msra.mxu0 0
        %4774 = vmatprep.subr.bf16.mxu0 0
        %4775 = vmatpush1.bf16.msra.mxu0 0
        %4776 = vmatprep.subr.bf16.mxu0 0
        %4777 = vmatpush1.bf16.msra.mxu0 0
        %4778 = vmatprep.subr.bf16.mxu0 0
        %4779 = vmatpush1.bf16.msra.mxu0 0
        %4780 = vmatprep.subr.bf16.mxu0 0
        %4781 = vmatpush1.bf16.msra.mxu0 0
        %4782 = vmatprep.subr.bf16.mxu0 0
        %4783 = vmatpush1.bf16.msra.mxu0 0
        %4784 = vmatprep.subr.bf16.mxu0 0
        %4785 = vmatpush1.bf16.msra.mxu0 0
        %4786 = vmatprep.subr.bf16.mxu0 0
        %4787 = vmatpush1.bf16.msra.mxu0 0
        %4788 = vmatprep.subr.bf16.mxu0 0
        %4789 = vmatpush1.bf16.msra.mxu0 0
        %4790 = vmatprep.mubr.bf16.mxu0 0
        %4791 = vmatmul.mubr.bf16.gmra.mrb[0].mxu0 %v4756
        %v4792 = vpop.f32.mrb[0].mxu0
        %v4793 = vadd.f32 0.0, %v4792
        %v4794 = vpop.f32.mrb[0].mxu0
        %v4795 = vpop.f32.mrb[0].mxu0
        %v4796 = vadd.f32 0.0, %v4795
        %v4797 = vpop.f32.mrb[0].mxu0
        %4798 = vdwg.mxu0
        %v4799 = vadd.f32 %v4736, %v4793
        %v4800 = vadd.f32 %v4737, %v4796
        %s4801 = scalar_lea.vmem %s5, 96
        %v4802 = vld [vmem:[%s4801] sm:$0xf]
        %v4803 = vld [vmem:[%s4801 + $0x4] sm:$0xf]
        %v4804 = vld [vmem:[%s4801 + $0x8] sm:$0xf]
        %v4805 = vld [vmem:[%s4801 + $0xc] sm:$0xf]
        %v4810 = vunpack.c.l.b16 %v4802
        %v4811 = vunpack.c.l.b16 %v4803
        %v4812 = vunpack.c.l.b16 %v4804
        %v4813 = vunpack.c.l.b16 %v4805
        %v4814 = vpack.c.b16 %v4811, %v4810
        %v4815 = vpack.c.b16 %v4813, %v4812
        %v4819 = vsel %vm2486, %v4418, 0
        %4821 = vmatprep.subr.bf16.mxu0 0
        %4822 = vmatpush1.bf16.msra.mxu0 %v4814
        %4823 = vmatprep.subr.bf16.mxu0 0
        %4824 = vmatpush1.bf16.msra.mxu0 %v4815
        %4825 = vmatprep.subr.bf16.mxu0 0
        %4826 = vmatpush1.bf16.msra.mxu0 0
        %4827 = vmatprep.subr.bf16.mxu0 0
        %4828 = vmatpush1.bf16.msra.mxu0 0
        %4829 = vmatprep.subr.bf16.mxu0 0
        %4830 = vmatpush1.bf16.msra.mxu0 0
        %4831 = vmatprep.subr.bf16.mxu0 0
        %4832 = vmatpush1.bf16.msra.mxu0 0
        %4833 = vmatprep.subr.bf16.mxu0 0
        %4834 = vmatpush1.bf16.msra.mxu0 0
        %4835 = vmatprep.subr.bf16.mxu0 0
        %4836 = vmatpush1.bf16.msra.mxu0 0
        %4837 = vmatprep.subr.bf16.mxu0 0
        %4838 = vmatpush1.bf16.msra.mxu0 0
        %4839 = vmatprep.subr.bf16.mxu0 0
        %4840 = vmatpush1.bf16.msra.mxu0 0
        %4841 = vmatprep.subr.bf16.mxu0 0
        %4842 = vmatpush1.bf16.msra.mxu0 0
        %4843 = vmatprep.subr.bf16.mxu0 0
        %4844 = vmatpush1.bf16.msra.mxu0 0
        %4845 = vmatprep.subr.bf16.mxu0 0
        %4846 = vmatpush1.bf16.msra.mxu0 0
        %4847 = vmatprep.subr.bf16.mxu0 0
        %4848 = vmatpush1.bf16.msra.mxu0 0
        %4849 = vmatprep.subr.bf16.mxu0 0
        %4850 = vmatpush1.bf16.msra.mxu0 0
        %4851 = vmatprep.subr.bf16.mxu0 0
        %4852 = vmatpush1.bf16.msra.mxu0 0
        %4853 = vmatprep.mubr.bf16.mxu0 0
        %4854 = vmatmul.mubr.bf16.gmra.mrb[0].mxu0 %v4819
        %v4855 = vpop.f32.mrb[0].mxu0
        %v4856 = vadd.f32 0.0, %v4855
        %v4857 = vpop.f32.mrb[0].mxu0
        %v4858 = vpop.f32.mrb[0].mxu0
        %v4859 = vadd.f32 0.0, %v4858
        %v4860 = vpop.f32.mrb[0].mxu0
        %4861 = vdwg.mxu0
        %v4862 = vadd.f32 %v4799, %v4856
        %v4863 = vadd.f32 %v4800, %v4859
        %s4864 = scalar_lea.vmem %s5, 112
        %v4865 = vld [vmem:[%s4864] sm:$0xf]
        %v4866 = vld [vmem:[%s4864 + $0x4] sm:$0xf]
        %v4867 = vld [vmem:[%s4864 + $0x8] sm:$0xf]
        %v4868 = vld [vmem:[%s4864 + $0xc] sm:$0xf]
        %v4873 = vunpack.c.l.b16 %v4865
        %v4874 = vunpack.c.l.b16 %v4866
        %v4875 = vunpack.c.l.b16 %v4867
        %v4876 = vunpack.c.l.b16 %v4868
        %v4877 = vpack.c.b16 %v4874, %v4873
        %v4878 = vpack.c.b16 %v4876, %v4875
        %v4882 = vsel %vm2486, %v4419, 0
        %4884 = vmatprep.subr.bf16.mxu0 0
        %4885 = vmatpush1.bf16.msra.mxu0 %v4877
        %4886 = vmatprep.subr.bf16.mxu0 0
        %4887 = vmatpush1.bf16.msra.mxu0 %v4878
        %4888 = vmatprep.subr.bf16.mxu0 0
        %4889 = vmatpush1.bf16.msra.mxu0 0
        %4890 = vmatprep.subr.bf16.mxu0 0
        %4891 = vmatpush1.bf16.msra.mxu0 0
        %4892 = vmatprep.subr.bf16.mxu0 0
        %4893 = vmatpush1.bf16.msra.mxu0 0
        %4894 = vmatprep.subr.bf16.mxu0 0
        %4895 = vmatpush1.bf16.msra.mxu0 0
        %4896 = vmatprep.subr.bf16.mxu0 0
        %4897 = vmatpush1.bf16.msra.mxu0 0
        %4898 = vmatprep.subr.bf16.mxu0 0
        %4899 = vmatpush1.bf16.msra.mxu0 0
        %4900 = vmatprep.subr.bf16.mxu0 0
        %4901 = vmatpush1.bf16.msra.mxu0 0
        %4902 = vmatprep.subr.bf16.mxu0 0
        %4903 = vmatpush1.bf16.msra.mxu0 0
        %4904 = vmatprep.subr.bf16.mxu0 0
        %4905 = vmatpush1.bf16.msra.mxu0 0
        %4906 = vmatprep.subr.bf16.mxu0 0
        %4907 = vmatpush1.bf16.msra.mxu0 0
        %4908 = vmatprep.subr.bf16.mxu0 0
        %4909 = vmatpush1.bf16.msra.mxu0 0
        %4910 = vmatprep.subr.bf16.mxu0 0
        %4911 = vmatpush1.bf16.msra.mxu0 0
        %4912 = vmatprep.subr.bf16.mxu0 0
        %4913 = vmatpush1.bf16.msra.mxu0 0
        %4914 = vmatprep.subr.bf16.mxu0 0
        %4915 = vmatpush1.bf16.msra.mxu0 0
        %4916 = vmatprep.mubr.bf16.mxu0 0
        %4917 = vmatmul.mubr.bf16.gmra.mrb[0].mxu0 %v4882
        %v4918 = vpop.f32.mrb[0].mxu0
        %v4919 = vadd.f32 0.0, %v4918
        %v4920 = vpop.f32.mrb[0].mxu0
        %v4921 = vpop.f32.mrb[0].mxu0
        %v4922 = vadd.f32 0.0, %v4921
        %v4923 = vpop.f32.mrb[0].mxu0
        %4924 = vdwg.mxu0
        %v4925 = vadd.f32 %v4862, %v4919
        %v4926 = vadd.f32 %v4863, %v4922
        %s4927 = scalar_lea.vmem %s5, 128
        %v4928 = vld [vmem:[%s4927] sm:$0xf]
        %v4929 = vld [vmem:[%s4927 + $0x4] sm:$0xf]
        %v4930 = vld [vmem:[%s4927 + $0x8] sm:$0xf]
        %v4931 = vld [vmem:[%s4927 + $0xc] sm:$0xf]
        %v4936 = vunpack.c.l.b16 %v4928
        %v4937 = vunpack.c.l.b16 %v4929
        %v4938 = vunpack.c.l.b16 %v4930
        %v4939 = vunpack.c.l.b16 %v4931
        %v4940 = vpack.c.b16 %v4937, %v4936
        %v4941 = vpack.c.b16 %v4939, %v4938
        %v4945 = vsel %vm2486, %v4420, 0
        %4947 = vmatprep.subr.bf16.mxu0 0
        %4948 = vmatpush1.bf16.msra.mxu0 %v4940
        %4949 = vmatprep.subr.bf16.mxu0 0
        %4950 = vmatpush1.bf16.msra.mxu0 %v4941
        %4951 = vmatprep.subr.bf16.mxu0 0
        %4952 = vmatpush1.bf16.msra.mxu0 0
        %4953 = vmatprep.subr.bf16.mxu0 0
        %4954 = vmatpush1.bf16.msra.mxu0 0
        %4955 = vmatprep.subr.bf16.mxu0 0
        %4956 = vmatpush1.bf16.msra.mxu0 0
        %4957 = vmatprep.subr.bf16.mxu0 0
        %4958 = vmatpush1.bf16.msra.mxu0 0
        %4959 = vmatprep.subr.bf16.mxu0 0
        %4960 = vmatpush1.bf16.msra.mxu0 0
        %4961 = vmatprep.subr.bf16.mxu0 0
        %4962 = vmatpush1.bf16.msra.mxu0 0
        %4963 = vmatprep.subr.bf16.mxu0 0
        %4964 = vmatpush1.bf16.msra.mxu0 0
        %4965 = vmatprep.subr.bf16.mxu0 0
        %4966 = vmatpush1.bf16.msra.mxu0 0
        %4967 = vmatprep.subr.bf16.mxu0 0
        %4968 = vmatpush1.bf16.msra.mxu0 0
        %4969 = vmatprep.subr.bf16.mxu0 0
        %4970 = vmatpush1.bf16.msra.mxu0 0
        %4971 = vmatprep.subr.bf16.mxu0 0
        %4972 = vmatpush1.bf16.msra.mxu0 0
        %4973 = vmatprep.subr.bf16.mxu0 0
        %4974 = vmatpush1.bf16.msra.mxu0 0
        %4975 = vmatprep.subr.bf16.mxu0 0
        %4976 = vmatpush1.bf16.msra.mxu0 0
        %4977 = vmatprep.subr.bf16.mxu0 0
        %4978 = vmatpush1.bf16.msra.mxu0 0
        %4979 = vmatprep.mubr.bf16.mxu0 0
        %4980 = vmatmul.mubr.bf16.gmra.mrb[0].mxu0 %v4945
        %v4981 = vpop.f32.mrb[0].mxu0
        %v4982 = vadd.f32 0.0, %v4981
        %v4983 = vpop.f32.mrb[0].mxu0
        %v4984 = vpop.f32.mrb[0].mxu0
        %v4985 = vadd.f32 0.0, %v4984
        %v4986 = vpop.f32.mrb[0].mxu0
        %4987 = vdwg.mxu0
        %v4988 = vadd.f32 %v4925, %v4982
        %v4989 = vadd.f32 %v4926, %v4985
        %s4990 = scalar_lea.vmem %s5, 144
        %v4991 = vld [vmem:[%s4990] sm:$0xf]
        %v4992 = vld [vmem:[%s4990 + $0x4] sm:$0xf]
        %v4993 = vld [vmem:[%s4990 + $0x8] sm:$0xf]
        %v4994 = vld [vmem:[%s4990 + $0xc] sm:$0xf]
        %v4999 = vunpack.c.l.b16 %v4991
        %v5000 = vunpack.c.l.b16 %v4992
        %v5001 = vunpack.c.l.b16 %v4993
        %v5002 = vunpack.c.l.b16 %v4994
        %v5003 = vpack.c.b16 %v5000, %v4999
        %v5004 = vpack.c.b16 %v5002, %v5001
        %v5008 = vsel %vm2486, %v4421, 0
        %5010 = vmatprep.subr.bf16.mxu0 0
        %5011 = vmatpush1.bf16.msra.mxu0 %v5003
        %5012 = vmatprep.subr.bf16.mxu0 0
        %5013 = vmatpush1.bf16.msra.mxu0 %v5004
        %5014 = vmatprep.subr.bf16.mxu0 0
        %5015 = vmatpush1.bf16.msra.mxu0 0
        %5016 = vmatprep.subr.bf16.mxu0 0
        %5017 = vmatpush1.bf16.msra.mxu0 0
        %5018 = vmatprep.subr.bf16.mxu0 0
        %5019 = vmatpush1.bf16.msra.mxu0 0
        %5020 = vmatprep.subr.bf16.mxu0 0
        %5021 = vmatpush1.bf16.msra.mxu0 0
        %5022 = vmatprep.subr.bf16.mxu0 0
        %5023 = vmatpush1.bf16.msra.mxu0 0
        %5024 = vmatprep.subr.bf16.mxu0 0
        %5025 = vmatpush1.bf16.msra.mxu0 0
        %5026 = vmatprep.subr.bf16.mxu0 0
        %5027 = vmatpush1.bf16.msra.mxu0 0
        %5028 = vmatprep.subr.bf16.mxu0 0
        %5029 = vmatpush1.bf16.msra.mxu0 0
        %5030 = vmatprep.subr.bf16.mxu0 0
        %5031 = vmatpush1.bf16.msra.mxu0 0
        %5032 = vmatprep.subr.bf16.mxu0 0
        %5033 = vmatpush1.bf16.msra.mxu0 0
        %5034 = vmatprep.subr.bf16.mxu0 0
        %5035 = vmatpush1.bf16.msra.mxu0 0
        %5036 = vmatprep.subr.bf16.mxu0 0
        %5037 = vmatpush1.bf16.msra.mxu0 0
        %5038 = vmatprep.subr.bf16.mxu0 0
        %5039 = vmatpush1.bf16.msra.mxu0 0
        %5040 = vmatprep.subr.bf16.mxu0 0
        %5041 = vmatpush1.bf16.msra.mxu0 0
        %5042 = vmatprep.mubr.bf16.mxu0 0
        %5043 = vmatmul.mubr.bf16.gmra.mrb[0].mxu0 %v5008
        %v5044 = vpop.f32.mrb[0].mxu0
        %v5045 = vadd.f32 0.0, %v5044
        %v5046 = vpop.f32.mrb[0].mxu0
        %v5047 = vpop.f32.mrb[0].mxu0
        %v5048 = vadd.f32 0.0, %v5047
        %v5049 = vpop.f32.mrb[0].mxu0
        %5050 = vdwg.mxu0
        %v5051 = vadd.f32 %v4988, %v5045
        %v5052 = vadd.f32 %v4989, %v5048
        %s5053 = scalar_lea.vmem %s5, 160
        %v5054 = vld [vmem:[%s5053] sm:$0xf]
        %v5055 = vld [vmem:[%s5053 + $0x4] sm:$0xf]
        %v5056 = vld [vmem:[%s5053 + $0x8] sm:$0xf]
        %v5057 = vld [vmem:[%s5053 + $0xc] sm:$0xf]
        %v5062 = vunpack.c.l.b16 %v5054
        %v5063 = vunpack.c.l.b16 %v5055
        %v5064 = vunpack.c.l.b16 %v5056
        %v5065 = vunpack.c.l.b16 %v5057
        %v5066 = vpack.c.b16 %v5063, %v5062
        %v5067 = vpack.c.b16 %v5065, %v5064
        %v5071 = vsel %vm2486, %v4422, 0
        %5073 = vmatprep.subr.bf16.mxu0 0
        %5074 = vmatpush1.bf16.msra.mxu0 %v5066
        %5075 = vmatprep.subr.bf16.mxu0 0
        %5076 = vmatpush1.bf16.msra.mxu0 %v5067
        %5077 = vmatprep.subr.bf16.mxu0 0
        %5078 = vmatpush1.bf16.msra.mxu0 0
        %5079 = vmatprep.subr.bf16.mxu0 0
        %5080 = vmatpush1.bf16.msra.mxu0 0
        %5081 = vmatprep.subr.bf16.mxu0 0
        %5082 = vmatpush1.bf16.msra.mxu0 0
        %5083 = vmatprep.subr.bf16.mxu0 0
        %5084 = vmatpush1.bf16.msra.mxu0 0
        %5085 = vmatprep.subr.bf16.mxu0 0
        %5086 = vmatpush1.bf16.msra.mxu0 0
        %5087 = vmatprep.subr.bf16.mxu0 0
        %5088 = vmatpush1.bf16.msra.mxu0 0
        %5089 = vmatprep.subr.bf16.mxu0 0
        %5090 = vmatpush1.bf16.msra.mxu0 0
        %5091 = vmatprep.subr.bf16.mxu0 0
        %5092 = vmatpush1.bf16.msra.mxu0 0
        %5093 = vmatprep.subr.bf16.mxu0 0
        %5094 = vmatpush1.bf16.msra.mxu0 0
        %5095 = vmatprep.subr.bf16.mxu0 0
        %5096 = vmatpush1.bf16.msra.mxu0 0
        %5097 = vmatprep.subr.bf16.mxu0 0
        %5098 = vmatpush1.bf16.msra.mxu0 0
        %5099 = vmatprep.subr.bf16.mxu0 0
        %5100 = vmatpush1.bf16.msra.mxu0 0
        %5101 = vmatprep.subr.bf16.mxu0 0
        %5102 = vmatpush1.bf16.msra.mxu0 0
        %5103 = vmatprep.subr.bf16.mxu0 0
        %5104 = vmatpush1.bf16.msra.mxu0 0
        %5105 = vmatprep.mubr.bf16.mxu0 0
        %5106 = vmatmul.mubr.bf16.gmra.mrb[0].mxu0 %v5071
        %v5107 = vpop.f32.mrb[0].mxu0
        %v5108 = vadd.f32 0.0, %v5107
        %v5109 = vpop.f32.mrb[0].mxu0
        %v5110 = vpop.f32.mrb[0].mxu0
        %v5111 = vadd.f32 0.0, %v5110
        %v5112 = vpop.f32.mrb[0].mxu0
        %5113 = vdwg.mxu0
        %v5114 = vadd.f32 %v5051, %v5108
        %v5115 = vadd.f32 %v5052, %v5111
        %s5116 = scalar_lea.vmem %s5, 176
        %v5117 = vld [vmem:[%s5116] sm:$0xf]
        %v5118 = vld [vmem:[%s5116 + $0x4] sm:$0xf]
        %v5119 = vld [vmem:[%s5116 + $0x8] sm:$0xf]
        %v5120 = vld [vmem:[%s5116 + $0xc] sm:$0xf]
        %v5125 = vunpack.c.l.b16 %v5117
        %v5126 = vunpack.c.l.b16 %v5118
        %v5127 = vunpack.c.l.b16 %v5119
        %v5128 = vunpack.c.l.b16 %v5120
        %v5129 = vpack.c.b16 %v5126, %v5125
        %v5130 = vpack.c.b16 %v5128, %v5127
        %v5134 = vsel %vm2486, %v4423, 0
        %5136 = vmatprep.subr.bf16.mxu0 0
        %5137 = vmatpush1.bf16.msra.mxu0 %v5129
        %5138 = vmatprep.subr.bf16.mxu0 0
        %5139 = vmatpush1.bf16.msra.mxu0 %v5130
        %5140 = vmatprep.subr.bf16.mxu0 0
        %5141 = vmatpush1.bf16.msra.mxu0 0
        %5142 = vmatprep.subr.bf16.mxu0 0
        %5143 = vmatpush1.bf16.msra.mxu0 0
        %5144 = vmatprep.subr.bf16.mxu0 0
        %5145 = vmatpush1.bf16.msra.mxu0 0
        %5146 = vmatprep.subr.bf16.mxu0 0
        %5147 = vmatpush1.bf16.msra.mxu0 0
        %5148 = vmatprep.subr.bf16.mxu0 0
        %5149 = vmatpush1.bf16.msra.mxu0 0
        %5150 = vmatprep.subr.bf16.mxu0 0
        %5151 = vmatpush1.bf16.msra.mxu0 0
        %5152 = vmatprep.subr.bf16.mxu0 0
        %5153 = vmatpush1.bf16.msra.mxu0 0
        %5154 = vmatprep.subr.bf16.mxu0 0
        %5155 = vmatpush1.bf16.msra.mxu0 0
        %5156 = vmatprep.subr.bf16.mxu0 0
        %5157 = vmatpush1.bf16.msra.mxu0 0
        %5158 = vmatprep.subr.bf16.mxu0 0
        %5159 = vmatpush1.bf16.msra.mxu0 0
        %5160 = vmatprep.subr.bf16.mxu0 0
        %5161 = vmatpush1.bf16.msra.mxu0 0
        %5162 = vmatprep.subr.bf16.mxu0 0
        %5163 = vmatpush1.bf16.msra.mxu0 0
        %5164 = vmatprep.subr.bf16.mxu0 0
        %5165 = vmatpush1.bf16.msra.mxu0 0
        %5166 = vmatprep.subr.bf16.mxu0 0
        %5167 = vmatpush1.bf16.msra.mxu0 0
        %5168 = vmatprep.mubr.bf16.mxu0 0
        %5169 = vmatmul.mubr.bf16.gmra.mrb[0].mxu0 %v5134
        %v5170 = vpop.f32.mrb[0].mxu0
        %v5171 = vadd.f32 0.0, %v5170
        %v5172 = vpop.f32.mrb[0].mxu0
        %v5173 = vpop.f32.mrb[0].mxu0
        %v5174 = vadd.f32 0.0, %v5173
        %v5175 = vpop.f32.mrb[0].mxu0
        %5176 = vdwg.mxu0
        %v5177 = vadd.f32 %v5114, %v5171
        %v5178 = vadd.f32 %v5115, %v5174
        %s5179 = scalar_lea.vmem %s5, 192
        %v5180 = vld [vmem:[%s5179] sm:$0xf]
        %v5181 = vld [vmem:[%s5179 + $0x4] sm:$0xf]
        %v5182 = vld [vmem:[%s5179 + $0x8] sm:$0xf]
        %v5183 = vld [vmem:[%s5179 + $0xc] sm:$0xf]
        %v5188 = vunpack.c.l.b16 %v5180
        %v5189 = vunpack.c.l.b16 %v5181
        %v5190 = vunpack.c.l.b16 %v5182
        %v5191 = vunpack.c.l.b16 %v5183
        %v5192 = vpack.c.b16 %v5189, %v5188
        %v5193 = vpack.c.b16 %v5191, %v5190
        %v5197 = vsel %vm2486, %v4424, 0
        %5199 = vmatprep.subr.bf16.mxu0 0
        %5200 = vmatpush1.bf16.msra.mxu0 %v5192
        %5201 = vmatprep.subr.bf16.mxu0 0
        %5202 = vmatpush1.bf16.msra.mxu0 %v5193
        %5203 = vmatprep.subr.bf16.mxu0 0
        %5204 = vmatpush1.bf16.msra.mxu0 0
        %5205 = vmatprep.subr.bf16.mxu0 0
        %5206 = vmatpush1.bf16.msra.mxu0 0
        %5207 = vmatprep.subr.bf16.mxu0 0
        %5208 = vmatpush1.bf16.msra.mxu0 0
        %5209 = vmatprep.subr.bf16.mxu0 0
        %5210 = vmatpush1.bf16.msra.mxu0 0
        %5211 = vmatprep.subr.bf16.mxu0 0
        %5212 = vmatpush1.bf16.msra.mxu0 0
        %5213 = vmatprep.subr.bf16.mxu0 0
        %5214 = vmatpush1.bf16.msra.mxu0 0
        %5215 = vmatprep.subr.bf16.mxu0 0
        %5216 = vmatpush1.bf16.msra.mxu0 0
        %5217 = vmatprep.subr.bf16.mxu0 0
        %5218 = vmatpush1.bf16.msra.mxu0 0
        %5219 = vmatprep.subr.bf16.mxu0 0
        %5220 = vmatpush1.bf16.msra.mxu0 0
        %5221 = vmatprep.subr.bf16.mxu0 0
        %5222 = vmatpush1.bf16.msra.mxu0 0
        %5223 = vmatprep.subr.bf16.mxu0 0
        %5224 = vmatpush1.bf16.msra.mxu0 0
        %5225 = vmatprep.subr.bf16.mxu0 0
        %5226 = vmatpush1.bf16.msra.mxu0 0
        %5227 = vmatprep.subr.bf16.mxu0 0
        %5228 = vmatpush1.bf16.msra.mxu0 0
        %5229 = vmatprep.subr.bf16.mxu0 0
        %5230 = vmatpush1.bf16.msra.mxu0 0
        %5231 = vmatprep.mubr.bf16.mxu0 0
        %5232 = vmatmul.mubr.bf16.gmra.mrb[0].mxu0 %v5197
        %v5233 = vpop.f32.mrb[0].mxu0
        %v5234 = vadd.f32 0.0, %v5233
        %v5235 = vpop.f32.mrb[0].mxu0
        %v5236 = vpop.f32.mrb[0].mxu0
        %v5237 = vadd.f32 0.0, %v5236
        %v5238 = vpop.f32.mrb[0].mxu0
        %5239 = vdwg.mxu0
        %v5240 = vadd.f32 %v5177, %v5234
        %v5241 = vadd.f32 %v5178, %v5237
        %s5242 = scalar_lea.vmem %s5, 208
        %v5243 = vld [vmem:[%s5242] sm:$0xf]
        %v5244 = vld [vmem:[%s5242 + $0x4] sm:$0xf]
        %v5245 = vld [vmem:[%s5242 + $0x8] sm:$0xf]
        %v5246 = vld [vmem:[%s5242 + $0xc] sm:$0xf]
        %v5251 = vunpack.c.l.b16 %v5243
        %v5252 = vunpack.c.l.b16 %v5244
        %v5253 = vunpack.c.l.b16 %v5245
        %v5254 = vunpack.c.l.b16 %v5246
        %v5255 = vpack.c.b16 %v5252, %v5251
        %v5256 = vpack.c.b16 %v5254, %v5253
        %v5260 = vsel %vm2486, %v4425, 0
        %5262 = vmatprep.subr.bf16.mxu0 0
        %5263 = vmatpush1.bf16.msra.mxu0 %v5255
        %5264 = vmatprep.subr.bf16.mxu0 0
        %5265 = vmatpush1.bf16.msra.mxu0 %v5256
        %5266 = vmatprep.subr.bf16.mxu0 0
        %5267 = vmatpush1.bf16.msra.mxu0 0
        %5268 = vmatprep.subr.bf16.mxu0 0
        %5269 = vmatpush1.bf16.msra.mxu0 0
        %5270 = vmatprep.subr.bf16.mxu0 0
        %5271 = vmatpush1.bf16.msra.mxu0 0
        %5272 = vmatprep.subr.bf16.mxu0 0
        %5273 = vmatpush1.bf16.msra.mxu0 0
        %5274 = vmatprep.subr.bf16.mxu0 0
        %5275 = vmatpush1.bf16.msra.mxu0 0
        %5276 = vmatprep.subr.bf16.mxu0 0
        %5277 = vmatpush1.bf16.msra.mxu0 0
        %5278 = vmatprep.subr.bf16.mxu0 0
        %5279 = vmatpush1.bf16.msra.mxu0 0
        %5280 = vmatprep.subr.bf16.mxu0 0
        %5281 = vmatpush1.bf16.msra.mxu0 0
        %5282 = vmatprep.subr.bf16.mxu0 0
        %5283 = vmatpush1.bf16.msra.mxu0 0
        %5284 = vmatprep.subr.bf16.mxu0 0
        %5285 = vmatpush1.bf16.msra.mxu0 0
        %5286 = vmatprep.subr.bf16.mxu0 0
        %5287 = vmatpush1.bf16.msra.mxu0 0
        %5288 = vmatprep.subr.bf16.mxu0 0
        %5289 = vmatpush1.bf16.msra.mxu0 0
        %5290 = vmatprep.subr.bf16.mxu0 0
        %5291 = vmatpush1.bf16.msra.mxu0 0
        %5292 = vmatprep.subr.bf16.mxu0 0
        %5293 = vmatpush1.bf16.msra.mxu0 0
        %5294 = vmatprep.mubr.bf16.mxu0 0
        %5295 = vmatmul.mubr.bf16.gmra.mrb[0].mxu0 %v5260
        %v5296 = vpop.f32.mrb[0].mxu0
        %v5297 = vadd.f32 0.0, %v5296
        %v5298 = vpop.f32.mrb[0].mxu0
        %v5299 = vpop.f32.mrb[0].mxu0
        %v5300 = vadd.f32 0.0, %v5299
        %v5301 = vpop.f32.mrb[0].mxu0
        %5302 = vdwg.mxu0
        %v5303 = vadd.f32 %v5240, %v5297
        %v5304 = vadd.f32 %v5241, %v5300
        %s5305 = scalar_lea.vmem %s5, 224
        %v5306 = vld [vmem:[%s5305] sm:$0xf]
        %v5307 = vld [vmem:[%s5305 + $0x4] sm:$0xf]
        %v5308 = vld [vmem:[%s5305 + $0x8] sm:$0xf]
        %v5309 = vld [vmem:[%s5305 + $0xc] sm:$0xf]
        %v5314 = vunpack.c.l.b16 %v5306
        %v5315 = vunpack.c.l.b16 %v5307
        %v5316 = vunpack.c.l.b16 %v5308
        %v5317 = vunpack.c.l.b16 %v5309
        %v5318 = vpack.c.b16 %v5315, %v5314
        %v5319 = vpack.c.b16 %v5317, %v5316
        %v5323 = vsel %vm2486, %v4426, 0
        %5325 = vmatprep.subr.bf16.mxu0 0
        %5326 = vmatpush1.bf16.msra.mxu0 %v5318
        %5327 = vmatprep.subr.bf16.mxu0 0
        %5328 = vmatpush1.bf16.msra.mxu0 %v5319
        %5329 = vmatprep.subr.bf16.mxu0 0
        %5330 = vmatpush1.bf16.msra.mxu0 0
        %5331 = vmatprep.subr.bf16.mxu0 0
        %5332 = vmatpush1.bf16.msra.mxu0 0
        %5333 = vmatprep.subr.bf16.mxu0 0
        %5334 = vmatpush1.bf16.msra.mxu0 0
        %5335 = vmatprep.subr.bf16.mxu0 0
        %5336 = vmatpush1.bf16.msra.mxu0 0
        %5337 = vmatprep.subr.bf16.mxu0 0
        %5338 = vmatpush1.bf16.msra.mxu0 0
        %5339 = vmatprep.subr.bf16.mxu0 0
        %5340 = vmatpush1.bf16.msra.mxu0 0
        %5341 = vmatprep.subr.bf16.mxu0 0
        %5342 = vmatpush1.bf16.msra.mxu0 0
        %5343 = vmatprep.subr.bf16.mxu0 0
        %5344 = vmatpush1.bf16.msra.mxu0 0
        %5345 = vmatprep.subr.bf16.mxu0 0
        %5346 = vmatpush1.bf16.msra.mxu0 0
        %5347 = vmatprep.subr.bf16.mxu0 0
        %5348 = vmatpush1.bf16.msra.mxu0 0
        %5349 = vmatprep.subr.bf16.mxu0 0
        %5350 = vmatpush1.bf16.msra.mxu0 0
        %5351 = vmatprep.subr.bf16.mxu0 0
        %5352 = vmatpush1.bf16.msra.mxu0 0
        %5353 = vmatprep.subr.bf16.mxu0 0
        %5354 = vmatpush1.bf16.msra.mxu0 0
        %5355 = vmatprep.subr.bf16.mxu0 0
        %5356 = vmatpush1.bf16.msra.mxu0 0
        %5357 = vmatprep.mubr.bf16.mxu0 0
        %5358 = vmatmul.mubr.bf16.gmra.mrb[0].mxu0 %v5323
        %v5359 = vpop.f32.mrb[0].mxu0
        %v5360 = vadd.f32 0.0, %v5359
        %v5361 = vpop.f32.mrb[0].mxu0
        %v5362 = vpop.f32.mrb[0].mxu0
        %v5363 = vadd.f32 0.0, %v5362
        %v5364 = vpop.f32.mrb[0].mxu0
        %5365 = vdwg.mxu0
        %v5366 = vadd.f32 %v5303, %v5360
        %v5367 = vadd.f32 %v5304, %v5363
        %s5368 = scalar_lea.vmem %s5, 240
        %v5369 = vld [vmem:[%s5368] sm:$0xf]
        %v5370 = vld [vmem:[%s5368 + $0x4] sm:$0xf]
        %v5371 = vld [vmem:[%s5368 + $0x8] sm:$0xf]
        %v5372 = vld [vmem:[%s5368 + $0xc] sm:$0xf]
        %v5377 = vunpack.c.l.b16 %v5369
        %v5378 = vunpack.c.l.b16 %v5370
        %v5379 = vunpack.c.l.b16 %v5371
        %v5380 = vunpack.c.l.b16 %v5372
        %v5381 = vpack.c.b16 %v5378, %v5377
        %v5382 = vpack.c.b16 %v5380, %v5379
        %v5386 = vsel %vm2486, %v4427, 0
        %5388 = vmatprep.subr.bf16.mxu0 0
        %5389 = vmatpush1.bf16.msra.mxu0 %v5381
        %5390 = vmatprep.subr.bf16.mxu0 0
        %5391 = vmatpush1.bf16.msra.mxu0 %v5382
        %5392 = vmatprep.subr.bf16.mxu0 0
        %5393 = vmatpush1.bf16.msra.mxu0 0
        %5394 = vmatprep.subr.bf16.mxu0 0
        %5395 = vmatpush1.bf16.msra.mxu0 0
        %5396 = vmatprep.subr.bf16.mxu0 0
        %5397 = vmatpush1.bf16.msra.mxu0 0
        %5398 = vmatprep.subr.bf16.mxu0 0
        %5399 = vmatpush1.bf16.msra.mxu0 0
        %5400 = vmatprep.subr.bf16.mxu0 0
        %5401 = vmatpush1.bf16.msra.mxu0 0
        %5402 = vmatprep.subr.bf16.mxu0 0
        %5403 = vmatpush1.bf16.msra.mxu0 0
        %5404 = vmatprep.subr.bf16.mxu0 0
        %5405 = vmatpush1.bf16.msra.mxu0 0
        %5406 = vmatprep.subr.bf16.mxu0 0
        %5407 = vmatpush1.bf16.msra.mxu0 0
        %5408 = vmatprep.subr.bf16.mxu0 0
        %5409 = vmatpush1.bf16.msra.mxu0 0
        %5410 = vmatprep.subr.bf16.mxu0 0
        %5411 = vmatpush1.bf16.msra.mxu0 0
        %5412 = vmatprep.subr.bf16.mxu0 0
        %5413 = vmatpush1.bf16.msra.mxu0 0
        %5414 = vmatprep.subr.bf16.mxu0 0
        %5415 = vmatpush1.bf16.msra.mxu0 0
        %5416 = vmatprep.subr.bf16.mxu0 0
        %5417 = vmatpush1.bf16.msra.mxu0 0
        %5418 = vmatprep.subr.bf16.mxu0 0
        %5419 = vmatpush1.bf16.msra.mxu0 0
        %5420 = vmatprep.mubr.bf16.mxu0 0
        %5421 = vmatmul.mubr.bf16.gmra.mrb[0].mxu0 %v5386
        %v5422 = vpop.f32.mrb[0].mxu0
        %v5423 = vadd.f32 0.0, %v5422
        %v5424 = vpop.f32.mrb[0].mxu0
        %v5425 = vpop.f32.mrb[0].mxu0
        %v5426 = vadd.f32 0.0, %v5425
        %v5427 = vpop.f32.mrb[0].mxu0
        %5428 = vdwg.mxu0
        %v5429 = vadd.f32 %v5366, %v5423
        %v5430 = vadd.f32 %v5367, %v5426
        %v5431 = vld [vmem:[%s6] sm:$0x1]
        %v5433 = vlaneseq
        %v5434 = vshrl.u32 %v5433, 7
        %v5435 = vsub.s32 0, %v5434
        %v5436 = vrot.slane %v5431, %v5435
        %v5438 = vadd.f32 %v5429, %v5436
        %v5439 = vadd.f32 %v5430, %v5436
        %v5440 = vmax.f32 %v5438, 0.0
        %v5441 = vmax.f32 %v5439, 0.0
        %5442 = vst [vmem:[%s457] sm:$0xff] %v5440
        %5443 = vst [vmem:[%s457 + $0x8] sm:$0xff] %v5441
        %s5444 = sand.u32 %s182, 1
        %s5445 = scalar_lea.sflag [#allocation5], %s5444
        %s5446 = sand.u32 %s182, 1
        %s5447 = smul.addr %s5446, 16
        %s5448 = scalar_lea.vmem [#allocation6], %s5447
        // Predicated region
        $region94: #{tpu_custom_call.1} parent=84 // pred_check
          %p5449 = pneg %p192
        $region95: #{tpu_custom_call.1} parent=84 // pred_check_branch
          %5451 = sbr.rel (%p5449) target = $region97
        $region96: #{tpu_custom_call.1} parent=84 // pred_region
          %s5452 = smul.u32 2, %s22
          %s5454 = ssub.s32 256, 256
          %5455 = vsyncadd %s5445, %s5454
          %s5456 = smul.addr %s5452, 128
          %s5457 = scalar_lea.hbm %s7, %s5456
          %s5458 = sshll.u32 %s5448, 4
          %s5459 = int_to_ptr.vmem [resolvable:$true] %s5458
          %5464 = dma.vmem_to_hbm [thread:$0]  %s5459, 256, %s5457, %s5445, 128, 128, 8
        $region97: #{tpu_custom_call.1} parent=84 // pred_fallthru
          _
      $region85: #{tpu_custom_call.1} parent=5 // pred_fallthru
        _
      %p5465 = scmp.le.s32.totalorder 2, %s17
      // Predicated region
      $region98: #{tpu_custom_call.1} parent=5 // pred_check
        %p5466 = pneg %p5465
      $region99: #{tpu_custom_call.1} parent=5 // pred_check_branch
        %5468 = sbr.rel (%p5466) target = $region101
      $region100: #{tpu_custom_call.1} parent=5 // pred_region
        %s5469 = ssub.s32 %s17, 2
        // Predicated region
        $region102: #{tpu_custom_call.1} parent=100 // pred_check
          %p5470 = pneg %p198
        $region103: #{tpu_custom_call.1} parent=100 // pred_check_branch
          %5472 = sbr.rel (%p5470) target = $region105
        $region104: #{tpu_custom_call.1} parent=100 // pred_region
          %s5473 = sand.u32 %s183, 1
          %s5474 = scalar_lea.sflag [#allocation5], %s5473
          %s5475 = sand.u32 %s183, 1
          %s5476 = smul.addr %s5475, 16
          %s5477 = scalar_lea.vmem [#allocation6], %s5476
          %5478 = dma.done %s5474, 256
        $region105: #{tpu_custom_call.1} parent=100 // pred_fallthru
          _
      $region101: #{tpu_custom_call.1} parent=5 // pred_fallthru
        _
    $region6: #{tpu_custom_call.1} parent=1 // loop_footer
      %s21 = sadd.s32 1, %s17
    $region7: #{tpu_custom_call.1} parent=1 // loop_footer_branch
      %16 = sbr.rel target = $region3
    $region8: #{tpu_custom_call.1} parent=1 // loop_exit
      _
    %5479 = vsyncpa [#allocation4], 1
    %s5480 = scalar_lea.sflag [#allocation4], 1
    %5481 = vsyncpa %s5480, 1
    %5482 = vsyncpa [#allocation5], 1
    %s5483 = scalar_lea.sflag [#allocation5], 1
    %5484 = vsyncpa %s5483, 1

</llo_original>
